<compile_context>
chip_gen: v7x
topology: tpu7x:2x2x1
jax: 0.10.0
libtpu: 0.0.40
codegen_flags: <defaults>
</compile_context>

<pallas_src>
import math

import jax
import jax.numpy as jnp
from jax import lax
from jax.experimental import pallas as pl
from jax.experimental.pallas import tpu as pltpu

# ----------------------------- model config ---------------------------------
D_MODEL = 32
NHEAD = 4
NUM_LAYERS = 2
DIM_FF = 64
HEAD_DIM = D_MODEL // NHEAD
LN_EPS = 1e-5
NEG_INF = -1e30
# TODO(synk): dropout is a no-op (eval semantics); src_mask /
#             src_key_padding_mask are not implemented (forward passes None).


# ----------------------------- kernel helpers --------------------------------
def _layer_norm(h, gamma, beta):
    mu = jnp.mean(h, axis=-1, keepdims=True)
    var = jnp.mean(jnp.square(h - mu), axis=-1, keepdims=True)
    return (h - mu) * lax.rsqrt(var + LN_EPS) * gamma + beta


def _make_encoder_kernel(seq_len, b_tile, compute_dtype):
    """Kernel for one (seq_len, b_tile, E) activation block."""
    E, F, HD, H = D_MODEL, DIM_FF, HEAD_DIM, NHEAD
    R = seq_len * b_tile  # flattened token rows per grid step (t-major)

    def kernel(src_ref,
               wqkv_t_ref, bqkv_ref, wo_t_ref, bo_ref,
               w1_t_ref, b1_ref, w2_t_ref, b2_ref,
               gamma_ref, beta_ref,
               out_ref):
        # ---- load & flatten (T, B, E) -> (R, E), rows ordered t-major -------
        x3 = src_ref[...].astype(jnp.float32)                         # (T,B,E)
        x = jnp.concatenate([x3[i] for i in range(seq_len)], axis=0)  # (R, E)

        # ---- block-diagonal additive bias: row r belongs to batch r % B -----
        # (b_tile is a power of two; computed once, reused by all layers/heads)
        rb = lax.broadcasted_iota(jnp.int32, (R, R), 0) & (b_tile - 1)
        cb = lax.broadcasted_iota(jnp.int32, (R, R), 1) & (b_tile - 1)
        attn_bias = jnp.where(rb == cb, 0.0, NEG_INF).astype(jnp.float32)

        for l in range(NUM_LAYERS):
            # ---------------- self attention ---------------------------------
            # fused QKV projection: (R, E) @ (E, 3E); scale folded into Wq/bq.
            qkv = jnp.dot(x.astype(compute_dtype), wqkv_t_ref[l],
                          preferred_element_type=jnp.float32) + bqkv_ref[l]
            # head-batched q/k/v: (H, R, HD)
            qh = jnp.stack(
                [qkv[:, h * HD:(h + 1) * HD] for h in range(H)], axis=0)
            kh = jnp.stack(
                [qkv[:, E + h * HD:E + (h + 1) * HD] for h in range(H)], axis=0)
            vh = jnp.stack(
                [qkv[:, 2 * E + h * HD:2 * E + (h + 1) * HD]
                 for h in range(H)], axis=0)

            s = jnp.einsum('hqd,hkd->hqk',
                           qh.astype(compute_dtype), kh.astype(compute_dtype),
                           preferred_element_type=jnp.float32)        # (H,R,R)
            s = s + attn_bias                        # mask cross-batch scores
            m = jnp.max(s, axis=-1, keepdims=True)
            p = jnp.exp(s - m)
            p = p * pl.reciprocal(jnp.sum(p, axis=-1, keepdims=True),
                                  approx=True)
            ctx = jnp.einsum('hqk,hkd->hqd',
                             p.astype(compute_dtype), vh.astype(compute_dtype),
                             preferred_element_type=jnp.float32)      # (H,R,HD)
            attn = jnp.concatenate([ctx[h] for h in range(H)], axis=-1)
            attn = jnp.dot(attn.astype(compute_dtype), wo_t_ref[l],
                           preferred_element_type=jnp.float32) + bo_ref[l]
            x = _layer_norm(x + attn, gamma_ref[2 * l], beta_ref[2 * l])

            # ---------------- feed forward ------------------------------------
            h1 = jnp.maximum(
                jnp.dot(x.astype(compute_dtype), w1_t_ref[l],
                        preferred_element_type=jnp.float32) + b1_ref[l], 0.0)
            ff = jnp.dot(h1.astype(compute_dtype), w2_t_ref[l],
                         preferred_element_type=jnp.float32) + b2_ref[l]
            x = _layer_norm(x + ff, gamma_ref[2 * l + 1], beta_ref[2 * l + 1])

        # ---- unflatten (R, E) -> (T, B, E) and store -------------------------
        y3 = jnp.stack([x[i * b_tile:(i + 1) * b_tile, :]
                        for i in range(seq_len)], axis=0)
        out_ref[...] = y3.astype(out_ref.dtype)

    return kernel


# ------------------------------- wrapper --------------------------------------
_PARAM_ORDER = ("wqkv_t", "bqkv", "wo_t", "bo",
                "w1_t", "b1", "w2_t", "b2", "gamma", "beta")


def _rep_spec(shape):
    zeros = (0,) * len(shape)
    return pl.BlockSpec(shape, lambda b, _z=zeros: _z)


def _prepare_params(params, compute_dtype):
    """Host-side pre-transpose + scale folding + optional bf16 cast."""
    E = D_MODEL
    scale = 1.0 / math.sqrt(HEAD_DIM)
    col = jnp.concatenate([jnp.full((E,), scale, jnp.float32),
                           jnp.ones((2 * E,), jnp.float32)])
    wqkv = params["wqkv"] * col[None, :, None]          # fold scale into Wq
    bqkv = params["bqkv"] * col[None, :]                # ... and into bq
    prepped = dict(
        wqkv_t=jnp.swapaxes(wqkv, 1, 2).astype(compute_dtype),        # (L,E,3E)
        bqkv=bqkv.astype(jnp.float32),
        wo_t=jnp.swapaxes(params["wo"], 1, 2).astype(compute_dtype),  # (L,E,E)
        bo=params["bo"].astype(jnp.float32),
        w1_t=jnp.swapaxes(params["w1"], 1, 2).astype(compute_dtype),  # (L,E,F)
        b1=params["b1"].astype(jnp.float32),
        w2_t=jnp.swapaxes(params["w2"], 1, 2).astype(compute_dtype),  # (L,F,E)
        b2=params["b2"].astype(jnp.float32),
        gamma=params["gamma"].astype(jnp.float32),
        beta=params["beta"].astype(jnp.float32),
    )
    return [prepped[k] for k in _PARAM_ORDER]


def transformer_encoder(src, params, src_mask=None, src_key_padding_mask=None,
                        *, compute_dtype=jnp.float32, b_tile=8):
    """src: (T, N, E) -> (T, N, E)   (batch_first=False, post-norm, relu)."""
    assert src_mask is None and src_key_padding_mask is None
    T, N, E = src.shape
    assert E == D_MODEL
    if N < b_tile:
        b_tile = N
    assert N % b_tile == 0, "batch must be divisible by b_tile"
    assert b_tile & (b_tile - 1) == 0, "b_tile must be a power of two"
    assert b_tile == N or b_tile % 8 == 0, "keep batch block sublane-aligned"

    flat = _prepare_params(params, compute_dtype)
    kernel = _make_encoder_kernel(T, b_tile, compute_dtype)

    return pl.pallas_call(
        kernel,
        out_shape=jax.ShapeDtypeStruct((T, N, E), jnp.float32),
        grid=(N // b_tile,),
        in_specs=[pl.BlockSpec((T, b_tile, E), lambda b: (0, b, 0))]
                 + [_rep_spec(p.shape) for p in flat],
        out_specs=pl.BlockSpec((T, b_tile, E), lambda b: (0, b, 0)),
        compiler_params=pltpu.CompilerParams(
            dimension_semantics=("parallel",)),
    )(src, *flat)


# --------------------------- parameter init -----------------------------------
def init_params(key):
    """PyTorch-layout parameters for L post-norm encoder layers."""
    L, E, F = NUM_LAYERS, D_MODEL, DIM_FF
    ks = jax.random.split(key, 8)

    def u(k, shape, scale=0.1):
        return jax.random.uniform(k, shape, jnp.float32, -scale, scale)

    return dict(
        wqkv=u(ks[0], (L, 3 * E, E)), bqkv=u(ks[1], (L, 3 * E)),
        wo=u(ks[2], (L, E, E)),       bo=u(ks[3], (L, E)),
        w1=u(ks[4], (L, F, E)),       b1=u(ks[5], (L, F)),
        w2=u(ks[6], (L, E, F)),       b2=u(ks[7], (L, E)),
        gamma=jnp.ones((2 * L, E), jnp.float32),
        beta=jnp.zeros((2 * L, E), jnp.float32),
    )


# --------------------------- pure-JAX reference --------------------------------
def reference_encoder(src, p):
    x = jnp.transpose(src, (1, 0, 2))   # (N, T, E)
    E = D_MODEL

    def mha(xq, wqkv, b, wo, bo):
        q = xq @ wqkv[:E].T + b[:E]
        k = xq @ wqkv[E:2 * E].T + b[E:2 * E]
        v = xq @ wqkv[2 * E:].T + b[2 * E:]

        def split(t_):
            n, L_, _ = t_.shape
            return t_.reshape(n, L_, NHEAD, HEAD_DIM).transpose(0, 2, 1, 3)

        qh, kh, vh = split(q), split(k), split(v)
        s = jnp.einsum('nhqd,nhkd->nhqk', qh, kh) / math.sqrt(HEAD_DIM)
        pa = jax.nn.softmax(s, axis=-1)
        o = jnp.einsum('nhqk,nhkd->nhqd', pa, vh)
        o = o.transpose(0, 2, 1, 3).reshape(xq.shape[0], xq.shape[1], E)
        return o @ wo.T + bo

    def ln(h, g, b_):
        mu = h.mean(-1, keepdims=True)
        var = ((h - mu) ** 2).mean(-1, keepdims=True)
        return (h - mu) / jnp.sqrt(var + LN_EPS) * g + b_

    for l in range(NUM_LAYERS):
        x = ln(x + mha(x, p['wqkv'][l], p['bqkv'][l], p['wo'][l], p['bo'][l]),
               p['gamma'][2 * l], p['beta'][2 * l])
        h = jax.nn.relu(x @ p['w1'][l].T + p['b1'][l])
        ff = h @ p['w2'][l].T + p['b2'][l]
        x = ln(x + ff, p['gamma'][2 * l + 1], p['beta'][2 * l + 1])
    return jnp.transpose(x, (1, 0, 2))


# ----------------------------------- main --------------------------------------
if __name__ == "__main__":
    key = jax.random.PRNGKey(0)
    k1, k2 = jax.random.split(key, 2)

    T, N = 8, 16  # seq len, batch (2 batch tiles of 8 -> 2 parallel grid steps)
    src = jax.random.normal(k1, (T, N, D_MODEL), jnp.float32)
    params = init_params(k2)

    ref = reference_encoder(src, params)

    # f32 MXU path (default).  Tolerance reflects TPU default-precision f32
    # matmul passes + the approx EUP reciprocal in the softmax, not layout bugs.
    out = jax.block_until_ready(transformer_encoder(src, params))
    assert out.shape == (T, N, D_MODEL)
    assert bool(jnp.all(jnp.isfinite(out)))
    assert jnp.allclose(out, ref, atol=2e-2, rtol=2e-2), (
        float(jnp.max(jnp.abs(out - ref))))

    # bf16 MXU-operand path (v6e / v7x fast path), f32 accumulation.
    out_bf16 = jax.block_until_ready(
        transformer_encoder(src, params, compute_dtype=jnp.bfloat16))
    assert bool(jnp.all(jnp.isfinite(out_bf16)))
    assert jnp.allclose(out_bf16, ref, atol=6e-2, rtol=6e-2), (
        float(jnp.max(jnp.abs(out_bf16 - ref))))

    print("KERNEL_OK")
</pallas_src>

<mosaic_0001>
module attributes {stable_mosaic.version = 11 : i64} {
  func.func @kernel(%arg0: i32, %arg1: memref<8x8x32xf32, #tpu.memory_space<vmem>>, %arg2: memref<2x32x96xf32, #tpu.memory_space<vmem>>, %arg3: memref<2x96xf32, #tpu.memory_space<vmem>>, %arg4: memref<2x32x32xf32, #tpu.memory_space<vmem>>, %arg5: memref<2x32xf32, #tpu.memory_space<vmem>>, %arg6: memref<2x32x64xf32, #tpu.memory_space<vmem>>, %arg7: memref<2x64xf32, #tpu.memory_space<vmem>>, %arg8: memref<2x64x32xf32, #tpu.memory_space<vmem>>, %arg9: memref<2x32xf32, #tpu.memory_space<vmem>>, %arg10: memref<4x32xf32, #tpu.memory_space<vmem>>, %arg11: memref<4x32xf32, #tpu.memory_space<vmem>>, %arg12: memref<8x8x32xf32, #tpu.memory_space<vmem>>) attributes {dimension_semantics = [#tpu.dimension_semantics<parallel>], iteration_bounds = array<i64: 2>, scalar_prefetch = 0 : i64, scratch_operands = 0 : i64, tpu.core_type = #tpu.core_type<tc>, window_params = [{transform_indices = @transform_0, window_bounds = array<i64: 8, 8, 32>}, {pipeline_mode = #tpu.pipeline_mode<synchronous>, transform_indices = @transform_1, window_bounds = array<i64: 2, 32, 96>}, {pipeline_mode = #tpu.pipeline_mode<synchronous>, transform_indices = @transform_2, window_bounds = array<i64: 2, 96>}, {pipeline_mode = #tpu.pipeline_mode<synchronous>, transform_indices = @transform_3, window_bounds = array<i64: 2, 32, 32>}, {pipeline_mode = #tpu.pipeline_mode<synchronous>, transform_indices = @transform_4, window_bounds = array<i64: 2, 32>}, {pipeline_mode = #tpu.pipeline_mode<synchronous>, transform_indices = @transform_5, window_bounds = array<i64: 2, 32, 64>}, {pipeline_mode = #tpu.pipeline_mode<synchronous>, transform_indices = @transform_6, window_bounds = array<i64: 2, 64>}, {pipeline_mode = #tpu.pipeline_mode<synchronous>, transform_indices = @transform_7, window_bounds = array<i64: 2, 64, 32>}, {pipeline_mode = #tpu.pipeline_mode<synchronous>, transform_indices = @transform_8, window_bounds = array<i64: 2, 32>}, {pipeline_mode = #tpu.pipeline_mode<synchronous>, transform_indices = @transform_9, window_bounds = array<i64: 4, 32>}, {pipeline_mode = #tpu.pipeline_mode<synchronous>, transform_indices = @transform_10, window_bounds = array<i64: 4, 32>}, {transform_indices = @transform_11, window_bounds = array<i64: 8, 8, 32>}]} {
    %c0 = arith.constant 0 : index
    %c0_0 = arith.constant 0 : index
    %c0_1 = arith.constant 0 : index
    %0 = vector.load %arg1[%c0, %c0_0, %c0_1] : memref<8x8x32xf32, #tpu.memory_space<vmem>>, vector<8x8x32xf32>
    %1 = vector.extract_strided_slice %0 {offsets = [0, 0, 0], sizes = [1, 8, 32], strides = [1, 1, 1]} : vector<8x8x32xf32> to vector<1x8x32xf32>
    %2 = vector.shape_cast %1 : vector<1x8x32xf32> to vector<8x32xf32>
    %3 = vector.extract_strided_slice %0 {offsets = [1, 0, 0], sizes = [1, 8, 32], strides = [1, 1, 1]} : vector<8x8x32xf32> to vector<1x8x32xf32>
    %4 = vector.shape_cast %3 : vector<1x8x32xf32> to vector<8x32xf32>
    %5 = vector.extract_strided_slice %0 {offsets = [2, 0, 0], sizes = [1, 8, 32], strides = [1, 1, 1]} : vector<8x8x32xf32> to vector<1x8x32xf32>
    %6 = vector.shape_cast %5 : vector<1x8x32xf32> to vector<8x32xf32>
    %7 = vector.extract_strided_slice %0 {offsets = [3, 0, 0], sizes = [1, 8, 32], strides = [1, 1, 1]} : vector<8x8x32xf32> to vector<1x8x32xf32>
    %8 = vector.shape_cast %7 : vector<1x8x32xf32> to vector<8x32xf32>
    %9 = vector.extract_strided_slice %0 {offsets = [4, 0, 0], sizes = [1, 8, 32], strides = [1, 1, 1]} : vector<8x8x32xf32> to vector<1x8x32xf32>
    %10 = vector.shape_cast %9 : vector<1x8x32xf32> to vector<8x32xf32>
    %11 = vector.extract_strided_slice %0 {offsets = [5, 0, 0], sizes = [1, 8, 32], strides = [1, 1, 1]} : vector<8x8x32xf32> to vector<1x8x32xf32>
    %12 = vector.shape_cast %11 : vector<1x8x32xf32> to vector<8x32xf32>
    %13 = vector.extract_strided_slice %0 {offsets = [6, 0, 0], sizes = [1, 8, 32], strides = [1, 1, 1]} : vector<8x8x32xf32> to vector<1x8x32xf32>
    %14 = vector.shape_cast %13 : vector<1x8x32xf32> to vector<8x32xf32>
    %15 = vector.extract_strided_slice %0 {offsets = [7, 0, 0], sizes = [1, 8, 32], strides = [1, 1, 1]} : vector<8x8x32xf32> to vector<1x8x32xf32>
    %16 = vector.shape_cast %15 : vector<1x8x32xf32> to vector<8x32xf32>
    %17 = tpu.concatenate %2, %4, %6, %8, %10, %12, %14, %16 in 0 : vector<8x32xf32>, vector<8x32xf32>, vector<8x32xf32>, vector<8x32xf32>, vector<8x32xf32>, vector<8x32xf32>, vector<8x32xf32>, vector<8x32xf32> -> vector<64x32xf32>
    %18 = tpu.iota {dimensions = array<i32: 0>} : vector<64x64xi32>
    %c7_i32 = arith.constant 7 : i32
    %19 = vector.broadcast %c7_i32 : i32 to vector<64x64xi32>
    %20 = arith.andi %18, %19 : vector<64x64xi32>
    %21 = tpu.iota {dimensions = array<i32: 1>} : vector<64x64xi32>
    %c7_i32_2 = arith.constant 7 : i32
    %22 = vector.broadcast %c7_i32_2 : i32 to vector<64x64xi32>
    %23 = arith.andi %21, %22 : vector<64x64xi32>
    %24 = arith.cmpi eq, %20, %23 : vector<64x64xi32>
    %cst = arith.constant 0.000000e+00 : f32
    %cst_3 = arith.constant -1.000000e+30 : f32
    %25 = vector.broadcast %cst : f32 to vector<64x64xf32>
    %26 = vector.broadcast %cst_3 : f32 to vector<64x64xf32>
    %27 = arith.select %24, %25, %26 : vector<64x64xi1>, vector<64x64xf32>
    %c0_4 = arith.constant 0 : index
    %c0_5 = arith.constant 0 : index
    %c0_6 = arith.constant 0 : index
    %28 = vector.load %arg2[%c0_4, %c0_5, %c0_6] : memref<2x32x96xf32, #tpu.memory_space<vmem>>, vector<1x32x96xf32>
    %29 = vector.shape_cast %28 : vector<1x32x96xf32> to vector<32x96xf32>
    %cst_7 = arith.constant dense<0.000000e+00> : vector<64x96xf32>
    %30 = tpu.matmul %17, %29, %cst_7 {dimension_numbers = #tpu.dot_dimension_numbers<[1], [0], [0], [1], [0, 0, 1, 1], [], []>} : vector<64x32xf32>, vector<32x96xf32>, vector<64x96xf32> -> vector<64x96xf32>
    %c0_8 = arith.constant 0 : index
    %c0_9 = arith.constant 0 : index
    %31 = vector.load %arg3[%c0_8, %c0_9] : memref<2x96xf32, #tpu.memory_space<vmem>>, vector<1x96xf32>
    %32 = vector.shape_cast %31 : vector<1x96xf32> to vector<96xf32>
    %33 = vector.shape_cast %32 : vector<96xf32> to vector<1x96xf32>
    %34 = vector.broadcast %33 : vector<1x96xf32> to vector<64x96xf32>
    %35 = arith.addf %30, %34 : vector<64x96xf32>
    %36 = vector.extract_strided_slice %35 {offsets = [0, 0], sizes = [64, 8], strides = [1, 1]} : vector<64x96xf32> to vector<64x8xf32>
    %37 = vector.extract_strided_slice %35 {offsets = [0, 8], sizes = [64, 8], strides = [1, 1]} : vector<64x96xf32> to vector<64x8xf32>
    %38 = vector.extract_strided_slice %35 {offsets = [0, 16], sizes = [64, 8], strides = [1, 1]} : vector<64x96xf32> to vector<64x8xf32>
    %39 = vector.extract_strided_slice %35 {offsets = [0, 24], sizes = [64, 8], strides = [1, 1]} : vector<64x96xf32> to vector<64x8xf32>
    %40 = vector.shape_cast %36 : vector<64x8xf32> to vector<1x64x8xf32>
    %41 = vector.shape_cast %37 : vector<64x8xf32> to vector<1x64x8xf32>
    %42 = vector.shape_cast %38 : vector<64x8xf32> to vector<1x64x8xf32>
    %43 = vector.shape_cast %39 : vector<64x8xf32> to vector<1x64x8xf32>
    %44 = tpu.concatenate %40, %41, %42, %43 in 0 : vector<1x64x8xf32>, vector<1x64x8xf32>, vector<1x64x8xf32>, vector<1x64x8xf32> -> vector<4x64x8xf32>
    %45 = vector.extract_strided_slice %35 {offsets = [0, 32], sizes = [64, 8], strides = [1, 1]} : vector<64x96xf32> to vector<64x8xf32>
    %46 = vector.extract_strided_slice %35 {offsets = [0, 40], sizes = [64, 8], strides = [1, 1]} : vector<64x96xf32> to vector<64x8xf32>
    %47 = vector.extract_strided_slice %35 {offsets = [0, 48], sizes = [64, 8], strides = [1, 1]} : vector<64x96xf32> to vector<64x8xf32>
    %48 = vector.extract_strided_slice %35 {offsets = [0, 56], sizes = [64, 8], strides = [1, 1]} : vector<64x96xf32> to vector<64x8xf32>
    %49 = vector.shape_cast %45 : vector<64x8xf32> to vector<1x64x8xf32>
    %50 = vector.shape_cast %46 : vector<64x8xf32> to vector<1x64x8xf32>
    %51 = vector.shape_cast %47 : vector<64x8xf32> to vector<1x64x8xf32>
    %52 = vector.shape_cast %48 : vector<64x8xf32> to vector<1x64x8xf32>
    %53 = tpu.concatenate %49, %50, %51, %52 in 0 : vector<1x64x8xf32>, vector<1x64x8xf32>, vector<1x64x8xf32>, vector<1x64x8xf32> -> vector<4x64x8xf32>
    %54 = vector.extract_strided_slice %35 {offsets = [0, 64], sizes = [64, 8], strides = [1, 1]} : vector<64x96xf32> to vector<64x8xf32>
    %55 = vector.extract_strided_slice %35 {offsets = [0, 72], sizes = [64, 8], strides = [1, 1]} : vector<64x96xf32> to vector<64x8xf32>
    %56 = vector.extract_strided_slice %35 {offsets = [0, 80], sizes = [64, 8], strides = [1, 1]} : vector<64x96xf32> to vector<64x8xf32>
    %57 = vector.extract_strided_slice %35 {offsets = [0, 88], sizes = [64, 8], strides = [1, 1]} : vector<64x96xf32> to vector<64x8xf32>
    %58 = vector.shape_cast %54 : vector<64x8xf32> to vector<1x64x8xf32>
    %59 = vector.shape_cast %55 : vector<64x8xf32> to vector<1x64x8xf32>
    %60 = vector.shape_cast %56 : vector<64x8xf32> to vector<1x64x8xf32>
    %61 = vector.shape_cast %57 : vector<64x8xf32> to vector<1x64x8xf32>
    %62 = tpu.concatenate %58, %59, %60, %61 in 0 : vector<1x64x8xf32>, vector<1x64x8xf32>, vector<1x64x8xf32>, vector<1x64x8xf32> -> vector<4x64x8xf32>
    "tpu.trace_start"() <{level = 10 : i32, message = "hqd,hkd->hqk"}> : () -> ()
    %cst_10 = arith.constant dense<0.000000e+00> : vector<4x64x64xf32>
    %63 = tpu.matmul %44, %53, %cst_10 {dimension_numbers = #tpu.dot_dimension_numbers<[2], [2], [1], [1], [0, 0, 0, 1, 1, 1], [0], [0]>} : vector<4x64x8xf32>, vector<4x64x8xf32>, vector<4x64x64xf32> -> vector<4x64x64xf32>
    "tpu.trace_stop"() : () -> ()
    %64 = vector.shape_cast %27 : vector<64x64xf32> to vector<1x64x64xf32>
    %65 = vector.broadcast %64 : vector<1x64x64xf32> to vector<4x64x64xf32>
    %66 = arith.addf %63, %65 : vector<4x64x64xf32>
    %cst_11 = arith.constant dense<0xFF800000> : vector<4x64xf32>
    %67 = vector.multi_reduction <maximumf>, %66, %cst_11 [2] : vector<4x64x64xf32> to vector<4x64xf32>
    %68 = vector.shape_cast %67 : vector<4x64xf32> to vector<4x64x1xf32>
    %69 = vector.broadcast %68 : vector<4x64x1xf32> to vector<4x64x64xf32>
    %70 = arith.subf %66, %69 : vector<4x64x64xf32>
    %71 = math.exp %70 : vector<4x64x64xf32>
    %cst_12 = arith.constant dense<0.000000e+00> : vector<4x64xf32>
    %72 = vector.multi_reduction <add>, %71, %cst_12 [2] : vector<4x64x64xf32> to vector<4x64xf32>
    %73 = vector.shape_cast %72 : vector<4x64xf32> to vector<4x64x1xf32>
    %74 = tpu.reciprocal %73 {approx = true} : vector<4x64x1xf32> -> vector<4x64x1xf32>
    %75 = vector.broadcast %74 : vector<4x64x1xf32> to vector<4x64x64xf32>
    %76 = arith.mulf %71, %75 : vector<4x64x64xf32>
    "tpu.trace_start"() <{level = 10 : i32, message = "hqk,hkd->hqd"}> : () -> ()
    %cst_13 = arith.constant dense<0.000000e+00> : vector<4x64x8xf32>
    %77 = tpu.matmul %76, %62, %cst_13 {dimension_numbers = #tpu.dot_dimension_numbers<[2], [1], [1], [2], [0, 0, 0, 1, 1, 2], [0], [0]>} : vector<4x64x64xf32>, vector<4x64x8xf32>, vector<4x64x8xf32> -> vector<4x64x8xf32>
    "tpu.trace_stop"() : () -> ()
    %78 = vector.extract_strided_slice %77 {offsets = [0, 0, 0], sizes = [1, 64, 8], strides = [1, 1, 1]} : vector<4x64x8xf32> to vector<1x64x8xf32>
    %79 = vector.shape_cast %78 : vector<1x64x8xf32> to vector<64x8xf32>
    %80 = vector.extract_strided_slice %77 {offsets = [1, 0, 0], sizes = [1, 64, 8], strides = [1, 1, 1]} : vector<4x64x8xf32> to vector<1x64x8xf32>
    %81 = vector.shape_cast %80 : vector<1x64x8xf32> to vector<64x8xf32>
    %82 = vector.extract_strided_slice %77 {offsets = [2, 0, 0], sizes = [1, 64, 8], strides = [1, 1, 1]} : vector<4x64x8xf32> to vector<1x64x8xf32>
    %83 = vector.shape_cast %82 : vector<1x64x8xf32> to vector<64x8xf32>
    %84 = vector.extract_strided_slice %77 {offsets = [3, 0, 0], sizes = [1, 64, 8], strides = [1, 1, 1]} : vector<4x64x8xf32> to vector<1x64x8xf32>
    %85 = vector.shape_cast %84 : vector<1x64x8xf32> to vector<64x8xf32>
    %86 = tpu.concatenate %79, %81, %83, %85 in 1 : vector<64x8xf32>, vector<64x8xf32>, vector<64x8xf32>, vector<64x8xf32> -> vector<64x32xf32>
    %c0_14 = arith.constant 0 : index
    %c0_15 = arith.constant 0 : index
    %c0_16 = arith.constant 0 : index
    %87 = vector.load %arg4[%c0_14, %c0_15, %c0_16] : memref<2x32x32xf32, #tpu.memory_space<vmem>>, vector<1x32x32xf32>
    %88 = vector.shape_cast %87 : vector<1x32x32xf32> to vector<32x32xf32>
    %cst_17 = arith.constant dense<0.000000e+00> : vector<64x32xf32>
    %89 = tpu.matmul %86, %88, %cst_17 {dimension_numbers = #tpu.dot_dimension_numbers<[1], [0], [0], [1], [0, 0, 1, 1], [], []>} : vector<64x32xf32>, vector<32x32xf32>, vector<64x32xf32> -> vector<64x32xf32>
    %c0_18 = arith.constant 0 : index
    %c0_19 = arith.constant 0 : index
    %90 = vector.load %arg5[%c0_18, %c0_19] : memref<2x32xf32, #tpu.memory_space<vmem>>, vector<1x32xf32>
    %91 = vector.shape_cast %90 : vector<1x32xf32> to vector<32xf32>
    %92 = vector.shape_cast %91 : vector<32xf32> to vector<1x32xf32>
    %93 = vector.broadcast %92 : vector<1x32xf32> to vector<64x32xf32>
    %94 = arith.addf %89, %93 : vector<64x32xf32>
    %95 = arith.addf %17, %94 : vector<64x32xf32>
    %c0_20 = arith.constant 0 : index
    %c0_21 = arith.constant 0 : index
    %96 = vector.load %arg10[%c0_20, %c0_21] : memref<4x32xf32, #tpu.memory_space<vmem>>, vector<1x32xf32>
    %97 = vector.shape_cast %96 : vector<1x32xf32> to vector<32xf32>
    %c0_22 = arith.constant 0 : index
    %c0_23 = arith.constant 0 : index
    %98 = vector.load %arg11[%c0_22, %c0_23] : memref<4x32xf32, #tpu.memory_space<vmem>>, vector<1x32xf32>
    %99 = vector.shape_cast %98 : vector<1x32xf32> to vector<32xf32>
    %cst_24 = arith.constant dense<0.000000e+00> : vector<64xf32>
    %100 = vector.multi_reduction <add>, %95, %cst_24 [1] : vector<64x32xf32> to vector<64xf32>
    %101 = vector.shape_cast %100 : vector<64xf32> to vector<64x1xf32>
    %cst_25 = arith.constant 3.200000e+01 : f32
    %102 = vector.broadcast %cst_25 : f32 to vector<64x1xf32>
    %103 = arith.divf %101, %102 : vector<64x1xf32>
    %104 = vector.broadcast %103 : vector<64x1xf32> to vector<64x32xf32>
    %105 = arith.subf %95, %104 : vector<64x32xf32>
    %106 = arith.mulf %105, %105 : vector<64x32xf32>
    %cst_26 = arith.constant dense<0.000000e+00> : vector<64xf32>
    %107 = vector.multi_reduction <add>, %106, %cst_26 [1] : vector<64x32xf32> to vector<64xf32>
    %108 = vector.shape_cast %107 : vector<64xf32> to vector<64x1xf32>
    %cst_27 = arith.constant 3.200000e+01 : f32
    %109 = vector.broadcast %cst_27 : f32 to vector<64x1xf32>
    %110 = arith.divf %108, %109 : vector<64x1xf32>
    %111 = vector.broadcast %103 : vector<64x1xf32> to vector<64x32xf32>
    %112 = arith.subf %95, %111 : vector<64x32xf32>
    %cst_28 = arith.constant 9.99999974E-6 : f32
    %113 = vector.broadcast %cst_28 : f32 to vector<64x1xf32>
    %114 = arith.addf %110, %113 : vector<64x1xf32>
    %115 = math.rsqrt %114 : vector<64x1xf32>
    %116 = vector.broadcast %115 : vector<64x1xf32> to vector<64x32xf32>
    %117 = arith.mulf %112, %116 : vector<64x32xf32>
    %118 = vector.shape_cast %97 : vector<32xf32> to vector<1x32xf32>
    %119 = vector.broadcast %118 : vector<1x32xf32> to vector<64x32xf32>
    %120 = arith.mulf %117, %119 : vector<64x32xf32>
    %121 = vector.shape_cast %99 : vector<32xf32> to vector<1x32xf32>
    %122 = vector.broadcast %121 : vector<1x32xf32> to vector<64x32xf32>
    %123 = arith.addf %120, %122 : vector<64x32xf32>
    %c0_29 = arith.constant 0 : index
    %c0_30 = arith.constant 0 : index
    %c0_31 = arith.constant 0 : index
    %124 = vector.load %arg6[%c0_29, %c0_30, %c0_31] : memref<2x32x64xf32, #tpu.memory_space<vmem>>, vector<1x32x64xf32>
    %125 = vector.shape_cast %124 : vector<1x32x64xf32> to vector<32x64xf32>
    %cst_32 = arith.constant dense<0.000000e+00> : vector<64x64xf32>
    %126 = tpu.matmul %123, %125, %cst_32 {dimension_numbers = #tpu.dot_dimension_numbers<[1], [0], [0], [1], [0, 0, 1, 1], [], []>} : vector<64x32xf32>, vector<32x64xf32>, vector<64x64xf32> -> vector<64x64xf32>
    %c0_33 = arith.constant 0 : index
    %c0_34 = arith.constant 0 : index
    %127 = vector.load %arg7[%c0_33, %c0_34] : memref<2x64xf32, #tpu.memory_space<vmem>>, vector<1x64xf32>
    %128 = vector.shape_cast %127 : vector<1x64xf32> to vector<64xf32>
    %129 = vector.shape_cast %128 : vector<64xf32> to vector<1x64xf32>
    %130 = vector.broadcast %129 : vector<1x64xf32> to vector<64x64xf32>
    %131 = arith.addf %126, %130 : vector<64x64xf32>
    %cst_35 = arith.constant 0.000000e+00 : f32
    %132 = vector.broadcast %cst_35 : f32 to vector<64x64xf32>
    %133 = arith.maximumf %131, %132 : vector<64x64xf32>
    %c0_36 = arith.constant 0 : index
    %c0_37 = arith.constant 0 : index
    %c0_38 = arith.constant 0 : index
    %134 = vector.load %arg8[%c0_36, %c0_37, %c0_38] : memref<2x64x32xf32, #tpu.memory_space<vmem>>, vector<1x64x32xf32>
    %135 = vector.shape_cast %134 : vector<1x64x32xf32> to vector<64x32xf32>
    %cst_39 = arith.constant dense<0.000000e+00> : vector<64x32xf32>
    %136 = tpu.matmul %133, %135, %cst_39 {dimension_numbers = #tpu.dot_dimension_numbers<[1], [0], [0], [1], [0, 0, 1, 1], [], []>} : vector<64x64xf32>, vector<64x32xf32>, vector<64x32xf32> -> vector<64x32xf32>
    %c0_40 = arith.constant 0 : index
    %c0_41 = arith.constant 0 : index
    %137 = vector.load %arg9[%c0_40, %c0_41] : memref<2x32xf32, #tpu.memory_space<vmem>>, vector<1x32xf32>
    %138 = vector.shape_cast %137 : vector<1x32xf32> to vector<32xf32>
    %139 = vector.shape_cast %138 : vector<32xf32> to vector<1x32xf32>
    %140 = vector.broadcast %139 : vector<1x32xf32> to vector<64x32xf32>
    %141 = arith.addf %136, %140 : vector<64x32xf32>
    %142 = arith.addf %123, %141 : vector<64x32xf32>
    %c1 = arith.constant 1 : index
    %c0_42 = arith.constant 0 : index
    %143 = vector.load %arg10[%c1, %c0_42] : memref<4x32xf32, #tpu.memory_space<vmem>>, vector<1x32xf32>
    %144 = vector.shape_cast %143 : vector<1x32xf32> to vector<32xf32>
    %c1_43 = arith.constant 1 : index
    %c0_44 = arith.constant 0 : index
    %145 = vector.load %arg11[%c1_43, %c0_44] : memref<4x32xf32, #tpu.memory_space<vmem>>, vector<1x32xf32>
    %146 = vector.shape_cast %145 : vector<1x32xf32> to vector<32xf32>
    %cst_45 = arith.constant dense<0.000000e+00> : vector<64xf32>
    %147 = vector.multi_reduction <add>, %142, %cst_45 [1] : vector<64x32xf32> to vector<64xf32>
    %148 = vector.shape_cast %147 : vector<64xf32> to vector<64x1xf32>
    %cst_46 = arith.constant 3.200000e+01 : f32
    %149 = vector.broadcast %cst_46 : f32 to vector<64x1xf32>
    %150 = arith.divf %148, %149 : vector<64x1xf32>
    %151 = vector.broadcast %150 : vector<64x1xf32> to vector<64x32xf32>
    %152 = arith.subf %142, %151 : vector<64x32xf32>
    %153 = arith.mulf %152, %152 : vector<64x32xf32>
    %cst_47 = arith.constant dense<0.000000e+00> : vector<64xf32>
    %154 = vector.multi_reduction <add>, %153, %cst_47 [1] : vector<64x32xf32> to vector<64xf32>
    %155 = vector.shape_cast %154 : vector<64xf32> to vector<64x1xf32>
    %cst_48 = arith.constant 3.200000e+01 : f32
    %156 = vector.broadcast %cst_48 : f32 to vector<64x1xf32>
    %157 = arith.divf %155, %156 : vector<64x1xf32>
    %158 = vector.broadcast %150 : vector<64x1xf32> to vector<64x32xf32>
    %159 = arith.subf %142, %158 : vector<64x32xf32>
    %cst_49 = arith.constant 9.99999974E-6 : f32
    %160 = vector.broadcast %cst_49 : f32 to vector<64x1xf32>
    %161 = arith.addf %157, %160 : vector<64x1xf32>
    %162 = math.rsqrt %161 : vector<64x1xf32>
    %163 = vector.broadcast %162 : vector<64x1xf32> to vector<64x32xf32>
    %164 = arith.mulf %159, %163 : vector<64x32xf32>
    %165 = vector.shape_cast %144 : vector<32xf32> to vector<1x32xf32>
    %166 = vector.broadcast %165 : vector<1x32xf32> to vector<64x32xf32>
    %167 = arith.mulf %164, %166 : vector<64x32xf32>
    %168 = vector.shape_cast %146 : vector<32xf32> to vector<1x32xf32>
    %169 = vector.broadcast %168 : vector<1x32xf32> to vector<64x32xf32>
    %170 = arith.addf %167, %169 : vector<64x32xf32>
    %c1_50 = arith.constant 1 : index
    %c0_51 = arith.constant 0 : index
    %c0_52 = arith.constant 0 : index
    %171 = vector.load %arg2[%c1_50, %c0_51, %c0_52] : memref<2x32x96xf32, #tpu.memory_space<vmem>>, vector<1x32x96xf32>
    %172 = vector.shape_cast %171 : vector<1x32x96xf32> to vector<32x96xf32>
    %cst_53 = arith.constant dense<0.000000e+00> : vector<64x96xf32>
    %173 = tpu.matmul %170, %172, %cst_53 {dimension_numbers = #tpu.dot_dimension_numbers<[1], [0], [0], [1], [0, 0, 1, 1], [], []>} : vector<64x32xf32>, vector<32x96xf32>, vector<64x96xf32> -> vector<64x96xf32>
    %c1_54 = arith.constant 1 : index
    %c0_55 = arith.constant 0 : index
    %174 = vector.load %arg3[%c1_54, %c0_55] : memref<2x96xf32, #tpu.memory_space<vmem>>, vector<1x96xf32>
    %175 = vector.shape_cast %174 : vector<1x96xf32> to vector<96xf32>
    %176 = vector.shape_cast %175 : vector<96xf32> to vector<1x96xf32>
    %177 = vector.broadcast %176 : vector<1x96xf32> to vector<64x96xf32>
    %178 = arith.addf %173, %177 : vector<64x96xf32>
    %179 = vector.extract_strided_slice %178 {offsets = [0, 0], sizes = [64, 8], strides = [1, 1]} : vector<64x96xf32> to vector<64x8xf32>
    %180 = vector.extract_strided_slice %178 {offsets = [0, 8], sizes = [64, 8], strides = [1, 1]} : vector<64x96xf32> to vector<64x8xf32>
    %181 = vector.extract_strided_slice %178 {offsets = [0, 16], sizes = [64, 8], strides = [1, 1]} : vector<64x96xf32> to vector<64x8xf32>
    %182 = vector.extract_strided_slice %178 {offsets = [0, 24], sizes = [64, 8], strides = [1, 1]} : vector<64x96xf32> to vector<64x8xf32>
    %183 = vector.shape_cast %179 : vector<64x8xf32> to vector<1x64x8xf32>
    %184 = vector.shape_cast %180 : vector<64x8xf32> to vector<1x64x8xf32>
    %185 = vector.shape_cast %181 : vector<64x8xf32> to vector<1x64x8xf32>
    %186 = vector.shape_cast %182 : vector<64x8xf32> to vector<1x64x8xf32>
    %187 = tpu.concatenate %183, %184, %185, %186 in 0 : vector<1x64x8xf32>, vector<1x64x8xf32>, vector<1x64x8xf32>, vector<1x64x8xf32> -> vector<4x64x8xf32>
    %188 = vector.extract_strided_slice %178 {offsets = [0, 32], sizes = [64, 8], strides = [1, 1]} : vector<64x96xf32> to vector<64x8xf32>
    %189 = vector.extract_strided_slice %178 {offsets = [0, 40], sizes = [64, 8], strides = [1, 1]} : vector<64x96xf32> to vector<64x8xf32>
    %190 = vector.extract_strided_slice %178 {offsets = [0, 48], sizes = [64, 8], strides = [1, 1]} : vector<64x96xf32> to vector<64x8xf32>
    %191 = vector.extract_strided_slice %178 {offsets = [0, 56], sizes = [64, 8], strides = [1, 1]} : vector<64x96xf32> to vector<64x8xf32>
    %192 = vector.shape_cast %188 : vector<64x8xf32> to vector<1x64x8xf32>
    %193 = vector.shape_cast %189 : vector<64x8xf32> to vector<1x64x8xf32>
    %194 = vector.shape_cast %190 : vector<64x8xf32> to vector<1x64x8xf32>
    %195 = vector.shape_cast %191 : vector<64x8xf32> to vector<1x64x8xf32>
    %196 = tpu.concatenate %192, %193, %194, %195 in 0 : vector<1x64x8xf32>, vector<1x64x8xf32>, vector<1x64x8xf32>, vector<1x64x8xf32> -> vector<4x64x8xf32>
    %197 = vector.extract_strided_slice %178 {offsets = [0, 64], sizes = [64, 8], strides = [1, 1]} : vector<64x96xf32> to vector<64x8xf32>
    %198 = vector.extract_strided_slice %178 {offsets = [0, 72], sizes = [64, 8], strides = [1, 1]} : vector<64x96xf32> to vector<64x8xf32>
    %199 = vector.extract_strided_slice %178 {offsets = [0, 80], sizes = [64, 8], strides = [1, 1]} : vector<64x96xf32> to vector<64x8xf32>
    %200 = vector.extract_strided_slice %178 {offsets = [0, 88], sizes = [64, 8], strides = [1, 1]} : vector<64x96xf32> to vector<64x8xf32>
    %201 = vector.shape_cast %197 : vector<64x8xf32> to vector<1x64x8xf32>
    %202 = vector.shape_cast %198 : vector<64x8xf32> to vector<1x64x8xf32>
    %203 = vector.shape_cast %199 : vector<64x8xf32> to vector<1x64x8xf32>
    %204 = vector.shape_cast %200 : vector<64x8xf32> to vector<1x64x8xf32>
    %205 = tpu.concatenate %201, %202, %203, %204 in 0 : vector<1x64x8xf32>, vector<1x64x8xf32>, vector<1x64x8xf32>, vector<1x64x8xf32> -> vector<4x64x8xf32>
    "tpu.trace_start"() <{level = 10 : i32, message = "hqd,hkd->hqk"}> : () -> ()
    %cst_56 = arith.constant dense<0.000000e+00> : vector<4x64x64xf32>
    %206 = tpu.matmul %187, %196, %cst_56 {dimension_numbers = #tpu.dot_dimension_numbers<[2], [2], [1], [1], [0, 0, 0, 1, 1, 1], [0], [0]>} : vector<4x64x8xf32>, vector<4x64x8xf32>, vector<4x64x64xf32> -> vector<4x64x64xf32>
    "tpu.trace_stop"() : () -> ()
    %207 = vector.shape_cast %27 : vector<64x64xf32> to vector<1x64x64xf32>
    %208 = vector.broadcast %207 : vector<1x64x64xf32> to vector<4x64x64xf32>
    %209 = arith.addf %206, %208 : vector<4x64x64xf32>
    %cst_57 = arith.constant dense<0xFF800000> : vector<4x64xf32>
    %210 = vector.multi_reduction <maximumf>, %209, %cst_57 [2] : vector<4x64x64xf32> to vector<4x64xf32>
    %211 = vector.shape_cast %210 : vector<4x64xf32> to vector<4x64x1xf32>
    %212 = vector.broadcast %211 : vector<4x64x1xf32> to vector<4x64x64xf32>
    %213 = arith.subf %209, %212 : vector<4x64x64xf32>
    %214 = math.exp %213 : vector<4x64x64xf32>
    %cst_58 = arith.constant dense<0.000000e+00> : vector<4x64xf32>
    %215 = vector.multi_reduction <add>, %214, %cst_58 [2] : vector<4x64x64xf32> to vector<4x64xf32>
    %216 = vector.shape_cast %215 : vector<4x64xf32> to vector<4x64x1xf32>
    %217 = tpu.reciprocal %216 {approx = true} : vector<4x64x1xf32> -> vector<4x64x1xf32>
    %218 = vector.broadcast %217 : vector<4x64x1xf32> to vector<4x64x64xf32>
    %219 = arith.mulf %214, %218 : vector<4x64x64xf32>
    "tpu.trace_start"() <{level = 10 : i32, message = "hqk,hkd->hqd"}> : () -> ()
    %cst_59 = arith.constant dense<0.000000e+00> : vector<4x64x8xf32>
    %220 = tpu.matmul %219, %205, %cst_59 {dimension_numbers = #tpu.dot_dimension_numbers<[2], [1], [1], [2], [0, 0, 0, 1, 1, 2], [0], [0]>} : vector<4x64x64xf32>, vector<4x64x8xf32>, vector<4x64x8xf32> -> vector<4x64x8xf32>
    "tpu.trace_stop"() : () -> ()
    %221 = vector.extract_strided_slice %220 {offsets = [0, 0, 0], sizes = [1, 64, 8], strides = [1, 1, 1]} : vector<4x64x8xf32> to vector<1x64x8xf32>
    %222 = vector.shape_cast %221 : vector<1x64x8xf32> to vector<64x8xf32>
    %223 = vector.extract_strided_slice %220 {offsets = [1, 0, 0], sizes = [1, 64, 8], strides = [1, 1, 1]} : vector<4x64x8xf32> to vector<1x64x8xf32>
    %224 = vector.shape_cast %223 : vector<1x64x8xf32> to vector<64x8xf32>
    %225 = vector.extract_strided_slice %220 {offsets = [2, 0, 0], sizes = [1, 64, 8], strides = [1, 1, 1]} : vector<4x64x8xf32> to vector<1x64x8xf32>
    %226 = vector.shape_cast %225 : vector<1x64x8xf32> to vector<64x8xf32>
    %227 = vector.extract_strided_slice %220 {offsets = [3, 0, 0], sizes = [1, 64, 8], strides = [1, 1, 1]} : vector<4x64x8xf32> to vector<1x64x8xf32>
    %228 = vector.shape_cast %227 : vector<1x64x8xf32> to vector<64x8xf32>
    %229 = tpu.concatenate %222, %224, %226, %228 in 1 : vector<64x8xf32>, vector<64x8xf32>, vector<64x8xf32>, vector<64x8xf32> -> vector<64x32xf32>
    %c1_60 = arith.constant 1 : index
    %c0_61 = arith.constant 0 : index
    %c0_62 = arith.constant 0 : index
    %230 = vector.load %arg4[%c1_60, %c0_61, %c0_62] : memref<2x32x32xf32, #tpu.memory_space<vmem>>, vector<1x32x32xf32>
    %231 = vector.shape_cast %230 : vector<1x32x32xf32> to vector<32x32xf32>
    %cst_63 = arith.constant dense<0.000000e+00> : vector<64x32xf32>
    %232 = tpu.matmul %229, %231, %cst_63 {dimension_numbers = #tpu.dot_dimension_numbers<[1], [0], [0], [1], [0, 0, 1, 1], [], []>} : vector<64x32xf32>, vector<32x32xf32>, vector<64x32xf32> -> vector<64x32xf32>
    %c1_64 = arith.constant 1 : index
    %c0_65 = arith.constant 0 : index
    %233 = vector.load %arg5[%c1_64, %c0_65] : memref<2x32xf32, #tpu.memory_space<vmem>>, vector<1x32xf32>
    %234 = vector.shape_cast %233 : vector<1x32xf32> to vector<32xf32>
    %235 = vector.shape_cast %234 : vector<32xf32> to vector<1x32xf32>
    %236 = vector.broadcast %235 : vector<1x32xf32> to vector<64x32xf32>
    %237 = arith.addf %232, %236 : vector<64x32xf32>
    %238 = arith.addf %170, %237 : vector<64x32xf32>
    %c2 = arith.constant 2 : index
    %c0_66 = arith.constant 0 : index
    %239 = vector.load %arg10[%c2, %c0_66] : memref<4x32xf32, #tpu.memory_space<vmem>>, vector<1x32xf32>
    %240 = vector.shape_cast %239 : vector<1x32xf32> to vector<32xf32>
    %c2_67 = arith.constant 2 : index
    %c0_68 = arith.constant 0 : index
    %241 = vector.load %arg11[%c2_67, %c0_68] : memref<4x32xf32, #tpu.memory_space<vmem>>, vector<1x32xf32>
    %242 = vector.shape_cast %241 : vector<1x32xf32> to vector<32xf32>
    %cst_69 = arith.constant dense<0.000000e+00> : vector<64xf32>
    %243 = vector.multi_reduction <add>, %238, %cst_69 [1] : vector<64x32xf32> to vector<64xf32>
    %244 = vector.shape_cast %243 : vector<64xf32> to vector<64x1xf32>
    %cst_70 = arith.constant 3.200000e+01 : f32
    %245 = vector.broadcast %cst_70 : f32 to vector<64x1xf32>
    %246 = arith.divf %244, %245 : vector<64x1xf32>
    %247 = vector.broadcast %246 : vector<64x1xf32> to vector<64x32xf32>
    %248 = arith.subf %238, %247 : vector<64x32xf32>
    %249 = arith.mulf %248, %248 : vector<64x32xf32>
    %cst_71 = arith.constant dense<0.000000e+00> : vector<64xf32>
    %250 = vector.multi_reduction <add>, %249, %cst_71 [1] : vector<64x32xf32> to vector<64xf32>
    %251 = vector.shape_cast %250 : vector<64xf32> to vector<64x1xf32>
    %cst_72 = arith.constant 3.200000e+01 : f32
    %252 = vector.broadcast %cst_72 : f32 to vector<64x1xf32>
    %253 = arith.divf %251, %252 : vector<64x1xf32>
    %254 = vector.broadcast %246 : vector<64x1xf32> to vector<64x32xf32>
    %255 = arith.subf %238, %254 : vector<64x32xf32>
    %cst_73 = arith.constant 9.99999974E-6 : f32
    %256 = vector.broadcast %cst_73 : f32 to vector<64x1xf32>
    %257 = arith.addf %253, %256 : vector<64x1xf32>
    %258 = math.rsqrt %257 : vector<64x1xf32>
    %259 = vector.broadcast %258 : vector<64x1xf32> to vector<64x32xf32>
    %260 = arith.mulf %255, %259 : vector<64x32xf32>
    %261 = vector.shape_cast %240 : vector<32xf32> to vector<1x32xf32>
    %262 = vector.broadcast %261 : vector<1x32xf32> to vector<64x32xf32>
    %263 = arith.mulf %260, %262 : vector<64x32xf32>
    %264 = vector.shape_cast %242 : vector<32xf32> to vector<1x32xf32>
    %265 = vector.broadcast %264 : vector<1x32xf32> to vector<64x32xf32>
    %266 = arith.addf %263, %265 : vector<64x32xf32>
    %c1_74 = arith.constant 1 : index
    %c0_75 = arith.constant 0 : index
    %c0_76 = arith.constant 0 : index
    %267 = vector.load %arg6[%c1_74, %c0_75, %c0_76] : memref<2x32x64xf32, #tpu.memory_space<vmem>>, vector<1x32x64xf32>
    %268 = vector.shape_cast %267 : vector<1x32x64xf32> to vector<32x64xf32>
    %cst_77 = arith.constant dense<0.000000e+00> : vector<64x64xf32>
    %269 = tpu.matmul %266, %268, %cst_77 {dimension_numbers = #tpu.dot_dimension_numbers<[1], [0], [0], [1], [0, 0, 1, 1], [], []>} : vector<64x32xf32>, vector<32x64xf32>, vector<64x64xf32> -> vector<64x64xf32>
    %c1_78 = arith.constant 1 : index
    %c0_79 = arith.constant 0 : index
    %270 = vector.load %arg7[%c1_78, %c0_79] : memref<2x64xf32, #tpu.memory_space<vmem>>, vector<1x64xf32>
    %271 = vector.shape_cast %270 : vector<1x64xf32> to vector<64xf32>
    %272 = vector.shape_cast %271 : vector<64xf32> to vector<1x64xf32>
    %273 = vector.broadcast %272 : vector<1x64xf32> to vector<64x64xf32>
    %274 = arith.addf %269, %273 : vector<64x64xf32>
    %cst_80 = arith.constant 0.000000e+00 : f32
    %275 = vector.broadcast %cst_80 : f32 to vector<64x64xf32>
    %276 = arith.maximumf %274, %275 : vector<64x64xf32>
    %c1_81 = arith.constant 1 : index
    %c0_82 = arith.constant 0 : index
    %c0_83 = arith.constant 0 : index
    %277 = vector.load %arg8[%c1_81, %c0_82, %c0_83] : memref<2x64x32xf32, #tpu.memory_space<vmem>>, vector<1x64x32xf32>
    %278 = vector.shape_cast %277 : vector<1x64x32xf32> to vector<64x32xf32>
    %cst_84 = arith.constant dense<0.000000e+00> : vector<64x32xf32>
    %279 = tpu.matmul %276, %278, %cst_84 {dimension_numbers = #tpu.dot_dimension_numbers<[1], [0], [0], [1], [0, 0, 1, 1], [], []>} : vector<64x64xf32>, vector<64x32xf32>, vector<64x32xf32> -> vector<64x32xf32>
    %c1_85 = arith.constant 1 : index
    %c0_86 = arith.constant 0 : index
    %280 = vector.load %arg9[%c1_85, %c0_86] : memref<2x32xf32, #tpu.memory_space<vmem>>, vector<1x32xf32>
    %281 = vector.shape_cast %280 : vector<1x32xf32> to vector<32xf32>
    %282 = vector.shape_cast %281 : vector<32xf32> to vector<1x32xf32>
    %283 = vector.broadcast %282 : vector<1x32xf32> to vector<64x32xf32>
    %284 = arith.addf %279, %283 : vector<64x32xf32>
    %285 = arith.addf %266, %284 : vector<64x32xf32>
    %c3 = arith.constant 3 : index
    %c0_87 = arith.constant 0 : index
    %286 = vector.load %arg10[%c3, %c0_87] : memref<4x32xf32, #tpu.memory_space<vmem>>, vector<1x32xf32>
    %287 = vector.shape_cast %286 : vector<1x32xf32> to vector<32xf32>
    %c3_88 = arith.constant 3 : index
    %c0_89 = arith.constant 0 : index
    %288 = vector.load %arg11[%c3_88, %c0_89] : memref<4x32xf32, #tpu.memory_space<vmem>>, vector<1x32xf32>
    %289 = vector.shape_cast %288 : vector<1x32xf32> to vector<32xf32>
    %cst_90 = arith.constant dense<0.000000e+00> : vector<64xf32>
    %290 = vector.multi_reduction <add>, %285, %cst_90 [1] : vector<64x32xf32> to vector<64xf32>
    %291 = vector.shape_cast %290 : vector<64xf32> to vector<64x1xf32>
    %cst_91 = arith.constant 3.200000e+01 : f32
    %292 = vector.broadcast %cst_91 : f32 to vector<64x1xf32>
    %293 = arith.divf %291, %292 : vector<64x1xf32>
    %294 = vector.broadcast %293 : vector<64x1xf32> to vector<64x32xf32>
    %295 = arith.subf %285, %294 : vector<64x32xf32>
    %296 = arith.mulf %295, %295 : vector<64x32xf32>
    %cst_92 = arith.constant dense<0.000000e+00> : vector<64xf32>
    %297 = vector.multi_reduction <add>, %296, %cst_92 [1] : vector<64x32xf32> to vector<64xf32>
    %298 = vector.shape_cast %297 : vector<64xf32> to vector<64x1xf32>
    %cst_93 = arith.constant 3.200000e+01 : f32
    %299 = vector.broadcast %cst_93 : f32 to vector<64x1xf32>
    %300 = arith.divf %298, %299 : vector<64x1xf32>
    %301 = vector.broadcast %293 : vector<64x1xf32> to vector<64x32xf32>
    %302 = arith.subf %285, %301 : vector<64x32xf32>
    %cst_94 = arith.constant 9.99999974E-6 : f32
    %303 = vector.broadcast %cst_94 : f32 to vector<64x1xf32>
    %304 = arith.addf %300, %303 : vector<64x1xf32>
    %305 = math.rsqrt %304 : vector<64x1xf32>
    %306 = vector.broadcast %305 : vector<64x1xf32> to vector<64x32xf32>
    %307 = arith.mulf %302, %306 : vector<64x32xf32>
    %308 = vector.shape_cast %287 : vector<32xf32> to vector<1x32xf32>
    %309 = vector.broadcast %308 : vector<1x32xf32> to vector<64x32xf32>
    %310 = arith.mulf %307, %309 : vector<64x32xf32>
    %311 = vector.shape_cast %289 : vector<32xf32> to vector<1x32xf32>
    %312 = vector.broadcast %311 : vector<1x32xf32> to vector<64x32xf32>
    %313 = arith.addf %310, %312 : vector<64x32xf32>
    %314 = vector.extract_strided_slice %313 {offsets = [0, 0], sizes = [8, 32], strides = [1, 1]} : vector<64x32xf32> to vector<8x32xf32>
    %315 = vector.extract_strided_slice %313 {offsets = [8, 0], sizes = [8, 32], strides = [1, 1]} : vector<64x32xf32> to vector<8x32xf32>
    %316 = vector.extract_strided_slice %313 {offsets = [16, 0], sizes = [8, 32], strides = [1, 1]} : vector<64x32xf32> to vector<8x32xf32>
    %317 = vector.extract_strided_slice %313 {offsets = [24, 0], sizes = [8, 32], strides = [1, 1]} : vector<64x32xf32> to vector<8x32xf32>
    %318 = vector.extract_strided_slice %313 {offsets = [32, 0], sizes = [8, 32], strides = [1, 1]} : vector<64x32xf32> to vector<8x32xf32>
    %319 = vector.extract_strided_slice %313 {offsets = [40, 0], sizes = [8, 32], strides = [1, 1]} : vector<64x32xf32> to vector<8x32xf32>
    %320 = vector.extract_strided_slice %313 {offsets = [48, 0], sizes = [8, 32], strides = [1, 1]} : vector<64x32xf32> to vector<8x32xf32>
    %321 = vector.extract_strided_slice %313 {offsets = [56, 0], sizes = [8, 32], strides = [1, 1]} : vector<64x32xf32> to vector<8x32xf32>
    %322 = vector.shape_cast %314 : vector<8x32xf32> to vector<1x8x32xf32>
    %323 = vector.shape_cast %315 : vector<8x32xf32> to vector<1x8x32xf32>
    %324 = vector.shape_cast %316 : vector<8x32xf32> to vector<1x8x32xf32>
    %325 = vector.shape_cast %317 : vector<8x32xf32> to vector<1x8x32xf32>
    %326 = vector.shape_cast %318 : vector<8x32xf32> to vector<1x8x32xf32>
    %327 = vector.shape_cast %319 : vector<8x32xf32> to vector<1x8x32xf32>
    %328 = vector.shape_cast %320 : vector<8x32xf32> to vector<1x8x32xf32>
    %329 = vector.shape_cast %321 : vector<8x32xf32> to vector<1x8x32xf32>
    %330 = tpu.concatenate %322, %323, %324, %325, %326, %327, %328, %329 in 0 : vector<1x8x32xf32>, vector<1x8x32xf32>, vector<1x8x32xf32>, vector<1x8x32xf32>, vector<1x8x32xf32>, vector<1x8x32xf32>, vector<1x8x32xf32>, vector<1x8x32xf32> -> vector<8x8x32xf32>
    %c0_95 = arith.constant 0 : index
    %c0_96 = arith.constant 0 : index
    %c0_97 = arith.constant 0 : index
    %331 = vector.load %arg12[%c0_95, %c0_96, %c0_97] : memref<8x8x32xf32, #tpu.memory_space<vmem>>, vector<8x8x32xf32>
    tpu.vector_store %arg12[%c0_95, %c0_96, %c0_97], %330 {strides = array<i32>} : memref<8x8x32xf32, #tpu.memory_space<vmem>>, vector<8x8x32xf32>,
    return
  }
  func.func @transform_0(%arg0: i32) -> (i32, i32, i32) {
    %c0_i32 = arith.constant 0 : i32
    %c0_i32_0 = arith.constant 0 : i32
    %c0_i32_1 = arith.constant 0 : i32
    return %c0_i32, %arg0, %c0_i32_0 : i32, i32, i32
  }
  func.func @transform_1(%arg0: i32) -> (i32, i32, i32) {
    %c0_i32 = arith.constant 0 : i32
    %c0_i32_0 = arith.constant 0 : i32
    %c0_i32_1 = arith.constant 0 : i32
    %c0_i32_2 = arith.constant 0 : i32
    return %c0_i32, %c0_i32_0, %c0_i32_1 : i32, i32, i32
  }
  func.func @transform_2(%arg0: i32) -> (i32, i32) {
    %c0_i32 = arith.constant 0 : i32
    %c0_i32_0 = arith.constant 0 : i32
    %c0_i32_1 = arith.constant 0 : i32
    return %c0_i32, %c0_i32_0 : i32, i32
  }
  func.func @transform_3(%arg0: i32) -> (i32, i32, i32) {
    %c0_i32 = arith.constant 0 : i32
    %c0_i32_0 = arith.constant 0 : i32
    %c0_i32_1 = arith.constant 0 : i32
    %c0_i32_2 = arith.constant 0 : i32
    return %c0_i32, %c0_i32_0, %c0_i32_1 : i32, i32, i32
  }
  func.func @transform_4(%arg0: i32) -> (i32, i32) {
    %c0_i32 = arith.constant 0 : i32
    %c0_i32_0 = arith.constant 0 : i32
    %c0_i32_1 = arith.constant 0 : i32
    return %c0_i32, %c0_i32_0 : i32, i32
  }
  func.func @transform_5(%arg0: i32) -> (i32, i32, i32) {
    %c0_i32 = arith.constant 0 : i32
    %c0_i32_0 = arith.constant 0 : i32
    %c0_i32_1 = arith.constant 0 : i32
    %c0_i32_2 = arith.constant 0 : i32
    return %c0_i32, %c0_i32_0, %c0_i32_1 : i32, i32, i32
  }
  func.func @transform_6(%arg0: i32) -> (i32, i32) {
    %c0_i32 = arith.constant 0 : i32
    %c0_i32_0 = arith.constant 0 : i32
    %c0_i32_1 = arith.constant 0 : i32
    return %c0_i32, %c0_i32_0 : i32, i32
  }
  func.func @transform_7(%arg0: i32) -> (i32, i32, i32) {
    %c0_i32 = arith.constant 0 : i32
    %c0_i32_0 = arith.constant 0 : i32
    %c0_i32_1 = arith.constant 0 : i32
    %c0_i32_2 = arith.constant 0 : i32
    return %c0_i32, %c0_i32_0, %c0_i32_1 : i32, i32, i32
  }
  func.func @transform_8(%arg0: i32) -> (i32, i32) {
    %c0_i32 = arith.constant 0 : i32
    %c0_i32_0 = arith.constant 0 : i32
    %c0_i32_1 = arith.constant 0 : i32
    return %c0_i32, %c0_i32_0 : i32, i32
  }
  func.func @transform_9(%arg0: i32) -> (i32, i32) {
    %c0_i32 = arith.constant 0 : i32
    %c0_i32_0 = arith.constant 0 : i32
    %c0_i32_1 = arith.constant 0 : i32
    return %c0_i32, %c0_i32_0 : i32, i32
  }
  func.func @transform_10(%arg0: i32) -> (i32, i32) {
    %c0_i32 = arith.constant 0 : i32
    %c0_i32_0 = arith.constant 0 : i32
    %c0_i32_1 = arith.constant 0 : i32
    return %c0_i32, %c0_i32_0 : i32, i32
  }
  func.func @transform_11(%arg0: i32) -> (i32, i32, i32) {
    %c0_i32 = arith.constant 0 : i32
    %c0_i32_0 = arith.constant 0 : i32
    %c0_i32_1 = arith.constant 0 : i32
    return %c0_i32, %arg0, %c0_i32_0 : i32, i32, i32
  }
}

</mosaic_0001>

<llo_original>
// kernel: tpu_custom_call.1
$region0: #{tpu_custom_call.1}
  #allocation0 [shape = 'u32[]', space=smem, size = 0x4, offset = 0x4, fixed_abs, tag = 'smem constant byte address 0x4 - core index']
  #allocation1 [shape = 'u32[144,128]{1,0:T(1,128)}', space=vmem, size = 0x12000, scoped, tag = 'internal scratch']
  %s0 = inlined_call_operand.vmem [shape: f32[8,16,32], index: 0, kind: input, shape index: {}]
  %s1 = inlined_call_operand.vmem [shape: f32[2,32,96], index: 1, kind: input, shape index: {}]
  %s2 = inlined_call_operand.vmem [shape: f32[2,96], index: 2, kind: input, shape index: {}]
  %s3 = inlined_call_operand.hbm [shape: f32[2,32,32], index: 3, kind: input, shape index: {}]
  %s4 = inlined_call_operand.vmem [shape: f32[2,32], index: 4, kind: input, shape index: {}]
  %s5 = inlined_call_operand.hbm [shape: f32[2,32,64], index: 5, kind: input, shape index: {}]
  %s6 = inlined_call_operand.vmem [shape: f32[2,64], index: 6, kind: input, shape index: {}]
  %s7 = inlined_call_operand.vmem [shape: f32[2,64,32], index: 7, kind: input, shape index: {}]
  %s8 = inlined_call_operand.vmem [shape: f32[2,32], index: 8, kind: input, shape index: {}]
  %s9 = inlined_call_operand.vmem [shape: f32[4,32], index: 9, kind: input, shape index: {}]
  %s10 = inlined_call_operand.vmem [shape: f32[4,32], index: 10, kind: input, shape index: {}]
  %s11 = inlined_call_operand.hbm [shape: f32[8,16,32], index: 11, kind: output, shape index: {}]
  %s12 = sld [smem:[#allocation0]]
  $region123: #{tpu_custom_call.1} parent=0
    _
  %s14 = ssub.s32 1, %s12
  %s15 = scalar_select 0, %s14, %s12
  $region1: #{tpu_custom_call.1} parent=0
    #allocation2 [shape = 'u8[65536]{0}', space=vmem, size = 0x10000, scoped, tag = 'input window, operand 0']
    #allocation3 [shape = 'u8[32768]{0}', space=vmem, size = 0x8000, scoped, tag = 'input window, operand 3, single buffered']
    #allocation4 [shape = 's32[2]{0}', space=sflag, size = 0x8, scoped, tag = 'scoped memory for tpu_custom_call.1']
    #allocation5 [shape = 's32[2]{0}', space=sflag, size = 0x8, scoped, tag = 'scoped memory for tpu_custom_call.1']
    #allocation6 [shape = 'u8[32768]{0}', space=vmem, size = 0x8000, scoped, tag = 'input window, operand 5, single buffered']
    #allocation7 [shape = 's32[1]{0}', space=sflag, size = 0x4, scoped, tag = 'scoped memory for tpu_custom_call.1']
    #allocation8 [shape = 'u8[65536]{0}', space=vmem, size = 0x10000, scoped, tag = 'output window, operand 0']
    %16 = vsyncpa [#allocation4], 0
    %17 = vsyncpa [#allocation7], 0
    %18 = vsyncpa [#allocation5], 0
    %s19 = scalar_lea.sflag [#allocation5], 1
    %20 = vsyncpa %s19, 0
    loop: start=0, step=1, limit=4
    $region2: #{tpu_custom_call.1} parent=1 // loop_pre_header
      _
    $region3: #{tpu_custom_call.1} parent=1 // loop_header
      %s22 = sphi 0, %s26
      %p23 = scmp.ge.s32.totalorder %s22, 4
      %s32 = sphi 0, %s34
      %s35 = sphi 0, %s32
      %s36 = sphi 0, %s35
      %s52 = sphi 0, %s36
      %s56 = sphi 0, %s56
      %s58 = sphi 0, %s56
      %s59 = sphi 0, %s58
      %s73 = sphi 0, %s59
      %s77 = sphi 0, %s77
      %s79 = sphi 0, %s77
      %s80 = sphi 0, %s79
      %s94 = sphi 0, %s80
      %s98 = sphi 0, %s98
      %s100 = sphi 0, %s98
      %s101 = sphi 0, %s100
      %s115 = sphi 0, %s101
      %s119 = sphi 0, %s119
      %s121 = sphi 0, %s119
      %s122 = sphi 0, %s121
      %s136 = sphi 0, %s122
      %s140 = sphi 0, %s140
      %s142 = sphi 0, %s140
      %s143 = sphi 0, %s142
      %s157 = sphi 0, %s143
      %s161 = sphi 0, %s161
      %s163 = sphi 0, %s161
      %s164 = sphi 0, %s163
      %s178 = sphi 0, %s164
      %s182 = sphi 0, %s182
      %s184 = sphi 0, %s182
      %s185 = sphi 0, %s184
      %s199 = sphi 0, %s185
      %s203 = sphi 0, %s203
      %s205 = sphi 0, %s203
      %s206 = sphi 0, %s205
      %s220 = sphi 0, %s206
      %s224 = sphi 0, %s224
      %s226 = sphi 0, %s224
      %s227 = sphi 0, %s226
      %s241 = sphi 0, %s227
      %s245 = sphi 0, %s245
      %s247 = sphi 0, %s245
      %s248 = sphi 0, %s247
      %s262 = sphi 0, %s248
      %s268 = sphi 0, %s270
      %s271 = sphi 0, %s268
      %s272 = sphi 0, %s271
      %s288 = sphi 0, %s272
    $region4: #{tpu_custom_call.1} parent=1 // loop_header_branch
      %25 = sbr.rel (%p23) target = $region8
    $region5: #{tpu_custom_call.1} parent=1 // loop_body
      %s27 = ssub.s32 %s22, 1
      %s28 = ssub.s32 %s22, 2
      %s29 = sadd.s32 %s22, 1
      %s30 = ssub.s32 %s22, %s29
      %p31 = scmp.eq.s32.totalorder %s30, 0
      %s33 = sadd.s32 %s32, 1
      %s34 = scalar_select %p31, %s32, %s33
      %p37 = pneg %p31
      %p38 = scmp.eq.s32.totalorder %s22, 1
      %p39 = por %p37, %p38
      %p40 = scmp.ne.s32.totalorder %s32, %s35
      %p41 = scmp.eq.s32.totalorder %s22, 0
      %p42 = por %p40, %p41
      %p43 = scmp.ne.s32.totalorder %s32, %s35
      %p44 = scmp.eq.s32.totalorder %s27, 1
      %p45 = por %p43, %p44
      %p46 = scmp.ne.s32.totalorder %s35, %s36
      %p47 = scmp.eq.s32.totalorder %s27, 0
      %p48 = por %p46, %p47
      %p49 = scmp.ne.s32.totalorder %s35, %s36
      %p50 = scmp.eq.s32.totalorder %s28, 1
      %p51 = por %p49, %p50
      %p53 = scmp.ne.s32.totalorder %s36, %s52
      %p54 = scmp.eq.s32.totalorder %s28, 0
      %p55 = por %p53, %p54
      %s57 = sadd.s32 %s56, 1
      %p60 = scmp.eq.s32.totalorder %s22, 1
      %p61 = scmp.ne.s32.totalorder %s56, %s58
      %p62 = scmp.eq.s32.totalorder %s22, 0
      %p63 = por %p61, %p62
      %p64 = scmp.ne.s32.totalorder %s56, %s58
      %p65 = scmp.eq.s32.totalorder %s27, 1
      %p66 = por %p64, %p65
      %p67 = scmp.ne.s32.totalorder %s58, %s59
      %p68 = scmp.eq.s32.totalorder %s27, 0
      %p69 = por %p67, %p68
      %p70 = scmp.ne.s32.totalorder %s58, %s59
      %p71 = scmp.eq.s32.totalorder %s28, 1
      %p72 = por %p70, %p71
      %p74 = scmp.ne.s32.totalorder %s59, %s73
      %p75 = scmp.eq.s32.totalorder %s28, 0
      %p76 = por %p74, %p75
      %s78 = sadd.s32 %s77, 1
      %p81 = scmp.eq.s32.totalorder %s22, 1
      %p82 = scmp.ne.s32.totalorder %s77, %s79
      %p83 = scmp.eq.s32.totalorder %s22, 0
      %p84 = por %p82, %p83
      %p85 = scmp.ne.s32.totalorder %s77, %s79
      %p86 = scmp.eq.s32.totalorder %s27, 1
      %p87 = por %p85, %p86
      %p88 = scmp.ne.s32.totalorder %s79, %s80
      %p89 = scmp.eq.s32.totalorder %s27, 0
      %p90 = por %p88, %p89
      %p91 = scmp.ne.s32.totalorder %s79, %s80
      %p92 = scmp.eq.s32.totalorder %s28, 1
      %p93 = por %p91, %p92
      %p95 = scmp.ne.s32.totalorder %s80, %s94
      %p96 = scmp.eq.s32.totalorder %s28, 0
      %p97 = por %p95, %p96
      %s99 = sadd.s32 %s98, 1
      %p102 = scmp.eq.s32.totalorder %s22, 1
      %p103 = scmp.ne.s32.totalorder %s98, %s100
      %p104 = scmp.eq.s32.totalorder %s22, 0
      %p105 = por %p103, %p104
      %p106 = scmp.ne.s32.totalorder %s98, %s100
      %p107 = scmp.eq.s32.totalorder %s27, 1
      %p108 = por %p106, %p107
      %p109 = scmp.ne.s32.totalorder %s100, %s101
      %p110 = scmp.eq.s32.totalorder %s27, 0
      %p111 = por %p109, %p110
      %p112 = scmp.ne.s32.totalorder %s100, %s101
      %p113 = scmp.eq.s32.totalorder %s28, 1
      %p114 = por %p112, %p113
      %p116 = scmp.ne.s32.totalorder %s101, %s115
      %p117 = scmp.eq.s32.totalorder %s28, 0
      %p118 = por %p116, %p117
      %s120 = sadd.s32 %s119, 1
      %p123 = scmp.eq.s32.totalorder %s22, 1
      %p124 = scmp.ne.s32.totalorder %s119, %s121
      %p125 = scmp.eq.s32.totalorder %s22, 0
      %p126 = por %p124, %p125
      %p127 = scmp.ne.s32.totalorder %s119, %s121
      %p128 = scmp.eq.s32.totalorder %s27, 1
      %p129 = por %p127, %p128
      %p130 = scmp.ne.s32.totalorder %s121, %s122
      %p131 = scmp.eq.s32.totalorder %s27, 0
      %p132 = por %p130, %p131
      %p133 = scmp.ne.s32.totalorder %s121, %s122
      %p134 = scmp.eq.s32.totalorder %s28, 1
      %p135 = por %p133, %p134
      %p137 = scmp.ne.s32.totalorder %s122, %s136
      %p138 = scmp.eq.s32.totalorder %s28, 0
      %p139 = por %p137, %p138
      %s141 = sadd.s32 %s140, 1
      %p144 = scmp.eq.s32.totalorder %s22, 1
      %p145 = scmp.ne.s32.totalorder %s140, %s142
      %p146 = scmp.eq.s32.totalorder %s22, 0
      %p147 = por %p145, %p146
      %p148 = scmp.ne.s32.totalorder %s140, %s142
      %p149 = scmp.eq.s32.totalorder %s27, 1
      %p150 = por %p148, %p149
      %p151 = scmp.ne.s32.totalorder %s142, %s143
      %p152 = scmp.eq.s32.totalorder %s27, 0
      %p153 = por %p151, %p152
      %p154 = scmp.ne.s32.totalorder %s142, %s143
      %p155 = scmp.eq.s32.totalorder %s28, 1
      %p156 = por %p154, %p155
      %p158 = scmp.ne.s32.totalorder %s143, %s157
      %p159 = scmp.eq.s32.totalorder %s28, 0
      %p160 = por %p158, %p159
      %s162 = sadd.s32 %s161, 1
      %p165 = scmp.eq.s32.totalorder %s22, 1
      %p166 = scmp.ne.s32.totalorder %s161, %s163
      %p167 = scmp.eq.s32.totalorder %s22, 0
      %p168 = por %p166, %p167
      %p169 = scmp.ne.s32.totalorder %s161, %s163
      %p170 = scmp.eq.s32.totalorder %s27, 1
      %p171 = por %p169, %p170
      %p172 = scmp.ne.s32.totalorder %s163, %s164
      %p173 = scmp.eq.s32.totalorder %s27, 0
      %p174 = por %p172, %p173
      %p175 = scmp.ne.s32.totalorder %s163, %s164
      %p176 = scmp.eq.s32.totalorder %s28, 1
      %p177 = por %p175, %p176
      %p179 = scmp.ne.s32.totalorder %s164, %s178
      %p180 = scmp.eq.s32.totalorder %s28, 0
      %p181 = por %p179, %p180
      %s183 = sadd.s32 %s182, 1
      %p186 = scmp.eq.s32.totalorder %s22, 1
      %p187 = scmp.ne.s32.totalorder %s182, %s184
      %p188 = scmp.eq.s32.totalorder %s22, 0
      %p189 = por %p187, %p188
      %p190 = scmp.ne.s32.totalorder %s182, %s184
      %p191 = scmp.eq.s32.totalorder %s27, 1
      %p192 = por %p190, %p191
      %p193 = scmp.ne.s32.totalorder %s184, %s185
      %p194 = scmp.eq.s32.totalorder %s27, 0
      %p195 = por %p193, %p194
      %p196 = scmp.ne.s32.totalorder %s184, %s185
      %p197 = scmp.eq.s32.totalorder %s28, 1
      %p198 = por %p196, %p197
      %p200 = scmp.ne.s32.totalorder %s185, %s199
      %p201 = scmp.eq.s32.totalorder %s28, 0
      %p202 = por %p200, %p201
      %s204 = sadd.s32 %s203, 1
      %p207 = scmp.eq.s32.totalorder %s22, 1
      %p208 = scmp.ne.s32.totalorder %s203, %s205
      %p209 = scmp.eq.s32.totalorder %s22, 0
      %p210 = por %p208, %p209
      %p211 = scmp.ne.s32.totalorder %s203, %s205
      %p212 = scmp.eq.s32.totalorder %s27, 1
      %p213 = por %p211, %p212
      %p214 = scmp.ne.s32.totalorder %s205, %s206
      %p215 = scmp.eq.s32.totalorder %s27, 0
      %p216 = por %p214, %p215
      %p217 = scmp.ne.s32.totalorder %s205, %s206
      %p218 = scmp.eq.s32.totalorder %s28, 1
      %p219 = por %p217, %p218
      %p221 = scmp.ne.s32.totalorder %s206, %s220
      %p222 = scmp.eq.s32.totalorder %s28, 0
      %p223 = por %p221, %p222
      %s225 = sadd.s32 %s224, 1
      %p228 = scmp.eq.s32.totalorder %s22, 1
      %p229 = scmp.ne.s32.totalorder %s224, %s226
      %p230 = scmp.eq.s32.totalorder %s22, 0
      %p231 = por %p229, %p230
      %p232 = scmp.ne.s32.totalorder %s224, %s226
      %p233 = scmp.eq.s32.totalorder %s27, 1
      %p234 = por %p232, %p233
      %p235 = scmp.ne.s32.totalorder %s226, %s227
      %p236 = scmp.eq.s32.totalorder %s27, 0
      %p237 = por %p235, %p236
      %p238 = scmp.ne.s32.totalorder %s226, %s227
      %p239 = scmp.eq.s32.totalorder %s28, 1
      %p240 = por %p238, %p239
      %p242 = scmp.ne.s32.totalorder %s227, %s241
      %p243 = scmp.eq.s32.totalorder %s28, 0
      %p244 = por %p242, %p243
      %s246 = sadd.s32 %s245, 1
      %p249 = scmp.eq.s32.totalorder %s22, 1
      %p250 = scmp.ne.s32.totalorder %s245, %s247
      %p251 = scmp.eq.s32.totalorder %s22, 0
      %p252 = por %p250, %p251
      %p253 = scmp.ne.s32.totalorder %s245, %s247
      %p254 = scmp.eq.s32.totalorder %s27, 1
      %p255 = por %p253, %p254
      %p256 = scmp.ne.s32.totalorder %s247, %s248
      %p257 = scmp.eq.s32.totalorder %s27, 0
      %p258 = por %p256, %p257
      %p259 = scmp.ne.s32.totalorder %s247, %s248
      %p260 = scmp.eq.s32.totalorder %s28, 1
      %p261 = por %p259, %p260
      %p263 = scmp.ne.s32.totalorder %s248, %s262
      %p264 = scmp.eq.s32.totalorder %s28, 0
      %p265 = por %p263, %p264
      %s266 = ssub.s32 %s22, %s29
      %p267 = scmp.eq.s32.totalorder %s266, 0
      %s269 = sadd.s32 %s268, 1
      %s270 = scalar_select %p267, %s268, %s269
      %p273 = pneg %p267
      %p274 = scmp.eq.s32.totalorder %s22, 1
      %p275 = por %p273, %p274
      %p276 = scmp.ne.s32.totalorder %s268, %s271
      %p277 = scmp.eq.s32.totalorder %s22, 0
      %p278 = por %p276, %p277
      %p279 = scmp.ne.s32.totalorder %s268, %s271
      %p280 = scmp.eq.s32.totalorder %s27, 1
      %p281 = por %p279, %p280
      %p282 = scmp.ne.s32.totalorder %s271, %s272
      %p283 = scmp.eq.s32.totalorder %s27, 0
      %p284 = por %p282, %p283
      %p285 = scmp.ne.s32.totalorder %s271, %s272
      %p286 = scmp.eq.s32.totalorder %s28, 1
      %p287 = por %p285, %p286
      %p289 = scmp.ne.s32.totalorder %s272, %s288
      %p290 = scmp.eq.s32.totalorder %s28, 0
      %p291 = por %p289, %p290
      %p292 = scmp.le.s32.totalorder 1, %s22
      %p293 = scmp.lt.s32.totalorder %s22, 3
      %p294 = pnand %p292, %p293
      %p295 = pneg %p294
      // Predicated region
      $region9: #{tpu_custom_call.1} parent=5 // pred_check
        _
      $region10: #{tpu_custom_call.1} parent=5 // pred_check_branch
        %297 = sbr.rel (%p294) target = $region12
      $region11: #{tpu_custom_call.1} parent=5 // pred_region
        %s298 = ssub.s32 %s22, 1
        // Predicated region
        $region13: #{tpu_custom_call.1} parent=11 // pred_check
          %p299 = pneg %p69
        $region14: #{tpu_custom_call.1} parent=11 // pred_check_branch
          %301 = sbr.rel (%p299) target = $region16
        $region15: #{tpu_custom_call.1} parent=11 // pred_region
          _
        $region16: #{tpu_custom_call.1} parent=11 // pred_fallthru
          _
        // Predicated region
        $region17: #{tpu_custom_call.1} parent=11 // pred_check
          %p302 = pneg %p90
        $region18: #{tpu_custom_call.1} parent=11 // pred_check_branch
          %304 = sbr.rel (%p302) target = $region20
        $region19: #{tpu_custom_call.1} parent=11 // pred_region
          _
        $region20: #{tpu_custom_call.1} parent=11 // pred_fallthru
          _
        // Predicated region
        $region21: #{tpu_custom_call.1} parent=11 // pred_check
          %p305 = pneg %p111
        $region22: #{tpu_custom_call.1} parent=11 // pred_check_branch
          %307 = sbr.rel (%p305) target = $region24
        $region23: #{tpu_custom_call.1} parent=11 // pred_region
          %s309 = ssub.s32 1024, 1024
          %310 = vsyncadd [#allocation4], %s309
          %s311 = sshll.u32 [#allocation3], 4
          %s312 = int_to_ptr.vmem [resolvable:$true] %s311
          %317 = dma.hbm_to_vmem [thread:$0]  %s3, 1024, %s312, [#allocation4], 128, 128, 8
        $region24: #{tpu_custom_call.1} parent=11 // pred_fallthru
          _
        // Predicated region
        $region25: #{tpu_custom_call.1} parent=11 // pred_check
          %p318 = pneg %p132
        $region26: #{tpu_custom_call.1} parent=11 // pred_check_branch
          %320 = sbr.rel (%p318) target = $region28
        $region27: #{tpu_custom_call.1} parent=11 // pred_region
          _
        $region28: #{tpu_custom_call.1} parent=11 // pred_fallthru
          _
        // Predicated region
        $region29: #{tpu_custom_call.1} parent=11 // pred_check
          %p321 = pneg %p153
        $region30: #{tpu_custom_call.1} parent=11 // pred_check_branch
          %323 = sbr.rel (%p321) target = $region32
        $region31: #{tpu_custom_call.1} parent=11 // pred_region
          %s325 = ssub.s32 1024, 1024
          %326 = vsyncadd [#allocation7], %s325
          %s327 = sshll.u32 [#allocation6], 4
          %s328 = int_to_ptr.vmem [resolvable:$true] %s327
          %333 = dma.hbm_to_vmem [thread:$0]  %s5, 1024, %s328, [#allocation7], 128, 128, 8
        $region32: #{tpu_custom_call.1} parent=11 // pred_fallthru
          _
        // Predicated region
        $region33: #{tpu_custom_call.1} parent=11 // pred_check
          %p334 = pneg %p174
        $region34: #{tpu_custom_call.1} parent=11 // pred_check_branch
          %336 = sbr.rel (%p334) target = $region36
        $region35: #{tpu_custom_call.1} parent=11 // pred_region
          _
        $region36: #{tpu_custom_call.1} parent=11 // pred_fallthru
          _
        // Predicated region
        $region37: #{tpu_custom_call.1} parent=11 // pred_check
          %p337 = pneg %p195
        $region38: #{tpu_custom_call.1} parent=11 // pred_check_branch
          %339 = sbr.rel (%p337) target = $region40
        $region39: #{tpu_custom_call.1} parent=11 // pred_region
          _
        $region40: #{tpu_custom_call.1} parent=11 // pred_fallthru
          _
        // Predicated region
        $region41: #{tpu_custom_call.1} parent=11 // pred_check
          %p340 = pneg %p216
        $region42: #{tpu_custom_call.1} parent=11 // pred_check_branch
          %342 = sbr.rel (%p340) target = $region44
        $region43: #{tpu_custom_call.1} parent=11 // pred_region
          _
        $region44: #{tpu_custom_call.1} parent=11 // pred_fallthru
          _
        // Predicated region
        $region45: #{tpu_custom_call.1} parent=11 // pred_check
          %p343 = pneg %p237
        $region46: #{tpu_custom_call.1} parent=11 // pred_check_branch
          %345 = sbr.rel (%p343) target = $region48
        $region47: #{tpu_custom_call.1} parent=11 // pred_region
          _
        $region48: #{tpu_custom_call.1} parent=11 // pred_fallthru
          _
        // Predicated region
        $region49: #{tpu_custom_call.1} parent=11 // pred_check
          %p346 = pneg %p258
        $region50: #{tpu_custom_call.1} parent=11 // pred_check_branch
          %348 = sbr.rel (%p346) target = $region52
        $region51: #{tpu_custom_call.1} parent=11 // pred_region
          _
        $region52: #{tpu_custom_call.1} parent=11 // pred_fallthru
          _
      $region12: #{tpu_custom_call.1} parent=5 // pred_fallthru
        _
      %p349 = scmp.lt.s32.totalorder %s22, 2
      // Predicated region
      $region53: #{tpu_custom_call.1} parent=5 // pred_check
        %p350 = pneg %p349
      $region54: #{tpu_custom_call.1} parent=5 // pred_check_branch
        %352 = sbr.rel (%p350) target = $region56
      $region55: #{tpu_custom_call.1} parent=5 // pred_region
        // Predicated region
        $region57: #{tpu_custom_call.1} parent=55 // pred_check
          %p353 = pneg %p42
        $region58: #{tpu_custom_call.1} parent=55 // pred_check_branch
          %355 = sbr.rel (%p353) target = $region60
        $region59: #{tpu_custom_call.1} parent=55 // pred_region
          %s356 = sand.u32 %s32, 1
          %s357 = sand.u32 %s32, 1
          %s358 = smul.addr %s357, 64
          %s359 = scalar_lea.vmem [#allocation2], %s358
          %s360 = smul.addr %s22, 8
          %s361 = scalar_lea.vmem %s0, %s360
          // Predicated region
          $region61: #{tpu_custom_call.1} parent=59 // pred_check
            _
          $region62: #{tpu_custom_call.1} parent=59 // pred_check_branch
            %363 = sbr.rel (0) target = $region64
          $region63: #{tpu_custom_call.1} parent=59 // pred_region
            // Predicated region
            $region65: #{tpu_custom_call.1} parent=63 // pred_check
              _
            $region66: #{tpu_custom_call.1} parent=63 // pred_check_branch
              %365 = sbr.rel (0) target = $region68
            $region67: #{tpu_custom_call.1} parent=63 // pred_region
              // Predicated region
              $region80: #{tpu_custom_call.1} parent=67 // pred_check
                _
              $region81: #{tpu_custom_call.1} parent=67 // pred_check_branch
                %394 = sbr.rel (0) target = $region83
              $region82: #{tpu_custom_call.1} parent=67 // pred_region
                loop: start=0, step=1, limit=1
                $region84: #{tpu_custom_call.1} parent=82 // loop_pre_header
                  _
                $region85: #{tpu_custom_call.1} parent=82 // loop_header
                  %s396 = sphi 0, %s400
                  %p397 = scmp.ge.s32.totalorder %s396, 1
                  %s401 = sphi %s361, %s361
                  %s402 = sphi %s359, %s359
                $region86: #{tpu_custom_call.1} parent=82 // loop_header_branch
                  %399 = sbr.rel (%p397) target = $region90
                $region87: #{tpu_custom_call.1} parent=82 // loop_body
                  %v403 = vld [vmem:[%s401] sm:$0xff]
                  %404 = vst [vmem:[%s402] sm:$0xff] %v403
                  %v405 = vld [vmem:[%s401 + $0x10] sm:$0xff]
                  %406 = vst [vmem:[%s402 + $0x8] sm:$0xff] %v405
                  %v407 = vld [vmem:[%s401 + $0x20] sm:$0xff]
                  %408 = vst [vmem:[%s402 + $0x10] sm:$0xff] %v407
                  %v409 = vld [vmem:[%s401 + $0x30] sm:$0xff]
                  %410 = vst [vmem:[%s402 + $0x18] sm:$0xff] %v409
                  %v411 = vld [vmem:[%s401 + $0x40] sm:$0xff]
                  %412 = vst [vmem:[%s402 + $0x20] sm:$0xff] %v411
                  %v413 = vld [vmem:[%s401 + $0x50] sm:$0xff]
                  %414 = vst [vmem:[%s402 + $0x28] sm:$0xff] %v413
                  %v415 = vld [vmem:[%s401 + $0x60] sm:$0xff]
                  %416 = vst [vmem:[%s402 + $0x30] sm:$0xff] %v415
                  %v417 = vld [vmem:[%s401 + $0x70] sm:$0xff]
                  %418 = vst [vmem:[%s402 + $0x38] sm:$0xff] %v417
                $region88: #{tpu_custom_call.1} parent=82 // loop_footer
                  %s400 = sadd.s32 1, %s396
                $region89: #{tpu_custom_call.1} parent=82 // loop_footer_branch
                  %395 = sbr.rel target = $region85
                $region90: #{tpu_custom_call.1} parent=82 // loop_exit
                  _
              $region83: #{tpu_custom_call.1} parent=67 // pred_fallthru
                _
              // Predicated region
              $region91: #{tpu_custom_call.1} parent=67 // pred_check
                _
              $region92: #{tpu_custom_call.1} parent=67 // pred_check_branch
                %420 = sbr.rel target = $region94
              $region93: #{tpu_custom_call.1} parent=67 // pred_region
                _
              $region94: #{tpu_custom_call.1} parent=67 // pred_fallthru
                _
            $region68: #{tpu_custom_call.1} parent=63 // pred_fallthru
              _
            // Predicated region
            $region69: #{tpu_custom_call.1} parent=63 // pred_check
              _
            $region70: #{tpu_custom_call.1} parent=63 // pred_check_branch
              %367 = sbr.rel target = $region72
            $region71: #{tpu_custom_call.1} parent=63 // pred_region
              loop: start=0, step=1, limit=1
              $region73: #{tpu_custom_call.1} parent=71 // loop_pre_header
                _
              $region74: #{tpu_custom_call.1} parent=71 // loop_header
                %s370 = sphi 0, %s374
                %p371 = scmp.ge.s32.totalorder %s370, 1
                %s375 = sphi %s361, %s361
                %s376 = sphi %s359, %s359
              $region75: #{tpu_custom_call.1} parent=71 // loop_header_branch
                %373 = sbr.rel (%p371) target = $region79
              $region76: #{tpu_custom_call.1} parent=71 // loop_body
                %v377 = vld [vmem:[%s375] sm:$0xff]
                %378 = vst [vmem:[%s376] sm:$0xff] %v377
                %v379 = vld [vmem:[%s375 + $0x10] sm:$0xff]
                %380 = vst [vmem:[%s376 + $0x8] sm:$0xff] %v379
                %v381 = vld [vmem:[%s375 + $0x20] sm:$0xff]
                %382 = vst [vmem:[%s376 + $0x10] sm:$0xff] %v381
                %v383 = vld [vmem:[%s375 + $0x30] sm:$0xff]
                %384 = vst [vmem:[%s376 + $0x18] sm:$0xff] %v383
                %v385 = vld [vmem:[%s375 + $0x40] sm:$0xff]
                %386 = vst [vmem:[%s376 + $0x20] sm:$0xff] %v385
                %v387 = vld [vmem:[%s375 + $0x50] sm:$0xff]
                %388 = vst [vmem:[%s376 + $0x28] sm:$0xff] %v387
                %v389 = vld [vmem:[%s375 + $0x60] sm:$0xff]
                %390 = vst [vmem:[%s376 + $0x30] sm:$0xff] %v389
                %v391 = vld [vmem:[%s375 + $0x70] sm:$0xff]
                %392 = vst [vmem:[%s376 + $0x38] sm:$0xff] %v391
              $region77: #{tpu_custom_call.1} parent=71 // loop_footer
                %s374 = sadd.s32 1, %s370
              $region78: #{tpu_custom_call.1} parent=71 // loop_footer_branch
                %369 = sbr.rel target = $region74
              $region79: #{tpu_custom_call.1} parent=71 // loop_exit
                _
            $region72: #{tpu_custom_call.1} parent=63 // pred_fallthru
              _
          $region64: #{tpu_custom_call.1} parent=59 // pred_fallthru
            _
          %421 = vnop
        $region60: #{tpu_custom_call.1} parent=55 // pred_fallthru
          _
      $region56: #{tpu_custom_call.1} parent=5 // pred_fallthru
        _
      %p422 = scmp.le.s32.totalorder 1, %s22
      %p423 = scmp.lt.s32.totalorder %s22, 3
      %p424 = pnand %p422, %p423
      %p425 = pneg %p424
      // Predicated region
      $region95: #{tpu_custom_call.1} parent=5 // pred_check
        _
      $region96: #{tpu_custom_call.1} parent=5 // pred_check_branch
        %427 = sbr.rel (%p424) target = $region98
      $region97: #{tpu_custom_call.1} parent=5 // pred_region
        %s428 = ssub.s32 %s22, 1
        %s429 = sand.u32 %s35, 1
        %s430 = sand.u32 %s35, 1
        %s431 = smul.addr %s430, 64
        %s432 = scalar_lea.vmem [#allocation2], %s431
        // Predicated region
        $region99: #{tpu_custom_call.1} parent=97 // pred_check
          %p433 = pneg %p48
        $region100: #{tpu_custom_call.1} parent=97 // pred_check_branch
          %435 = sbr.rel (%p433) target = $region102
        $region101: #{tpu_custom_call.1} parent=97 // pred_region
          _
        $region102: #{tpu_custom_call.1} parent=97 // pred_fallthru
          _
        // Predicated region
        $region103: #{tpu_custom_call.1} parent=97 // pred_check
          %p436 = pneg %p111
        $region104: #{tpu_custom_call.1} parent=97 // pred_check_branch
          %438 = sbr.rel (%p436) target = $region106
        $region105: #{tpu_custom_call.1} parent=97 // pred_region
          %439 = dma.done [#allocation4], 1024
        $region106: #{tpu_custom_call.1} parent=97 // pred_fallthru
          _
        // Predicated region
        $region107: #{tpu_custom_call.1} parent=97 // pred_check
          %p440 = pneg %p153
        $region108: #{tpu_custom_call.1} parent=97 // pred_check_branch
          %442 = sbr.rel (%p440) target = $region110
        $region109: #{tpu_custom_call.1} parent=97 // pred_region
          %443 = dma.done [#allocation7], 1024
        $region110: #{tpu_custom_call.1} parent=97 // pred_fallthru
          _
        %s444 = sand.u32 %s35, 1
        %s445 = sand.u32 %s35, 1
        %s446 = smul.addr %s445, 64
        %s447 = scalar_lea.vmem [#allocation2], %s446
        %p448 = pneg %p48
        %p449 = pneg %p45
        %p450 = pneg %p69
        %p451 = pneg %p66
        %p452 = pneg %p90
        %p453 = pneg %p87
        %p454 = pneg %p111
        %p455 = pneg %p108
        %p456 = pneg %p132
        %p457 = pneg %p129
        %p458 = pneg %p153
        %p459 = pneg %p150
        %p460 = pneg %p174
        %p461 = pneg %p171
        %p462 = pneg %p195
        %p463 = pneg %p192
        %p464 = pneg %p216
        %p465 = pneg %p213
        %p466 = pneg %p237
        %p467 = pneg %p234
        %p468 = pneg %p258
        %p469 = pneg %p255
        %p470 = pneg %p284
        %p471 = pneg %p281
        %s472 = sand.u32 %s271, 1
        %s473 = scalar_lea.sflag [#allocation5], %s472
        %s474 = sand.u32 %s271, 1
        %s475 = smul.addr %s474, 64
        %s476 = scalar_lea.vmem [#allocation8], %s475
        %v477 = vld [vmem:[%s432] sm:$0xff]
        %v478 = vld [vmem:[%s432 + $0x8] sm:$0xff]
        %v479 = vld [vmem:[%s432 + $0x10] sm:$0xff]
        %v480 = vld [vmem:[%s432 + $0x18] sm:$0xff]
        %v481 = vld [vmem:[%s432 + $0x20] sm:$0xff]
        %v482 = vld [vmem:[%s432 + $0x28] sm:$0xff]
        %v483 = vld [vmem:[%s432 + $0x30] sm:$0xff]
        %v484 = vld [vmem:[%s432 + $0x38] sm:$0xff]
        %v485 = vlaneseq
        %v486 = vshrl.u32 %v485, 7
        %v487 = vadd.s32 %v486, 8
        %v488 = vadd.s32 %v486, 16
        %v489 = vadd.s32 %v486, 24
        %v490 = vadd.s32 %v486, 32
        %v491 = vadd.s32 %v486, 40
        %v492 = vadd.s32 %v486, 48
        %v493 = vadd.s32 %v486, 56
        %v494 = vand.u32 %v486, 7
        %v495 = vand.u32 %v487, 7
        %v496 = vand.u32 %v488, 7
        %v497 = vand.u32 %v489, 7
        %v498 = vand.u32 %v490, 7
        %v499 = vand.u32 %v491, 7
        %v500 = vand.u32 %v492, 7
        %v501 = vand.u32 %v493, 7
        %v502 = vlaneseq
        %v503 = vand.u32 %v502, 127
        %v504 = vand.u32 %v503, 7
        %vm505 = vcmp.eq.s32.totalorder %v494, %v504
        %vm506 = vcmp.eq.s32.totalorder %v495, %v504
        %vm507 = vcmp.eq.s32.totalorder %v496, %v504
        %vm508 = vcmp.eq.s32.totalorder %v497, %v504
        %vm509 = vcmp.eq.s32.totalorder %v498, %v504
        %vm510 = vcmp.eq.s32.totalorder %v499, %v504
        %vm511 = vcmp.eq.s32.totalorder %v500, %v504
        %vm512 = vcmp.eq.s32.totalorder %v501, %v504
        %v513 = vsel %vm505, 0.0, -1e+30
        %v514 = vsel %vm506, 0.0, -1e+30
        %v515 = vsel %vm507, 0.0, -1e+30
        %v516 = vsel %vm508, 0.0, -1e+30
        %v517 = vsel %vm509, 0.0, -1e+30
        %v518 = vsel %vm510, 0.0, -1e+30
        %v519 = vsel %vm511, 0.0, -1e+30
        %v520 = vsel %vm512, 0.0, -1e+30
        %v521 = vld [vmem:[%s1] sm:$0xff]
        %v522 = vld [vmem:[%s1 + $0x8] sm:$0xff]
        %v523 = vld [vmem:[%s1 + $0x10] sm:$0xff]
        %v524 = vld [vmem:[%s1 + $0x18] sm:$0xff]
        %v525 = vld [vmem:[%s2] sm:$0x1]
        %v526 = vlaneseq
        %v527 = vshrl.u32 %v526, 7
        %v528 = vsub.s32 0, %v527
        %v529 = vrot.slane %v525, %v528
        %vm530 = vcmask 261120
        %v532 = vsel %vm530, %v477, 0
        %v535 = vsel %vm530, %v478, 0
        %v538 = vsel %vm530, %v479, 0
        %v541 = vsel %vm530, %v480, 0
        %v544 = vsel %vm530, %v481, 0
        %v547 = vsel %vm530, %v482, 0
        %v550 = vsel %vm530, %v483, 0
        %v553 = vsel %vm530, %v484, 0
        %555 = vmatprep.subr.mxu0 0.0
        %556 = vmatpush1.msra.mxu0 %v521
        %557 = vmatprep.subr.mxu0 0.0
        %558 = vmatpush1.msra.mxu0 %v522
        %559 = vmatprep.subr.mxu0 0.0
        %560 = vmatpush1.msra.mxu0 %v523
        %561 = vmatprep.subr.mxu0 0.0
        %562 = vmatpush1.msra.mxu0 %v524
        %563 = vmatprep.subr.mxu0 0.0
        %564 = vmatpush1.msra.mxu0 0.0
        %565 = vmatprep.subr.mxu0 0.0
        %566 = vmatpush1.msra.mxu0 0.0
        %567 = vmatprep.subr.mxu0 0.0
        %568 = vmatpush1.msra.mxu0 0.0
        %569 = vmatprep.subr.mxu0 0.0
        %570 = vmatpush1.msra.mxu0 0.0
        %571 = vmatprep.subr.mxu0 0.0
        %572 = vmatpush1.msra.mxu0 0.0
        %573 = vmatprep.subr.mxu0 0.0
        %574 = vmatpush1.msra.mxu0 0.0
        %575 = vmatprep.subr.mxu0 0.0
        %576 = vmatpush1.msra.mxu0 0.0
        %577 = vmatprep.subr.mxu0 0.0
        %578 = vmatpush1.msra.mxu0 0.0
        %579 = vmatprep.subr.mxu0 0.0
        %580 = vmatpush1.msra.mxu0 0.0
        %581 = vmatprep.subr.mxu0 0.0
        %582 = vmatpush1.msra.mxu0 0.0
        %583 = vmatprep.subr.mxu0 0.0
        %584 = vmatpush1.msra.mxu0 0.0
        %585 = vmatprep.subr.mxu0 0.0
        %586 = vmatpush1.msra.mxu0 0.0
        %587 = vmatprep.subr.mxu0 0.0
        %588 = vmatpush1.msra.mxu0 0.0
        %589 = vmatprep.subr.mxu0 0.0
        %590 = vmatpush1.msra.mxu0 0.0
        %591 = vmatprep.subr.mxu0 0.0
        %592 = vmatpush1.msra.mxu0 0.0
        %593 = vmatprep.subr.mxu0 0.0
        %594 = vmatpush1.msra.mxu0 0.0
        %595 = vmatprep.subr.mxu0 0.0
        %596 = vmatpush1.msra.mxu0 0.0
        %597 = vmatprep.subr.mxu0 0.0
        %598 = vmatpush1.msra.mxu0 0.0
        %599 = vmatprep.subr.mxu0 0.0
        %600 = vmatpush1.msra.mxu0 0.0
        %601 = vmatprep.subr.mxu0 0.0
        %602 = vmatpush1.msra.mxu0 0.0
        %603 = vmatprep.subr.mxu0 0.0
        %604 = vmatpush1.msra.mxu0 0.0
        %605 = vmatprep.subr.mxu0 0.0
        %606 = vmatpush1.msra.mxu0 0.0
        %607 = vmatprep.subr.mxu0 0.0
        %608 = vmatpush1.msra.mxu0 0.0
        %609 = vmatprep.subr.mxu0 0.0
        %610 = vmatpush1.msra.mxu0 0.0
        %611 = vmatprep.subr.mxu0 0.0
        %612 = vmatpush1.msra.mxu0 0.0
        %613 = vmatprep.subr.mxu0 0.0
        %614 = vmatpush1.msra.mxu0 0.0
        %615 = vmatprep.subr.mxu0 0.0
        %616 = vmatpush1.msra.mxu0 0.0
        %617 = vmatprep.subr.mxu0 0.0
        %618 = vmatpush1.msra.mxu0 0.0
        %619 = vmatprep.mubr.f32.mxu0 0.0
        %620 = vmatmul.mubr.f32.gmra.mrb[0].mxu0 %v532
        %v621 = vpop.f32.mrb[0].mxu0
        %v622 = vadd.f32 %v529, %v621
        %v623 = vpop.f32.mrb[0].mxu0
        %624 = vmatprep.mubr.f32.mxu0 0.0
        %625 = vmatmul.mubr.f32.gmra.mrb[0].mxu0 %v535
        %v626 = vpop.f32.mrb[0].mxu0
        %v627 = vadd.f32 %v529, %v626
        %v628 = vpop.f32.mrb[0].mxu0
        %629 = vmatprep.mubr.f32.mxu0 0.0
        %630 = vmatmul.mubr.f32.gmra.mrb[0].mxu0 %v538
        %v631 = vpop.f32.mrb[0].mxu0
        %v632 = vadd.f32 %v529, %v631
        %v633 = vpop.f32.mrb[0].mxu0
        %634 = vmatprep.mubr.f32.mxu0 0.0
        %635 = vmatmul.mubr.f32.gmra.mrb[0].mxu0 %v541
        %v636 = vpop.f32.mrb[0].mxu0
        %v637 = vadd.f32 %v529, %v636
        %v638 = vpop.f32.mrb[0].mxu0
        %639 = vmatprep.mubr.f32.mxu0 0.0
        %640 = vmatmul.mubr.f32.gmra.mrb[0].mxu0 %v544
        %v641 = vpop.f32.mrb[0].mxu0
        %v642 = vadd.f32 %v529, %v641
        %v643 = vpop.f32.mrb[0].mxu0
        %644 = vmatprep.mubr.f32.mxu0 0.0
        %645 = vmatmul.mubr.f32.gmra.mrb[0].mxu0 %v547
        %v646 = vpop.f32.mrb[0].mxu0
        %v647 = vadd.f32 %v529, %v646
        %v648 = vpop.f32.mrb[0].mxu0
        %649 = vmatprep.mubr.f32.mxu0 0.0
        %650 = vmatmul.mubr.f32.gmra.mrb[0].mxu0 %v550
        %v651 = vpop.f32.mrb[0].mxu0
        %v652 = vadd.f32 %v529, %v651
        %v653 = vpop.f32.mrb[0].mxu0
        %654 = vmatprep.mubr.f32.mxu0 0.0
        %655 = vmatmul.mubr.f32.gmra.mrb[0].mxu0 %v553
        %v656 = vpop.f32.mrb[0].mxu0
        %v657 = vadd.f32 %v529, %v656
        %v658 = vpop.f32.mrb[0].mxu0
        %659 = vdwg.mxu0
        %668 = vrot.lane.b32.xlu0 %v622, 120
        %v669 = vpop.permute.xlu0 %668
        %670 = vrot.lane.b32.xlu0 %v627, 120
        %v671 = vpop.permute.xlu0 %670
        %672 = vrot.lane.b32.xlu0 %v632, 120
        %v673 = vpop.permute.xlu0 %672
        %674 = vrot.lane.b32.xlu0 %v637, 120
        %v675 = vpop.permute.xlu0 %674
        %676 = vrot.lane.b32.xlu0 %v642, 120
        %v677 = vpop.permute.xlu0 %676
        %678 = vrot.lane.b32.xlu0 %v647, 120
        %v679 = vpop.permute.xlu0 %678
        %680 = vrot.lane.b32.xlu0 %v652, 120
        %v681 = vpop.permute.xlu0 %680
        %682 = vrot.lane.b32.xlu0 %v657, 120
        %v683 = vpop.permute.xlu0 %682
        %684 = vrot.lane.b32.xlu0 %v622, 112
        %v685 = vpop.permute.xlu0 %684
        %686 = vrot.lane.b32.xlu0 %v627, 112
        %v687 = vpop.permute.xlu0 %686
        %688 = vrot.lane.b32.xlu0 %v632, 112
        %v689 = vpop.permute.xlu0 %688
        %690 = vrot.lane.b32.xlu0 %v637, 112
        %v691 = vpop.permute.xlu0 %690
        %692 = vrot.lane.b32.xlu0 %v642, 112
        %v693 = vpop.permute.xlu0 %692
        %694 = vrot.lane.b32.xlu0 %v647, 112
        %v695 = vpop.permute.xlu0 %694
        %696 = vrot.lane.b32.xlu0 %v652, 112
        %v697 = vpop.permute.xlu0 %696
        %698 = vrot.lane.b32.xlu0 %v657, 112
        %v699 = vpop.permute.xlu0 %698
        %700 = vrot.lane.b32.xlu0 %v622, 104
        %v701 = vpop.permute.xlu0 %700
        %702 = vrot.lane.b32.xlu0 %v627, 104
        %v703 = vpop.permute.xlu0 %702
        %704 = vrot.lane.b32.xlu0 %v632, 104
        %v705 = vpop.permute.xlu0 %704
        %706 = vrot.lane.b32.xlu0 %v637, 104
        %v707 = vpop.permute.xlu0 %706
        %708 = vrot.lane.b32.xlu0 %v642, 104
        %v709 = vpop.permute.xlu0 %708
        %710 = vrot.lane.b32.xlu0 %v647, 104
        %v711 = vpop.permute.xlu0 %710
        %712 = vrot.lane.b32.xlu0 %v652, 104
        %v713 = vpop.permute.xlu0 %712
        %714 = vrot.lane.b32.xlu0 %v657, 104
        %v715 = vpop.permute.xlu0 %714
        %716 = vrot.lane.b32.xlu0 %v622, 96
        %v717 = vpop.permute.xlu0 %716
        %718 = vrot.lane.b32.xlu0 %v627, 96
        %v719 = vpop.permute.xlu0 %718
        %720 = vrot.lane.b32.xlu0 %v632, 96
        %v721 = vpop.permute.xlu0 %720
        %722 = vrot.lane.b32.xlu0 %v637, 96
        %v723 = vpop.permute.xlu0 %722
        %724 = vrot.lane.b32.xlu0 %v642, 96
        %v725 = vpop.permute.xlu0 %724
        %726 = vrot.lane.b32.xlu0 %v647, 96
        %v727 = vpop.permute.xlu0 %726
        %728 = vrot.lane.b32.xlu0 %v652, 96
        %v729 = vpop.permute.xlu0 %728
        %730 = vrot.lane.b32.xlu0 %v657, 96
        %v731 = vpop.permute.xlu0 %730
        %vm732 = vcmask 64512
        %v733 = vsel %vm732, %v622, 0
        %v735 = vsel %vm732, %v627, 0
        %v737 = vsel %vm732, %v632, 0
        %v739 = vsel %vm732, %v637, 0
        %v741 = vsel %vm732, %v642, 0
        %v743 = vsel %vm732, %v647, 0
        %v745 = vsel %vm732, %v652, 0
        %v747 = vsel %vm732, %v657, 0
        %v749 = vsel %vm732, %v717, 0
        %v751 = vsel %vm732, %v719, 0
        %v753 = vsel %vm732, %v721, 0
        %v755 = vsel %vm732, %v723, 0
        %v757 = vsel %vm732, %v725, 0
        %v759 = vsel %vm732, %v727, 0
        %v761 = vsel %vm732, %v729, 0
        %v763 = vsel %vm732, %v731, 0
        %765 = vmatprep.subr.mxu0 0.0
        %766 = vmatpush1.xpose.msra.mxu0 %v749
        %767 = vmatprep.subr.mxu0 0.0
        %768 = vmatpush1.xpose.msra.mxu0 %v751
        %769 = vmatprep.subr.mxu0 0.0
        %770 = vmatpush1.xpose.msra.mxu0 %v753
        %771 = vmatprep.subr.mxu0 0.0
        %772 = vmatpush1.xpose.msra.mxu0 %v755
        %773 = vmatprep.subr.mxu0 0.0
        %774 = vmatpush1.xpose.msra.mxu0 %v757
        %775 = vmatprep.subr.mxu0 0.0
        %776 = vmatpush1.xpose.msra.mxu0 %v759
        %777 = vmatprep.subr.mxu0 0.0
        %778 = vmatpush1.xpose.msra.mxu0 %v761
        %779 = vmatprep.subr.mxu0 0.0
        %780 = vmatpush1.xpose.msra.mxu0 %v763
        %781 = vmatprep.subr.mxu0 0.0
        %782 = vmatpush1.xpose.msra.mxu0 0.0
        %783 = vmatprep.subr.mxu0 0.0
        %784 = vmatpush1.xpose.msra.mxu0 0.0
        %785 = vmatprep.subr.mxu0 0.0
        %786 = vmatpush1.xpose.msra.mxu0 0.0
        %787 = vmatprep.subr.mxu0 0.0
        %788 = vmatpush1.xpose.msra.mxu0 0.0
        %789 = vmatprep.subr.mxu0 0.0
        %790 = vmatpush1.xpose.msra.mxu0 0.0
        %791 = vmatprep.subr.mxu0 0.0
        %792 = vmatpush1.xpose.msra.mxu0 0.0
        %793 = vmatprep.subr.mxu0 0.0
        %794 = vmatpush1.xpose.msra.mxu0 0.0
        %795 = vmatprep.subr.mxu0 0.0
        %796 = vmatpush1.xpose.msra.mxu0 0.0
        %797 = vmatprep.subr.mxu0 0.0
        %798 = vmatpush1.xpose.msra.mxu0 0.0
        %799 = vmatprep.subr.mxu0 0.0
        %800 = vmatpush1.xpose.msra.mxu0 0.0
        %801 = vmatprep.subr.mxu0 0.0
        %802 = vmatpush1.xpose.msra.mxu0 0.0
        %803 = vmatprep.subr.mxu0 0.0
        %804 = vmatpush1.xpose.msra.mxu0 0.0
        %805 = vmatprep.subr.mxu0 0.0
        %806 = vmatpush1.xpose.msra.mxu0 0.0
        %807 = vmatprep.subr.mxu0 0.0
        %808 = vmatpush1.xpose.msra.mxu0 0.0
        %809 = vmatprep.subr.mxu0 0.0
        %810 = vmatpush1.xpose.msra.mxu0 0.0
        %811 = vmatprep.subr.mxu0 0.0
        %812 = vmatpush1.xpose.msra.mxu0 0.0
        %813 = vmatprep.subr.mxu0 0.0
        %814 = vmatpush1.xpose.msra.mxu0 0.0
        %815 = vmatprep.subr.mxu0 0.0
        %816 = vmatpush1.xpose.msra.mxu0 0.0
        %817 = vmatprep.subr.mxu0 0.0
        %818 = vmatpush1.xpose.msra.mxu0 0.0
        %819 = vmatprep.subr.mxu0 0.0
        %820 = vmatpush1.xpose.msra.mxu0 0.0
        %821 = vmatprep.subr.mxu0 0.0
        %822 = vmatpush1.xpose.msra.mxu0 0.0
        %823 = vmatprep.subr.mxu0 0.0
        %824 = vmatpush1.xpose.msra.mxu0 0.0
        %825 = vmatprep.subr.mxu0 0.0
        %826 = vmatpush1.xpose.msra.mxu0 0.0
        %827 = vmatprep.subr.mxu0 0.0
        %828 = vmatpush1.xpose.msra.mxu0 0.0
        %829 = vmatprep.mubr.f32.mxu0 0.0
        %830 = vmatmul.mubr.f32.gmra.mrb[0].mxu0 %v733
        %v831 = vpop.f32.mrb[0].mxu0
        %v832 = vadd.f32 %v513, %v831
        %v833 = vpop.f32.mrb[0].mxu0
        %834 = vmatprep.mubr.f32.mxu0 0.0
        %835 = vmatmul.mubr.f32.gmra.mrb[0].mxu0 %v735
        %v836 = vpop.f32.mrb[0].mxu0
        %v837 = vadd.f32 %v514, %v836
        %v838 = vpop.f32.mrb[0].mxu0
        %839 = vmatprep.mubr.f32.mxu0 0.0
        %840 = vmatmul.mubr.f32.gmra.mrb[0].mxu0 %v737
        %v841 = vpop.f32.mrb[0].mxu0
        %v842 = vadd.f32 %v515, %v841
        %v843 = vpop.f32.mrb[0].mxu0
        %844 = vmatprep.mubr.f32.mxu0 0.0
        %845 = vmatmul.mubr.f32.gmra.mrb[0].mxu0 %v739
        %v846 = vpop.f32.mrb[0].mxu0
        %v847 = vadd.f32 %v516, %v846
        %v848 = vpop.f32.mrb[0].mxu0
        %849 = vmatprep.mubr.f32.mxu0 0.0
        %850 = vmatmul.mubr.f32.gmra.mrb[0].mxu0 %v741
        %v851 = vpop.f32.mrb[0].mxu0
        %v852 = vadd.f32 %v517, %v851
        %v853 = vpop.f32.mrb[0].mxu0
        %854 = vmatprep.mubr.f32.mxu0 0.0
        %855 = vmatmul.mubr.f32.gmra.mrb[0].mxu0 %v743
        %v856 = vpop.f32.mrb[0].mxu0
        %v857 = vadd.f32 %v518, %v856
        %v858 = vpop.f32.mrb[0].mxu0
        %859 = vmatprep.mubr.f32.mxu0 0.0
        %860 = vmatmul.mubr.f32.gmra.mrb[0].mxu0 %v745
        %v861 = vpop.f32.mrb[0].mxu0
        %v862 = vadd.f32 %v519, %v861
        %v863 = vpop.f32.mrb[0].mxu0
        %864 = vmatprep.mubr.f32.mxu0 0.0
        %865 = vmatmul.mubr.f32.gmra.mrb[0].mxu0 %v747
        %v866 = vpop.f32.mrb[0].mxu0
        %v867 = vadd.f32 %v520, %v866
        %v868 = vpop.f32.mrb[0].mxu0
        %869 = vdwg.mxu0
        %870 = vrot.lane.b32.xlu0 %v669, 96
        %v871 = vpop.permute.xlu0 %870
        %872 = vrot.lane.b32.xlu0 %v671, 96
        %v873 = vpop.permute.xlu0 %872
        %874 = vrot.lane.b32.xlu0 %v673, 96
        %v875 = vpop.permute.xlu0 %874
        %876 = vrot.lane.b32.xlu0 %v675, 96
        %v877 = vpop.permute.xlu0 %876
        %878 = vrot.lane.b32.xlu0 %v677, 96
        %v879 = vpop.permute.xlu0 %878
        %880 = vrot.lane.b32.xlu0 %v679, 96
        %v881 = vpop.permute.xlu0 %880
        %882 = vrot.lane.b32.xlu0 %v681, 96
        %v883 = vpop.permute.xlu0 %882
        %884 = vrot.lane.b32.xlu0 %v683, 96
        %v885 = vpop.permute.xlu0 %884
        %v886 = vsel %vm732, %v669, 0
        %v888 = vsel %vm732, %v671, 0
        %v890 = vsel %vm732, %v673, 0
        %v892 = vsel %vm732, %v675, 0
        %v894 = vsel %vm732, %v677, 0
        %v896 = vsel %vm732, %v679, 0
        %v898 = vsel %vm732, %v681, 0
        %v900 = vsel %vm732, %v683, 0
        %v902 = vsel %vm732, %v871, 0
        %v904 = vsel %vm732, %v873, 0
        %v906 = vsel %vm732, %v875, 0
        %v908 = vsel %vm732, %v877, 0
        %v910 = vsel %vm732, %v879, 0
        %v912 = vsel %vm732, %v881, 0
        %v914 = vsel %vm732, %v883, 0
        %v916 = vsel %vm732, %v885, 0
        %918 = vmatprep.subr.mxu0 0.0
        %919 = vmatpush1.xpose.msra.mxu0 %v902
        %920 = vmatprep.subr.mxu0 0.0
        %921 = vmatpush1.xpose.msra.mxu0 %v904
        %922 = vmatprep.subr.mxu0 0.0
        %923 = vmatpush1.xpose.msra.mxu0 %v906
        %924 = vmatprep.subr.mxu0 0.0
        %925 = vmatpush1.xpose.msra.mxu0 %v908
        %926 = vmatprep.subr.mxu0 0.0
        %927 = vmatpush1.xpose.msra.mxu0 %v910
        %928 = vmatprep.subr.mxu0 0.0
        %929 = vmatpush1.xpose.msra.mxu0 %v912
        %930 = vmatprep.subr.mxu0 0.0
        %931 = vmatpush1.xpose.msra.mxu0 %v914
        %932 = vmatprep.subr.mxu0 0.0
        %933 = vmatpush1.xpose.msra.mxu0 %v916
        %934 = vmatprep.subr.mxu0 0.0
        %935 = vmatpush1.xpose.msra.mxu0 0.0
        %936 = vmatprep.subr.mxu0 0.0
        %937 = vmatpush1.xpose.msra.mxu0 0.0
        %938 = vmatprep.subr.mxu0 0.0
        %939 = vmatpush1.xpose.msra.mxu0 0.0
        %940 = vmatprep.subr.mxu0 0.0
        %941 = vmatpush1.xpose.msra.mxu0 0.0
        %942 = vmatprep.subr.mxu0 0.0
        %943 = vmatpush1.xpose.msra.mxu0 0.0
        %944 = vmatprep.subr.mxu0 0.0
        %945 = vmatpush1.xpose.msra.mxu0 0.0
        %946 = vmatprep.subr.mxu0 0.0
        %947 = vmatpush1.xpose.msra.mxu0 0.0
        %948 = vmatprep.subr.mxu0 0.0
        %949 = vmatpush1.xpose.msra.mxu0 0.0
        %950 = vmatprep.subr.mxu0 0.0
        %951 = vmatpush1.xpose.msra.mxu0 0.0
        %952 = vmatprep.subr.mxu0 0.0
        %953 = vmatpush1.xpose.msra.mxu0 0.0
        %954 = vmatprep.subr.mxu0 0.0
        %955 = vmatpush1.xpose.msra.mxu0 0.0
        %956 = vmatprep.subr.mxu0 0.0
        %957 = vmatpush1.xpose.msra.mxu0 0.0
        %958 = vmatprep.subr.mxu0 0.0
        %959 = vmatpush1.xpose.msra.mxu0 0.0
        %960 = vmatprep.subr.mxu0 0.0
        %961 = vmatpush1.xpose.msra.mxu0 0.0
        %962 = vmatprep.subr.mxu0 0.0
        %963 = vmatpush1.xpose.msra.mxu0 0.0
        %964 = vmatprep.subr.mxu0 0.0
        %965 = vmatpush1.xpose.msra.mxu0 0.0
        %966 = vmatprep.subr.mxu0 0.0
        %967 = vmatpush1.xpose.msra.mxu0 0.0
        %968 = vmatprep.subr.mxu0 0.0
        %969 = vmatpush1.xpose.msra.mxu0 0.0
        %970 = vmatprep.subr.mxu0 0.0
        %971 = vmatpush1.xpose.msra.mxu0 0.0
        %972 = vmatprep.subr.mxu0 0.0
        %973 = vmatpush1.xpose.msra.mxu0 0.0
        %974 = vmatprep.subr.mxu0 0.0
        %975 = vmatpush1.xpose.msra.mxu0 0.0
        %976 = vmatprep.subr.mxu0 0.0
        %977 = vmatpush1.xpose.msra.mxu0 0.0
        %978 = vmatprep.subr.mxu0 0.0
        %979 = vmatpush1.xpose.msra.mxu0 0.0
        %980 = vmatprep.subr.mxu0 0.0
        %981 = vmatpush1.xpose.msra.mxu0 0.0
        %982 = vmatprep.mubr.f32.mxu0 0.0
        %983 = vmatmul.mubr.f32.gmra.mrb[0].mxu0 %v886
        %v984 = vpop.f32.mrb[0].mxu0
        %v985 = vadd.f32 %v513, %v984
        %v986 = vpop.f32.mrb[0].mxu0
        %987 = vmatprep.mubr.f32.mxu0 0.0
        %988 = vmatmul.mubr.f32.gmra.mrb[0].mxu0 %v888
        %v989 = vpop.f32.mrb[0].mxu0
        %v990 = vadd.f32 %v514, %v989
        %v991 = vpop.f32.mrb[0].mxu0
        %992 = vmatprep.mubr.f32.mxu0 0.0
        %993 = vmatmul.mubr.f32.gmra.mrb[0].mxu0 %v890
        %v994 = vpop.f32.mrb[0].mxu0
        %v995 = vadd.f32 %v515, %v994
        %v996 = vpop.f32.mrb[0].mxu0
        %997 = vmatprep.mubr.f32.mxu0 0.0
        %998 = vmatmul.mubr.f32.gmra.mrb[0].mxu0 %v892
        %v999 = vpop.f32.mrb[0].mxu0
        %v1000 = vadd.f32 %v516, %v999
        %v1001 = vpop.f32.mrb[0].mxu0
        %1002 = vmatprep.mubr.f32.mxu0 0.0
        %1003 = vmatmul.mubr.f32.gmra.mrb[0].mxu0 %v894
        %v1004 = vpop.f32.mrb[0].mxu0
        %v1005 = vadd.f32 %v517, %v1004
        %v1006 = vpop.f32.mrb[0].mxu0
        %1007 = vmatprep.mubr.f32.mxu0 0.0
        %1008 = vmatmul.mubr.f32.gmra.mrb[0].mxu0 %v896
        %v1009 = vpop.f32.mrb[0].mxu0
        %v1010 = vadd.f32 %v518, %v1009
        %v1011 = vpop.f32.mrb[0].mxu0
        %1012 = vmatprep.mubr.f32.mxu0 0.0
        %1013 = vmatmul.mubr.f32.gmra.mrb[0].mxu0 %v898
        %v1014 = vpop.f32.mrb[0].mxu0
        %v1015 = vadd.f32 %v519, %v1014
        %v1016 = vpop.f32.mrb[0].mxu0
        %1017 = vmatprep.mubr.f32.mxu0 0.0
        %1018 = vmatmul.mubr.f32.gmra.mrb[0].mxu0 %v900
        %v1019 = vpop.f32.mrb[0].mxu0
        %v1020 = vadd.f32 %v520, %v1019
        %v1021 = vpop.f32.mrb[0].mxu0
        %1022 = vdwg.mxu0
        %1023 = vrot.lane.b32.xlu0 %v685, 96
        %v1024 = vpop.permute.xlu0 %1023
        %1025 = vrot.lane.b32.xlu0 %v687, 96
        %v1026 = vpop.permute.xlu0 %1025
        %1027 = vrot.lane.b32.xlu0 %v689, 96
        %v1028 = vpop.permute.xlu0 %1027
        %1029 = vrot.lane.b32.xlu0 %v691, 96
        %v1030 = vpop.permute.xlu0 %1029
        %1031 = vrot.lane.b32.xlu0 %v693, 96
        %v1032 = vpop.permute.xlu0 %1031
        %1033 = vrot.lane.b32.xlu0 %v695, 96
        %v1034 = vpop.permute.xlu0 %1033
        %1035 = vrot.lane.b32.xlu0 %v697, 96
        %v1036 = vpop.permute.xlu0 %1035
        %1037 = vrot.lane.b32.xlu0 %v699, 96
        %v1038 = vpop.permute.xlu0 %1037
        %v1039 = vsel %vm732, %v685, 0
        %v1041 = vsel %vm732, %v687, 0
        %v1043 = vsel %vm732, %v689, 0
        %v1045 = vsel %vm732, %v691, 0
        %v1047 = vsel %vm732, %v693, 0
        %v1049 = vsel %vm732, %v695, 0
        %v1051 = vsel %vm732, %v697, 0
        %v1053 = vsel %vm732, %v699, 0
        %v1055 = vsel %vm732, %v1024, 0
        %v1057 = vsel %vm732, %v1026, 0
        %v1059 = vsel %vm732, %v1028, 0
        %v1061 = vsel %vm732, %v1030, 0
        %v1063 = vsel %vm732, %v1032, 0
        %v1065 = vsel %vm732, %v1034, 0
        %v1067 = vsel %vm732, %v1036, 0
        %v1069 = vsel %vm732, %v1038, 0
        %1071 = vmatprep.subr.mxu0 0.0
        %1072 = vmatpush1.xpose.msra.mxu0 %v1055
        %1073 = vmatprep.subr.mxu0 0.0
        %1074 = vmatpush1.xpose.msra.mxu0 %v1057
        %1075 = vmatprep.subr.mxu0 0.0
        %1076 = vmatpush1.xpose.msra.mxu0 %v1059
        %1077 = vmatprep.subr.mxu0 0.0
        %1078 = vmatpush1.xpose.msra.mxu0 %v1061
        %1079 = vmatprep.subr.mxu0 0.0
        %1080 = vmatpush1.xpose.msra.mxu0 %v1063
        %1081 = vmatprep.subr.mxu0 0.0
        %1082 = vmatpush1.xpose.msra.mxu0 %v1065
        %1083 = vmatprep.subr.mxu0 0.0
        %1084 = vmatpush1.xpose.msra.mxu0 %v1067
        %1085 = vmatprep.subr.mxu0 0.0
        %1086 = vmatpush1.xpose.msra.mxu0 %v1069
        %1087 = vmatprep.subr.mxu0 0.0
        %1088 = vmatpush1.xpose.msra.mxu0 0.0
        %1089 = vmatprep.subr.mxu0 0.0
        %1090 = vmatpush1.xpose.msra.mxu0 0.0
        %1091 = vmatprep.subr.mxu0 0.0
        %1092 = vmatpush1.xpose.msra.mxu0 0.0
        %1093 = vmatprep.subr.mxu0 0.0
        %1094 = vmatpush1.xpose.msra.mxu0 0.0
        %1095 = vmatprep.subr.mxu0 0.0
        %1096 = vmatpush1.xpose.msra.mxu0 0.0
        %1097 = vmatprep.subr.mxu0 0.0
        %1098 = vmatpush1.xpose.msra.mxu0 0.0
        %1099 = vmatprep.subr.mxu0 0.0
        %1100 = vmatpush1.xpose.msra.mxu0 0.0
        %1101 = vmatprep.subr.mxu0 0.0
        %1102 = vmatpush1.xpose.msra.mxu0 0.0
        %1103 = vmatprep.subr.mxu0 0.0
        %1104 = vmatpush1.xpose.msra.mxu0 0.0
        %1105 = vmatprep.subr.mxu0 0.0
        %1106 = vmatpush1.xpose.msra.mxu0 0.0
        %1107 = vmatprep.subr.mxu0 0.0
        %1108 = vmatpush1.xpose.msra.mxu0 0.0
        %1109 = vmatprep.subr.mxu0 0.0
        %1110 = vmatpush1.xpose.msra.mxu0 0.0
        %1111 = vmatprep.subr.mxu0 0.0
        %1112 = vmatpush1.xpose.msra.mxu0 0.0
        %1113 = vmatprep.subr.mxu0 0.0
        %1114 = vmatpush1.xpose.msra.mxu0 0.0
        %1115 = vmatprep.subr.mxu0 0.0
        %1116 = vmatpush1.xpose.msra.mxu0 0.0
        %1117 = vmatprep.subr.mxu0 0.0
        %1118 = vmatpush1.xpose.msra.mxu0 0.0
        %1119 = vmatprep.subr.mxu0 0.0
        %1120 = vmatpush1.xpose.msra.mxu0 0.0
        %1121 = vmatprep.subr.mxu0 0.0
        %1122 = vmatpush1.xpose.msra.mxu0 0.0
        %1123 = vmatprep.subr.mxu0 0.0
        %1124 = vmatpush1.xpose.msra.mxu0 0.0
        %1125 = vmatprep.subr.mxu0 0.0
        %1126 = vmatpush1.xpose.msra.mxu0 0.0
        %1127 = vmatprep.subr.mxu0 0.0
        %1128 = vmatpush1.xpose.msra.mxu0 0.0
        %1129 = vmatprep.subr.mxu0 0.0
        %1130 = vmatpush1.xpose.msra.mxu0 0.0
        %1131 = vmatprep.subr.mxu0 0.0
        %1132 = vmatpush1.xpose.msra.mxu0 0.0
        %1133 = vmatprep.subr.mxu0 0.0
        %1134 = vmatpush1.xpose.msra.mxu0 0.0
        %1135 = vmatprep.mubr.f32.mxu0 0.0
        %1136 = vmatmul.mubr.f32.gmra.mrb[0].mxu0 %v1039
        %v1137 = vpop.f32.mrb[0].mxu0
        %v1138 = vadd.f32 %v513, %v1137
        %v1139 = vpop.f32.mrb[0].mxu0
        %1140 = vmatprep.mubr.f32.mxu0 0.0
        %1141 = vmatmul.mubr.f32.gmra.mrb[0].mxu0 %v1041
        %v1142 = vpop.f32.mrb[0].mxu0
        %v1143 = vadd.f32 %v514, %v1142
        %v1144 = vpop.f32.mrb[0].mxu0
        %1145 = vmatprep.mubr.f32.mxu0 0.0
        %1146 = vmatmul.mubr.f32.gmra.mrb[0].mxu0 %v1043
        %v1147 = vpop.f32.mrb[0].mxu0
        %v1148 = vadd.f32 %v515, %v1147
        %v1149 = vpop.f32.mrb[0].mxu0
        %1150 = vmatprep.mubr.f32.mxu0 0.0
        %1151 = vmatmul.mubr.f32.gmra.mrb[0].mxu0 %v1045
        %v1152 = vpop.f32.mrb[0].mxu0
        %v1153 = vadd.f32 %v516, %v1152
        %v1154 = vpop.f32.mrb[0].mxu0
        %1155 = vmatprep.mubr.f32.mxu0 0.0
        %1156 = vmatmul.mubr.f32.gmra.mrb[0].mxu0 %v1047
        %v1157 = vpop.f32.mrb[0].mxu0
        %v1158 = vadd.f32 %v517, %v1157
        %v1159 = vpop.f32.mrb[0].mxu0
        %1160 = vmatprep.mubr.f32.mxu0 0.0
        %1161 = vmatmul.mubr.f32.gmra.mrb[0].mxu0 %v1049
        %v1162 = vpop.f32.mrb[0].mxu0
        %v1163 = vadd.f32 %v518, %v1162
        %v1164 = vpop.f32.mrb[0].mxu0
        %1165 = vmatprep.mubr.f32.mxu0 0.0
        %1166 = vmatmul.mubr.f32.gmra.mrb[0].mxu0 %v1051
        %v1167 = vpop.f32.mrb[0].mxu0
        %v1168 = vadd.f32 %v519, %v1167
        %v1169 = vpop.f32.mrb[0].mxu0
        %1170 = vmatprep.mubr.f32.mxu0 0.0
        %1171 = vmatmul.mubr.f32.gmra.mrb[0].mxu0 %v1053
        %v1172 = vpop.f32.mrb[0].mxu0
        %v1173 = vadd.f32 %v520, %v1172
        %v1174 = vpop.f32.mrb[0].mxu0
        %1175 = vdwg.mxu0
        %1176 = vrot.lane.b32.xlu0 %v701, 96
        %v1177 = vpop.permute.xlu0 %1176
        %1178 = vrot.lane.b32.xlu0 %v703, 96
        %v1179 = vpop.permute.xlu0 %1178
        %1180 = vrot.lane.b32.xlu0 %v705, 96
        %v1181 = vpop.permute.xlu0 %1180
        %1182 = vrot.lane.b32.xlu0 %v707, 96
        %v1183 = vpop.permute.xlu0 %1182
        %1184 = vrot.lane.b32.xlu0 %v709, 96
        %v1185 = vpop.permute.xlu0 %1184
        %1186 = vrot.lane.b32.xlu0 %v711, 96
        %v1187 = vpop.permute.xlu0 %1186
        %1188 = vrot.lane.b32.xlu0 %v713, 96
        %v1189 = vpop.permute.xlu0 %1188
        %1190 = vrot.lane.b32.xlu0 %v715, 96
        %v1191 = vpop.permute.xlu0 %1190
        %v1192 = vsel %vm732, %v701, 0
        %v1194 = vsel %vm732, %v703, 0
        %v1196 = vsel %vm732, %v705, 0
        %v1198 = vsel %vm732, %v707, 0
        %v1200 = vsel %vm732, %v709, 0
        %v1202 = vsel %vm732, %v711, 0
        %v1204 = vsel %vm732, %v713, 0
        %v1206 = vsel %vm732, %v715, 0
        %v1208 = vsel %vm732, %v1177, 0
        %v1210 = vsel %vm732, %v1179, 0
        %v1212 = vsel %vm732, %v1181, 0
        %v1214 = vsel %vm732, %v1183, 0
        %v1216 = vsel %vm732, %v1185, 0
        %v1218 = vsel %vm732, %v1187, 0
        %v1220 = vsel %vm732, %v1189, 0
        %v1222 = vsel %vm732, %v1191, 0
        %1224 = vmatprep.subr.mxu0 0.0
        %1225 = vmatpush1.xpose.msra.mxu0 %v1208
        %1226 = vmatprep.subr.mxu0 0.0
        %1227 = vmatpush1.xpose.msra.mxu0 %v1210
        %1228 = vmatprep.subr.mxu0 0.0
        %1229 = vmatpush1.xpose.msra.mxu0 %v1212
        %1230 = vmatprep.subr.mxu0 0.0
        %1231 = vmatpush1.xpose.msra.mxu0 %v1214
        %1232 = vmatprep.subr.mxu0 0.0
        %1233 = vmatpush1.xpose.msra.mxu0 %v1216
        %1234 = vmatprep.subr.mxu0 0.0
        %1235 = vmatpush1.xpose.msra.mxu0 %v1218
        %1236 = vmatprep.subr.mxu0 0.0
        %1237 = vmatpush1.xpose.msra.mxu0 %v1220
        %1238 = vmatprep.subr.mxu0 0.0
        %1239 = vmatpush1.xpose.msra.mxu0 %v1222
        %1240 = vmatprep.subr.mxu0 0.0
        %1241 = vmatpush1.xpose.msra.mxu0 0.0
        %1242 = vmatprep.subr.mxu0 0.0
        %1243 = vmatpush1.xpose.msra.mxu0 0.0
        %1244 = vmatprep.subr.mxu0 0.0
        %1245 = vmatpush1.xpose.msra.mxu0 0.0
        %1246 = vmatprep.subr.mxu0 0.0
        %1247 = vmatpush1.xpose.msra.mxu0 0.0
        %1248 = vmatprep.subr.mxu0 0.0
        %1249 = vmatpush1.xpose.msra.mxu0 0.0
        %1250 = vmatprep.subr.mxu0 0.0
        %1251 = vmatpush1.xpose.msra.mxu0 0.0
        %1252 = vmatprep.subr.mxu0 0.0
        %1253 = vmatpush1.xpose.msra.mxu0 0.0
        %1254 = vmatprep.subr.mxu0 0.0
        %1255 = vmatpush1.xpose.msra.mxu0 0.0
        %1256 = vmatprep.subr.mxu0 0.0
        %1257 = vmatpush1.xpose.msra.mxu0 0.0
        %1258 = vmatprep.subr.mxu0 0.0
        %1259 = vmatpush1.xpose.msra.mxu0 0.0
        %1260 = vmatprep.subr.mxu0 0.0
        %1261 = vmatpush1.xpose.msra.mxu0 0.0
        %1262 = vmatprep.subr.mxu0 0.0
        %1263 = vmatpush1.xpose.msra.mxu0 0.0
        %1264 = vmatprep.subr.mxu0 0.0
        %1265 = vmatpush1.xpose.msra.mxu0 0.0
        %1266 = vmatprep.subr.mxu0 0.0
        %1267 = vmatpush1.xpose.msra.mxu0 0.0
        %1268 = vmatprep.subr.mxu0 0.0
        %1269 = vmatpush1.xpose.msra.mxu0 0.0
        %1270 = vmatprep.subr.mxu0 0.0
        %1271 = vmatpush1.xpose.msra.mxu0 0.0
        %1272 = vmatprep.subr.mxu0 0.0
        %1273 = vmatpush1.xpose.msra.mxu0 0.0
        %1274 = vmatprep.subr.mxu0 0.0
        %1275 = vmatpush1.xpose.msra.mxu0 0.0
        %1276 = vmatprep.subr.mxu0 0.0
        %1277 = vmatpush1.xpose.msra.mxu0 0.0
        %1278 = vmatprep.subr.mxu0 0.0
        %1279 = vmatpush1.xpose.msra.mxu0 0.0
        %1280 = vmatprep.subr.mxu0 0.0
        %1281 = vmatpush1.xpose.msra.mxu0 0.0
        %1282 = vmatprep.subr.mxu0 0.0
        %1283 = vmatpush1.xpose.msra.mxu0 0.0
        %1284 = vmatprep.subr.mxu0 0.0
        %1285 = vmatpush1.xpose.msra.mxu0 0.0
        %1286 = vmatprep.subr.mxu0 0.0
        %1287 = vmatpush1.xpose.msra.mxu0 0.0
        %1288 = vmatprep.mubr.f32.mxu0 0.0
        %1289 = vmatmul.mubr.f32.gmra.mrb[0].mxu0 %v1192
        %v1290 = vpop.f32.mrb[0].mxu0
        %v1291 = vadd.f32 %v513, %v1290
        %v1292 = vpop.f32.mrb[0].mxu0
        %1293 = vmatprep.mubr.f32.mxu0 0.0
        %1294 = vmatmul.mubr.f32.gmra.mrb[0].mxu0 %v1194
        %v1295 = vpop.f32.mrb[0].mxu0
        %v1296 = vadd.f32 %v514, %v1295
        %v1297 = vpop.f32.mrb[0].mxu0
        %1298 = vmatprep.mubr.f32.mxu0 0.0
        %1299 = vmatmul.mubr.f32.gmra.mrb[0].mxu0 %v1196
        %v1300 = vpop.f32.mrb[0].mxu0
        %v1301 = vadd.f32 %v515, %v1300
        %v1302 = vpop.f32.mrb[0].mxu0
        %1303 = vmatprep.mubr.f32.mxu0 0.0
        %1304 = vmatmul.mubr.f32.gmra.mrb[0].mxu0 %v1198
        %v1305 = vpop.f32.mrb[0].mxu0
        %v1306 = vadd.f32 %v516, %v1305
        %v1307 = vpop.f32.mrb[0].mxu0
        %1308 = vmatprep.mubr.f32.mxu0 0.0
        %1309 = vmatmul.mubr.f32.gmra.mrb[0].mxu0 %v1200
        %v1310 = vpop.f32.mrb[0].mxu0
        %v1311 = vadd.f32 %v517, %v1310
        %v1312 = vpop.f32.mrb[0].mxu0
        %1313 = vmatprep.mubr.f32.mxu0 0.0
        %1314 = vmatmul.mubr.f32.gmra.mrb[0].mxu0 %v1202
        %v1315 = vpop.f32.mrb[0].mxu0
        %v1316 = vadd.f32 %v518, %v1315
        %v1317 = vpop.f32.mrb[0].mxu0
        %1318 = vmatprep.mubr.f32.mxu0 0.0
        %1319 = vmatmul.mubr.f32.gmra.mrb[0].mxu0 %v1204
        %v1320 = vpop.f32.mrb[0].mxu0
        %v1321 = vadd.f32 %v519, %v1320
        %v1322 = vpop.f32.mrb[0].mxu0
        %1323 = vmatprep.mubr.f32.mxu0 0.0
        %1324 = vmatmul.mubr.f32.gmra.mrb[0].mxu0 %v1206
        %v1325 = vpop.f32.mrb[0].mxu0
        %v1326 = vadd.f32 %v520, %v1325
        %v1327 = vpop.f32.mrb[0].mxu0
        %1328 = vdwg.mxu0
        %vm1329 = vcmask 523264
        %v1330 = vsel %vm1329, %v832, -inf
        %1331 = vmax.xlane.f32.xlu0 %v1330
        %v1332 = vpop.xlane.xlu0 %1331
        %v1333 = vsel %vm1329, %v837, -inf
        %1334 = vmax.xlane.f32.xlu0 %v1333
        %v1335 = vpop.xlane.xlu0 %1334
        %v1336 = vsel %vm1329, %v842, -inf
        %1337 = vmax.xlane.f32.xlu0 %v1336
        %v1338 = vpop.xlane.xlu0 %1337
        %v1339 = vsel %vm1329, %v847, -inf
        %1340 = vmax.xlane.f32.xlu0 %v1339
        %v1341 = vpop.xlane.xlu0 %1340
        %v1342 = vsel %vm1329, %v852, -inf
        %1343 = vmax.xlane.f32.xlu0 %v1342
        %v1344 = vpop.xlane.xlu0 %1343
        %v1345 = vsel %vm1329, %v857, -inf
        %1346 = vmax.xlane.f32.xlu0 %v1345
        %v1347 = vpop.xlane.xlu0 %1346
        %v1348 = vsel %vm1329, %v862, -inf
        %1349 = vmax.xlane.f32.xlu0 %v1348
        %v1350 = vpop.xlane.xlu0 %1349
        %v1351 = vsel %vm1329, %v867, -inf
        %1352 = vmax.xlane.f32.xlu0 %v1351
        %v1353 = vpop.xlane.xlu0 %1352
        %v1354 = vsel %vm1329, %v985, -inf
        %1355 = vmax.xlane.f32.xlu0 %v1354
        %v1356 = vpop.xlane.xlu0 %1355
        %v1357 = vsel %vm1329, %v990, -inf
        %1358 = vmax.xlane.f32.xlu0 %v1357
        %v1359 = vpop.xlane.xlu0 %1358
        %v1360 = vsel %vm1329, %v995, -inf
        %1361 = vmax.xlane.f32.xlu0 %v1360
        %v1362 = vpop.xlane.xlu0 %1361
        %v1363 = vsel %vm1329, %v1000, -inf
        %1364 = vmax.xlane.f32.xlu0 %v1363
        %v1365 = vpop.xlane.xlu0 %1364
        %v1366 = vsel %vm1329, %v1005, -inf
        %1367 = vmax.xlane.f32.xlu0 %v1366
        %v1368 = vpop.xlane.xlu0 %1367
        %v1369 = vsel %vm1329, %v1010, -inf
        %1370 = vmax.xlane.f32.xlu0 %v1369
        %v1371 = vpop.xlane.xlu0 %1370
        %v1372 = vsel %vm1329, %v1015, -inf
        %1373 = vmax.xlane.f32.xlu0 %v1372
        %v1374 = vpop.xlane.xlu0 %1373
        %v1375 = vsel %vm1329, %v1020, -inf
        %1376 = vmax.xlane.f32.xlu0 %v1375
        %v1377 = vpop.xlane.xlu0 %1376
        %v1378 = vsel %vm1329, %v1138, -inf
        %1379 = vmax.xlane.f32.xlu0 %v1378
        %v1380 = vpop.xlane.xlu0 %1379
        %v1381 = vsel %vm1329, %v1143, -inf
        %1382 = vmax.xlane.f32.xlu0 %v1381
        %v1383 = vpop.xlane.xlu0 %1382
        %v1384 = vsel %vm1329, %v1148, -inf
        %1385 = vmax.xlane.f32.xlu0 %v1384
        %v1386 = vpop.xlane.xlu0 %1385
        %v1387 = vsel %vm1329, %v1153, -inf
        %1388 = vmax.xlane.f32.xlu0 %v1387
        %v1389 = vpop.xlane.xlu0 %1388
        %v1390 = vsel %vm1329, %v1158, -inf
        %1391 = vmax.xlane.f32.xlu0 %v1390
        %v1392 = vpop.xlane.xlu0 %1391
        %v1393 = vsel %vm1329, %v1163, -inf
        %1394 = vmax.xlane.f32.xlu0 %v1393
        %v1395 = vpop.xlane.xlu0 %1394
        %v1396 = vsel %vm1329, %v1168, -inf
        %1397 = vmax.xlane.f32.xlu0 %v1396
        %v1398 = vpop.xlane.xlu0 %1397
        %v1399 = vsel %vm1329, %v1173, -inf
        %1400 = vmax.xlane.f32.xlu0 %v1399
        %v1401 = vpop.xlane.xlu0 %1400
        %v1402 = vsel %vm1329, %v1291, -inf
        %1403 = vmax.xlane.f32.xlu0 %v1402
        %v1404 = vpop.xlane.xlu0 %1403
        %v1405 = vsel %vm1329, %v1296, -inf
        %1406 = vmax.xlane.f32.xlu0 %v1405
        %v1407 = vpop.xlane.xlu0 %1406
        %v1408 = vsel %vm1329, %v1301, -inf
        %1409 = vmax.xlane.f32.xlu0 %v1408
        %v1410 = vpop.xlane.xlu0 %1409
        %v1411 = vsel %vm1329, %v1306, -inf
        %1412 = vmax.xlane.f32.xlu0 %v1411
        %v1413 = vpop.xlane.xlu0 %1412
        %v1414 = vsel %vm1329, %v1311, -inf
        %1415 = vmax.xlane.f32.xlu0 %v1414
        %v1416 = vpop.xlane.xlu0 %1415
        %v1417 = vsel %vm1329, %v1316, -inf
        %1418 = vmax.xlane.f32.xlu0 %v1417
        %v1419 = vpop.xlane.xlu0 %1418
        %v1420 = vsel %vm1329, %v1321, -inf
        %1421 = vmax.xlane.f32.xlu0 %v1420
        %v1422 = vpop.xlane.xlu0 %1421
        %v1423 = vsel %vm1329, %v1326, -inf
        %1424 = vmax.xlane.f32.xlu0 %v1423
        %v1425 = vpop.xlane.xlu0 %1424
        %v1426 = vsub.f32 %v832, %v1332
        %v1427 = vsub.f32 %v837, %v1335
        %v1428 = vsub.f32 %v842, %v1338
        %v1429 = vsub.f32 %v847, %v1341
        %v1430 = vsub.f32 %v852, %v1344
        %v1431 = vsub.f32 %v857, %v1347
        %v1432 = vsub.f32 %v862, %v1350
        %v1433 = vsub.f32 %v867, %v1353
        %v1434 = vsub.f32 %v985, %v1356
        %v1435 = vsub.f32 %v990, %v1359
        %v1436 = vsub.f32 %v995, %v1362
        %v1437 = vsub.f32 %v1000, %v1365
        %v1438 = vsub.f32 %v1005, %v1368
        %v1439 = vsub.f32 %v1010, %v1371
        %v1440 = vsub.f32 %v1015, %v1374
        %v1441 = vsub.f32 %v1020, %v1377
        %v1442 = vsub.f32 %v1138, %v1380
        %v1443 = vsub.f32 %v1143, %v1383
        %v1444 = vsub.f32 %v1148, %v1386
        %v1445 = vsub.f32 %v1153, %v1389
        %v1446 = vsub.f32 %v1158, %v1392
        %v1447 = vsub.f32 %v1163, %v1395
        %v1448 = vsub.f32 %v1168, %v1398
        %v1449 = vsub.f32 %v1173, %v1401
        %v1450 = vsub.f32 %v1291, %v1404
        %v1451 = vsub.f32 %v1296, %v1407
        %v1452 = vsub.f32 %v1301, %v1410
        %v1453 = vsub.f32 %v1306, %v1413
        %v1454 = vsub.f32 %v1311, %v1416
        %v1455 = vsub.f32 %v1316, %v1419
        %v1456 = vsub.f32 %v1321, %v1422
        %v1457 = vsub.f32 %v1326, %v1425
        %v1458 = vmul.f32 %v1426, 1.442695
        %v1459 = vpow.pop %v1458
        %v1460 = vmul.f32 %v1427, 1.442695
        %v1461 = vpow.pop %v1460
        %v1462 = vmul.f32 %v1428, 1.442695
        %v1463 = vpow.pop %v1462
        %v1464 = vmul.f32 %v1429, 1.442695
        %v1465 = vpow.pop %v1464
        %v1466 = vmul.f32 %v1430, 1.442695
        %v1467 = vpow.pop %v1466
        %v1468 = vmul.f32 %v1431, 1.442695
        %v1469 = vpow.pop %v1468
        %v1470 = vmul.f32 %v1432, 1.442695
        %v1471 = vpow.pop %v1470
        %v1472 = vmul.f32 %v1433, 1.442695
        %v1473 = vpow.pop %v1472
        %v1474 = vmul.f32 %v1434, 1.442695
        %v1475 = vpow.pop %v1474
        %v1476 = vmul.f32 %v1435, 1.442695
        %v1477 = vpow.pop %v1476
        %v1478 = vmul.f32 %v1436, 1.442695
        %v1479 = vpow.pop %v1478
        %v1480 = vmul.f32 %v1437, 1.442695
        %v1481 = vpow.pop %v1480
        %v1482 = vmul.f32 %v1438, 1.442695
        %v1483 = vpow.pop %v1482
        %v1484 = vmul.f32 %v1439, 1.442695
        %v1485 = vpow.pop %v1484
        %v1486 = vmul.f32 %v1440, 1.442695
        %v1487 = vpow.pop %v1486
        %v1488 = vmul.f32 %v1441, 1.442695
        %v1489 = vpow.pop %v1488
        %v1490 = vmul.f32 %v1442, 1.442695
        %v1491 = vpow.pop %v1490
        %v1492 = vmul.f32 %v1443, 1.442695
        %v1493 = vpow.pop %v1492
        %v1494 = vmul.f32 %v1444, 1.442695
        %v1495 = vpow.pop %v1494
        %v1496 = vmul.f32 %v1445, 1.442695
        %v1497 = vpow.pop %v1496
        %v1498 = vmul.f32 %v1446, 1.442695
        %v1499 = vpow.pop %v1498
        %v1500 = vmul.f32 %v1447, 1.442695
        %v1501 = vpow.pop %v1500
        %v1502 = vmul.f32 %v1448, 1.442695
        %v1503 = vpow.pop %v1502
        %v1504 = vmul.f32 %v1449, 1.442695
        %v1505 = vpow.pop %v1504
        %v1506 = vmul.f32 %v1450, 1.442695
        %v1507 = vpow.pop %v1506
        %v1508 = vmul.f32 %v1451, 1.442695
        %v1509 = vpow.pop %v1508
        %v1510 = vmul.f32 %v1452, 1.442695
        %v1511 = vpow.pop %v1510
        %v1512 = vmul.f32 %v1453, 1.442695
        %v1513 = vpow.pop %v1512
        %v1514 = vmul.f32 %v1454, 1.442695
        %v1515 = vpow.pop %v1514
        %v1516 = vmul.f32 %v1455, 1.442695
        %v1517 = vpow.pop %v1516
        %v1518 = vmul.f32 %v1456, 1.442695
        %v1519 = vpow.pop %v1518
        %v1520 = vmul.f32 %v1457, 1.442695
        %v1521 = vpow.pop %v1520
        %v1522 = vsel %vm1329, %v1459, 0.0
        %1523 = vadd.xlane.f32.xlu0 %v1522
        %v1524 = vpop.xlane.xlu0 %1523
        %v1525 = vsel %vm1329, %v1461, 0.0
        %1526 = vadd.xlane.f32.xlu0 %v1525
        %v1527 = vpop.xlane.xlu0 %1526
        %v1528 = vsel %vm1329, %v1463, 0.0
        %1529 = vadd.xlane.f32.xlu0 %v1528
        %v1530 = vpop.xlane.xlu0 %1529
        %v1531 = vsel %vm1329, %v1465, 0.0
        %1532 = vadd.xlane.f32.xlu0 %v1531
        %v1533 = vpop.xlane.xlu0 %1532
        %v1534 = vsel %vm1329, %v1467, 0.0
        %1535 = vadd.xlane.f32.xlu0 %v1534
        %v1536 = vpop.xlane.xlu0 %1535
        %v1537 = vsel %vm1329, %v1469, 0.0
        %1538 = vadd.xlane.f32.xlu0 %v1537
        %v1539 = vpop.xlane.xlu0 %1538
        %v1540 = vsel %vm1329, %v1471, 0.0
        %1541 = vadd.xlane.f32.xlu0 %v1540
        %v1542 = vpop.xlane.xlu0 %1541
        %v1543 = vsel %vm1329, %v1473, 0.0
        %1544 = vadd.xlane.f32.xlu0 %v1543
        %v1545 = vpop.xlane.xlu0 %1544
        %v1546 = vsel %vm1329, %v1475, 0.0
        %1547 = vadd.xlane.f32.xlu0 %v1546
        %v1548 = vpop.xlane.xlu0 %1547
        %v1549 = vsel %vm1329, %v1477, 0.0
        %1550 = vadd.xlane.f32.xlu0 %v1549
        %v1551 = vpop.xlane.xlu0 %1550
        %v1552 = vsel %vm1329, %v1479, 0.0
        %1553 = vadd.xlane.f32.xlu0 %v1552
        %v1554 = vpop.xlane.xlu0 %1553
        %v1555 = vsel %vm1329, %v1481, 0.0
        %1556 = vadd.xlane.f32.xlu0 %v1555
        %v1557 = vpop.xlane.xlu0 %1556
        %v1558 = vsel %vm1329, %v1483, 0.0
        %1559 = vadd.xlane.f32.xlu0 %v1558
        %v1560 = vpop.xlane.xlu0 %1559
        %v1561 = vsel %vm1329, %v1485, 0.0
        %1562 = vadd.xlane.f32.xlu0 %v1561
        %v1563 = vpop.xlane.xlu0 %1562
        %v1564 = vsel %vm1329, %v1487, 0.0
        %1565 = vadd.xlane.f32.xlu0 %v1564
        %v1566 = vpop.xlane.xlu0 %1565
        %v1567 = vsel %vm1329, %v1489, 0.0
        %1568 = vadd.xlane.f32.xlu0 %v1567
        %v1569 = vpop.xlane.xlu0 %1568
        %v1570 = vsel %vm1329, %v1491, 0.0
        %1571 = vadd.xlane.f32.xlu0 %v1570
        %v1572 = vpop.xlane.xlu0 %1571
        %v1573 = vsel %vm1329, %v1493, 0.0
        %1574 = vadd.xlane.f32.xlu0 %v1573
        %v1575 = vpop.xlane.xlu0 %1574
        %v1576 = vsel %vm1329, %v1495, 0.0
        %1577 = vadd.xlane.f32.xlu0 %v1576
        %v1578 = vpop.xlane.xlu0 %1577
        %v1579 = vsel %vm1329, %v1497, 0.0
        %1580 = vadd.xlane.f32.xlu0 %v1579
        %v1581 = vpop.xlane.xlu0 %1580
        %v1582 = vsel %vm1329, %v1499, 0.0
        %1583 = vadd.xlane.f32.xlu0 %v1582
        %v1584 = vpop.xlane.xlu0 %1583
        %v1585 = vsel %vm1329, %v1501, 0.0
        %1586 = vadd.xlane.f32.xlu0 %v1585
        %v1587 = vpop.xlane.xlu0 %1586
        %v1588 = vsel %vm1329, %v1503, 0.0
        %1589 = vadd.xlane.f32.xlu0 %v1588
        %v1590 = vpop.xlane.xlu0 %1589
        %v1591 = vsel %vm1329, %v1505, 0.0
        %1592 = vadd.xlane.f32.xlu0 %v1591
        %v1593 = vpop.xlane.xlu0 %1592
        %v1594 = vsel %vm1329, %v1507, 0.0
        %1595 = vadd.xlane.f32.xlu0 %v1594
        %v1596 = vpop.xlane.xlu0 %1595
        %v1597 = vsel %vm1329, %v1509, 0.0
        %1598 = vadd.xlane.f32.xlu0 %v1597
        %v1599 = vpop.xlane.xlu0 %1598
        %v1600 = vsel %vm1329, %v1511, 0.0
        %1601 = vadd.xlane.f32.xlu0 %v1600
        %v1602 = vpop.xlane.xlu0 %1601
        %v1603 = vsel %vm1329, %v1513, 0.0
        %1604 = vadd.xlane.f32.xlu0 %v1603
        %v1605 = vpop.xlane.xlu0 %1604
        %v1606 = vsel %vm1329, %v1515, 0.0
        %1607 = vadd.xlane.f32.xlu0 %v1606
        %v1608 = vpop.xlane.xlu0 %1607
        %v1609 = vsel %vm1329, %v1517, 0.0
        %1610 = vadd.xlane.f32.xlu0 %v1609
        %v1611 = vpop.xlane.xlu0 %1610
        %v1612 = vsel %vm1329, %v1519, 0.0
        %1613 = vadd.xlane.f32.xlu0 %v1612
        %v1614 = vpop.xlane.xlu0 %1613
        %v1615 = vsel %vm1329, %v1521, 0.0
        %1616 = vadd.xlane.f32.xlu0 %v1615
        %v1617 = vpop.xlane.xlu0 %1616
        %v1618 = vrcp.pop %v1524
        %v1619 = vrcp.pop %v1527
        %v1620 = vrcp.pop %v1530
        %v1621 = vrcp.pop %v1533
        %v1622 = vrcp.pop %v1536
        %v1623 = vrcp.pop %v1539
        %v1624 = vrcp.pop %v1542
        %v1625 = vrcp.pop %v1545
        %v1626 = vrcp.pop %v1548
        %v1627 = vrcp.pop %v1551
        %v1628 = vrcp.pop %v1554
        %v1629 = vrcp.pop %v1557
        %v1630 = vrcp.pop %v1560
        %v1631 = vrcp.pop %v1563
        %v1632 = vrcp.pop %v1566
        %v1633 = vrcp.pop %v1569
        %v1634 = vrcp.pop %v1572
        %v1635 = vrcp.pop %v1575
        %v1636 = vrcp.pop %v1578
        %v1637 = vrcp.pop %v1581
        %v1638 = vrcp.pop %v1584
        %v1639 = vrcp.pop %v1587
        %v1640 = vrcp.pop %v1590
        %v1641 = vrcp.pop %v1593
        %v1642 = vrcp.pop %v1596
        %v1643 = vrcp.pop %v1599
        %v1644 = vrcp.pop %v1602
        %v1645 = vrcp.pop %v1605
        %v1646 = vrcp.pop %v1608
        %v1647 = vrcp.pop %v1611
        %v1648 = vrcp.pop %v1614
        %v1649 = vrcp.pop %v1617
        %v1650 = vmul.f32 %v1459, %v1618
        %v1651 = vmul.f32 %v1461, %v1619
        %v1652 = vmul.f32 %v1463, %v1620
        %v1653 = vmul.f32 %v1465, %v1621
        %v1654 = vmul.f32 %v1467, %v1622
        %v1655 = vmul.f32 %v1469, %v1623
        %v1656 = vmul.f32 %v1471, %v1624
        %v1657 = vmul.f32 %v1473, %v1625
        %v1658 = vmul.f32 %v1475, %v1626
        %v1659 = vmul.f32 %v1477, %v1627
        %v1660 = vmul.f32 %v1479, %v1628
        %v1661 = vmul.f32 %v1481, %v1629
        %v1662 = vmul.f32 %v1483, %v1630
        %v1663 = vmul.f32 %v1485, %v1631
        %v1664 = vmul.f32 %v1487, %v1632
        %v1665 = vmul.f32 %v1489, %v1633
        %v1666 = vmul.f32 %v1491, %v1634
        %v1667 = vmul.f32 %v1493, %v1635
        %v1668 = vmul.f32 %v1495, %v1636
        %v1669 = vmul.f32 %v1497, %v1637
        %v1670 = vmul.f32 %v1499, %v1638
        %v1671 = vmul.f32 %v1501, %v1639
        %v1672 = vmul.f32 %v1503, %v1640
        %v1673 = vmul.f32 %v1505, %v1641
        %v1674 = vmul.f32 %v1507, %v1642
        %v1675 = vmul.f32 %v1509, %v1643
        %v1676 = vmul.f32 %v1511, %v1644
        %v1677 = vmul.f32 %v1513, %v1645
        %v1678 = vmul.f32 %v1515, %v1646
        %v1679 = vmul.f32 %v1517, %v1647
        %v1680 = vmul.f32 %v1519, %v1648
        %v1681 = vmul.f32 %v1521, %v1649
        %1682 = vrot.lane.b32.xlu0 %v622, 64
        %v1683 = vpop.permute.xlu0 %1682
        %1684 = vrot.lane.b32.xlu0 %v627, 64
        %v1685 = vpop.permute.xlu0 %1684
        %1686 = vrot.lane.b32.xlu0 %v632, 64
        %v1687 = vpop.permute.xlu0 %1686
        %1688 = vrot.lane.b32.xlu0 %v637, 64
        %v1689 = vpop.permute.xlu0 %1688
        %1690 = vrot.lane.b32.xlu0 %v642, 64
        %v1691 = vpop.permute.xlu0 %1690
        %1692 = vrot.lane.b32.xlu0 %v647, 64
        %v1693 = vpop.permute.xlu0 %1692
        %1694 = vrot.lane.b32.xlu0 %v652, 64
        %v1695 = vpop.permute.xlu0 %1694
        %1696 = vrot.lane.b32.xlu0 %v657, 64
        %v1697 = vpop.permute.xlu0 %1696
        %v1707 = vsel %vm1329, %v1650, 0
        %v1710 = vsel %vm1329, %v1651, 0
        %v1713 = vsel %vm1329, %v1652, 0
        %v1716 = vsel %vm1329, %v1653, 0
        %v1719 = vsel %vm1329, %v1654, 0
        %v1722 = vsel %vm1329, %v1655, 0
        %v1725 = vsel %vm1329, %v1656, 0
        %v1728 = vsel %vm1329, %v1657, 0
        %1730 = vmatprep.subr.mxu0 0.0
        %1731 = vmatpush1.msra.mxu0 %v1683
        %1732 = vmatprep.subr.mxu0 0.0
        %1733 = vmatpush1.msra.mxu0 %v1685
        %1734 = vmatprep.subr.mxu0 0.0
        %1735 = vmatpush1.msra.mxu0 %v1687
        %1736 = vmatprep.subr.mxu0 0.0
        %1737 = vmatpush1.msra.mxu0 %v1689
        %1738 = vmatprep.subr.mxu0 0.0
        %1739 = vmatpush1.msra.mxu0 %v1691
        %1740 = vmatprep.subr.mxu0 0.0
        %1741 = vmatpush1.msra.mxu0 %v1693
        %1742 = vmatprep.subr.mxu0 0.0
        %1743 = vmatpush1.msra.mxu0 %v1695
        %1744 = vmatprep.subr.mxu0 0.0
        %1745 = vmatpush1.msra.mxu0 %v1697
        %1746 = vmatprep.subr.mxu0 0.0
        %1747 = vmatpush1.msra.mxu0 0.0
        %1748 = vmatprep.subr.mxu0 0.0
        %1749 = vmatpush1.msra.mxu0 0.0
        %1750 = vmatprep.subr.mxu0 0.0
        %1751 = vmatpush1.msra.mxu0 0.0
        %1752 = vmatprep.subr.mxu0 0.0
        %1753 = vmatpush1.msra.mxu0 0.0
        %1754 = vmatprep.subr.mxu0 0.0
        %1755 = vmatpush1.msra.mxu0 0.0
        %1756 = vmatprep.subr.mxu0 0.0
        %1757 = vmatpush1.msra.mxu0 0.0
        %1758 = vmatprep.subr.mxu0 0.0
        %1759 = vmatpush1.msra.mxu0 0.0
        %1760 = vmatprep.subr.mxu0 0.0
        %1761 = vmatpush1.msra.mxu0 0.0
        %1762 = vmatprep.subr.mxu0 0.0
        %1763 = vmatpush1.msra.mxu0 0.0
        %1764 = vmatprep.subr.mxu0 0.0
        %1765 = vmatpush1.msra.mxu0 0.0
        %1766 = vmatprep.subr.mxu0 0.0
        %1767 = vmatpush1.msra.mxu0 0.0
        %1768 = vmatprep.subr.mxu0 0.0
        %1769 = vmatpush1.msra.mxu0 0.0
        %1770 = vmatprep.subr.mxu0 0.0
        %1771 = vmatpush1.msra.mxu0 0.0
        %1772 = vmatprep.subr.mxu0 0.0
        %1773 = vmatpush1.msra.mxu0 0.0
        %1774 = vmatprep.subr.mxu0 0.0
        %1775 = vmatpush1.msra.mxu0 0.0
        %1776 = vmatprep.subr.mxu0 0.0
        %1777 = vmatpush1.msra.mxu0 0.0
        %1778 = vmatprep.subr.mxu0 0.0
        %1779 = vmatpush1.msra.mxu0 0.0
        %1780 = vmatprep.subr.mxu0 0.0
        %1781 = vmatpush1.msra.mxu0 0.0
        %1782 = vmatprep.subr.mxu0 0.0
        %1783 = vmatpush1.msra.mxu0 0.0
        %1784 = vmatprep.subr.mxu0 0.0
        %1785 = vmatpush1.msra.mxu0 0.0
        %1786 = vmatprep.subr.mxu0 0.0
        %1787 = vmatpush1.msra.mxu0 0.0
        %1788 = vmatprep.subr.mxu0 0.0
        %1789 = vmatpush1.msra.mxu0 0.0
        %1790 = vmatprep.subr.mxu0 0.0
        %1791 = vmatpush1.msra.mxu0 0.0
        %1792 = vmatprep.subr.mxu0 0.0
        %1793 = vmatpush1.msra.mxu0 0.0
        %1794 = vmatprep.mubr.f32.mxu0 0.0
        %1795 = vmatmul.mubr.f32.gmra.mrb[0].mxu0 %v1707
        %v1796 = vpop.f32.mrb[0].mxu0
        %v1797 = vadd.f32 0.0, %v1796
        %v1798 = vpop.f32.mrb[0].mxu0
        %1799 = vmatprep.mubr.f32.mxu0 0.0
        %1800 = vmatmul.mubr.f32.gmra.mrb[0].mxu0 %v1710
        %v1801 = vpop.f32.mrb[0].mxu0
        %v1802 = vadd.f32 0.0, %v1801
        %v1803 = vpop.f32.mrb[0].mxu0
        %1804 = vmatprep.mubr.f32.mxu0 0.0
        %1805 = vmatmul.mubr.f32.gmra.mrb[0].mxu0 %v1713
        %v1806 = vpop.f32.mrb[0].mxu0
        %v1807 = vadd.f32 0.0, %v1806
        %v1808 = vpop.f32.mrb[0].mxu0
        %1809 = vmatprep.mubr.f32.mxu0 0.0
        %1810 = vmatmul.mubr.f32.gmra.mrb[0].mxu0 %v1716
        %v1811 = vpop.f32.mrb[0].mxu0
        %v1812 = vadd.f32 0.0, %v1811
        %v1813 = vpop.f32.mrb[0].mxu0
        %1814 = vmatprep.mubr.f32.mxu0 0.0
        %1815 = vmatmul.mubr.f32.gmra.mrb[0].mxu0 %v1719
        %v1816 = vpop.f32.mrb[0].mxu0
        %v1817 = vadd.f32 0.0, %v1816
        %v1818 = vpop.f32.mrb[0].mxu0
        %1819 = vmatprep.mubr.f32.mxu0 0.0
        %1820 = vmatmul.mubr.f32.gmra.mrb[0].mxu0 %v1722
        %v1821 = vpop.f32.mrb[0].mxu0
        %v1822 = vadd.f32 0.0, %v1821
        %v1823 = vpop.f32.mrb[0].mxu0
        %1824 = vmatprep.mubr.f32.mxu0 0.0
        %1825 = vmatmul.mubr.f32.gmra.mrb[0].mxu0 %v1725
        %v1826 = vpop.f32.mrb[0].mxu0
        %v1827 = vadd.f32 0.0, %v1826
        %v1828 = vpop.f32.mrb[0].mxu0
        %1829 = vmatprep.mubr.f32.mxu0 0.0
        %1830 = vmatmul.mubr.f32.gmra.mrb[0].mxu0 %v1728
        %v1831 = vpop.f32.mrb[0].mxu0
        %v1832 = vadd.f32 0.0, %v1831
        %v1833 = vpop.f32.mrb[0].mxu0
        %1834 = vdwg.mxu0
        %1835 = vrot.lane.b32.xlu0 %v669, 64
        %v1836 = vpop.permute.xlu0 %1835
        %1837 = vrot.lane.b32.xlu0 %v671, 64
        %v1838 = vpop.permute.xlu0 %1837
        %1839 = vrot.lane.b32.xlu0 %v673, 64
        %v1840 = vpop.permute.xlu0 %1839
        %1841 = vrot.lane.b32.xlu0 %v675, 64
        %v1842 = vpop.permute.xlu0 %1841
        %1843 = vrot.lane.b32.xlu0 %v677, 64
        %v1844 = vpop.permute.xlu0 %1843
        %1845 = vrot.lane.b32.xlu0 %v679, 64
        %v1846 = vpop.permute.xlu0 %1845
        %1847 = vrot.lane.b32.xlu0 %v681, 64
        %v1848 = vpop.permute.xlu0 %1847
        %1849 = vrot.lane.b32.xlu0 %v683, 64
        %v1850 = vpop.permute.xlu0 %1849
        %v1860 = vsel %vm1329, %v1658, 0
        %v1863 = vsel %vm1329, %v1659, 0
        %v1866 = vsel %vm1329, %v1660, 0
        %v1869 = vsel %vm1329, %v1661, 0
        %v1872 = vsel %vm1329, %v1662, 0
        %v1875 = vsel %vm1329, %v1663, 0
        %v1878 = vsel %vm1329, %v1664, 0
        %v1881 = vsel %vm1329, %v1665, 0
        %1883 = vmatprep.subr.mxu0 0.0
        %1884 = vmatpush1.msra.mxu0 %v1836
        %1885 = vmatprep.subr.mxu0 0.0
        %1886 = vmatpush1.msra.mxu0 %v1838
        %1887 = vmatprep.subr.mxu0 0.0
        %1888 = vmatpush1.msra.mxu0 %v1840
        %1889 = vmatprep.subr.mxu0 0.0
        %1890 = vmatpush1.msra.mxu0 %v1842
        %1891 = vmatprep.subr.mxu0 0.0
        %1892 = vmatpush1.msra.mxu0 %v1844
        %1893 = vmatprep.subr.mxu0 0.0
        %1894 = vmatpush1.msra.mxu0 %v1846
        %1895 = vmatprep.subr.mxu0 0.0
        %1896 = vmatpush1.msra.mxu0 %v1848
        %1897 = vmatprep.subr.mxu0 0.0
        %1898 = vmatpush1.msra.mxu0 %v1850
        %1899 = vmatprep.subr.mxu0 0.0
        %1900 = vmatpush1.msra.mxu0 0.0
        %1901 = vmatprep.subr.mxu0 0.0
        %1902 = vmatpush1.msra.mxu0 0.0
        %1903 = vmatprep.subr.mxu0 0.0
        %1904 = vmatpush1.msra.mxu0 0.0
        %1905 = vmatprep.subr.mxu0 0.0
        %1906 = vmatpush1.msra.mxu0 0.0
        %1907 = vmatprep.subr.mxu0 0.0
        %1908 = vmatpush1.msra.mxu0 0.0
        %1909 = vmatprep.subr.mxu0 0.0
        %1910 = vmatpush1.msra.mxu0 0.0
        %1911 = vmatprep.subr.mxu0 0.0
        %1912 = vmatpush1.msra.mxu0 0.0
        %1913 = vmatprep.subr.mxu0 0.0
        %1914 = vmatpush1.msra.mxu0 0.0
        %1915 = vmatprep.subr.mxu0 0.0
        %1916 = vmatpush1.msra.mxu0 0.0
        %1917 = vmatprep.subr.mxu0 0.0
        %1918 = vmatpush1.msra.mxu0 0.0
        %1919 = vmatprep.subr.mxu0 0.0
        %1920 = vmatpush1.msra.mxu0 0.0
        %1921 = vmatprep.subr.mxu0 0.0
        %1922 = vmatpush1.msra.mxu0 0.0
        %1923 = vmatprep.subr.mxu0 0.0
        %1924 = vmatpush1.msra.mxu0 0.0
        %1925 = vmatprep.subr.mxu0 0.0
        %1926 = vmatpush1.msra.mxu0 0.0
        %1927 = vmatprep.subr.mxu0 0.0
        %1928 = vmatpush1.msra.mxu0 0.0
        %1929 = vmatprep.subr.mxu0 0.0
        %1930 = vmatpush1.msra.mxu0 0.0
        %1931 = vmatprep.subr.mxu0 0.0
        %1932 = vmatpush1.msra.mxu0 0.0
        %1933 = vmatprep.subr.mxu0 0.0
        %1934 = vmatpush1.msra.mxu0 0.0
        %1935 = vmatprep.subr.mxu0 0.0
        %1936 = vmatpush1.msra.mxu0 0.0
        %1937 = vmatprep.subr.mxu0 0.0
        %1938 = vmatpush1.msra.mxu0 0.0
        %1939 = vmatprep.subr.mxu0 0.0
        %1940 = vmatpush1.msra.mxu0 0.0
        %1941 = vmatprep.subr.mxu0 0.0
        %1942 = vmatpush1.msra.mxu0 0.0
        %1943 = vmatprep.subr.mxu0 0.0
        %1944 = vmatpush1.msra.mxu0 0.0
        %1945 = vmatprep.subr.mxu0 0.0
        %1946 = vmatpush1.msra.mxu0 0.0
        %1947 = vmatprep.mubr.f32.mxu0 0.0
        %1948 = vmatmul.mubr.f32.gmra.mrb[0].mxu0 %v1860
        %v1949 = vpop.f32.mrb[0].mxu0
        %v1950 = vadd.f32 0.0, %v1949
        %v1951 = vpop.f32.mrb[0].mxu0
        %1952 = vmatprep.mubr.f32.mxu0 0.0
        %1953 = vmatmul.mubr.f32.gmra.mrb[0].mxu0 %v1863
        %v1954 = vpop.f32.mrb[0].mxu0
        %v1955 = vadd.f32 0.0, %v1954
        %v1956 = vpop.f32.mrb[0].mxu0
        %1957 = vmatprep.mubr.f32.mxu0 0.0
        %1958 = vmatmul.mubr.f32.gmra.mrb[0].mxu0 %v1866
        %v1959 = vpop.f32.mrb[0].mxu0
        %v1960 = vadd.f32 0.0, %v1959
        %v1961 = vpop.f32.mrb[0].mxu0
        %1962 = vmatprep.mubr.f32.mxu0 0.0
        %1963 = vmatmul.mubr.f32.gmra.mrb[0].mxu0 %v1869
        %v1964 = vpop.f32.mrb[0].mxu0
        %v1965 = vadd.f32 0.0, %v1964
        %v1966 = vpop.f32.mrb[0].mxu0
        %1967 = vmatprep.mubr.f32.mxu0 0.0
        %1968 = vmatmul.mubr.f32.gmra.mrb[0].mxu0 %v1872
        %v1969 = vpop.f32.mrb[0].mxu0
        %v1970 = vadd.f32 0.0, %v1969
        %v1971 = vpop.f32.mrb[0].mxu0
        %1972 = vmatprep.mubr.f32.mxu0 0.0
        %1973 = vmatmul.mubr.f32.gmra.mrb[0].mxu0 %v1875
        %v1974 = vpop.f32.mrb[0].mxu0
        %v1975 = vadd.f32 0.0, %v1974
        %v1976 = vpop.f32.mrb[0].mxu0
        %1977 = vmatprep.mubr.f32.mxu0 0.0
        %1978 = vmatmul.mubr.f32.gmra.mrb[0].mxu0 %v1878
        %v1979 = vpop.f32.mrb[0].mxu0
        %v1980 = vadd.f32 0.0, %v1979
        %v1981 = vpop.f32.mrb[0].mxu0
        %1982 = vmatprep.mubr.f32.mxu0 0.0
        %1983 = vmatmul.mubr.f32.gmra.mrb[0].mxu0 %v1881
        %v1984 = vpop.f32.mrb[0].mxu0
        %v1985 = vadd.f32 0.0, %v1984
        %v1986 = vpop.f32.mrb[0].mxu0
        %1987 = vdwg.mxu0
        %1988 = vrot.lane.b32.xlu0 %v685, 64
        %v1989 = vpop.permute.xlu0 %1988
        %1990 = vrot.lane.b32.xlu0 %v687, 64
        %v1991 = vpop.permute.xlu0 %1990
        %1992 = vrot.lane.b32.xlu0 %v689, 64
        %v1993 = vpop.permute.xlu0 %1992
        %1994 = vrot.lane.b32.xlu0 %v691, 64
        %v1995 = vpop.permute.xlu0 %1994
        %1996 = vrot.lane.b32.xlu0 %v693, 64
        %v1997 = vpop.permute.xlu0 %1996
        %1998 = vrot.lane.b32.xlu0 %v695, 64
        %v1999 = vpop.permute.xlu0 %1998
        %2000 = vrot.lane.b32.xlu0 %v697, 64
        %v2001 = vpop.permute.xlu0 %2000
        %2002 = vrot.lane.b32.xlu0 %v699, 64
        %v2003 = vpop.permute.xlu0 %2002
        %v2013 = vsel %vm1329, %v1666, 0
        %v2016 = vsel %vm1329, %v1667, 0
        %v2019 = vsel %vm1329, %v1668, 0
        %v2022 = vsel %vm1329, %v1669, 0
        %v2025 = vsel %vm1329, %v1670, 0
        %v2028 = vsel %vm1329, %v1671, 0
        %v2031 = vsel %vm1329, %v1672, 0
        %v2034 = vsel %vm1329, %v1673, 0
        %2036 = vmatprep.subr.mxu0 0.0
        %2037 = vmatpush1.msra.mxu0 %v1989
        %2038 = vmatprep.subr.mxu0 0.0
        %2039 = vmatpush1.msra.mxu0 %v1991
        %2040 = vmatprep.subr.mxu0 0.0
        %2041 = vmatpush1.msra.mxu0 %v1993
        %2042 = vmatprep.subr.mxu0 0.0
        %2043 = vmatpush1.msra.mxu0 %v1995
        %2044 = vmatprep.subr.mxu0 0.0
        %2045 = vmatpush1.msra.mxu0 %v1997
        %2046 = vmatprep.subr.mxu0 0.0
        %2047 = vmatpush1.msra.mxu0 %v1999
        %2048 = vmatprep.subr.mxu0 0.0
        %2049 = vmatpush1.msra.mxu0 %v2001
        %2050 = vmatprep.subr.mxu0 0.0
        %2051 = vmatpush1.msra.mxu0 %v2003
        %2052 = vmatprep.subr.mxu0 0.0
        %2053 = vmatpush1.msra.mxu0 0.0
        %2054 = vmatprep.subr.mxu0 0.0
        %2055 = vmatpush1.msra.mxu0 0.0
        %2056 = vmatprep.subr.mxu0 0.0
        %2057 = vmatpush1.msra.mxu0 0.0
        %2058 = vmatprep.subr.mxu0 0.0
        %2059 = vmatpush1.msra.mxu0 0.0
        %2060 = vmatprep.subr.mxu0 0.0
        %2061 = vmatpush1.msra.mxu0 0.0
        %2062 = vmatprep.subr.mxu0 0.0
        %2063 = vmatpush1.msra.mxu0 0.0
        %2064 = vmatprep.subr.mxu0 0.0
        %2065 = vmatpush1.msra.mxu0 0.0
        %2066 = vmatprep.subr.mxu0 0.0
        %2067 = vmatpush1.msra.mxu0 0.0
        %2068 = vmatprep.subr.mxu0 0.0
        %2069 = vmatpush1.msra.mxu0 0.0
        %2070 = vmatprep.subr.mxu0 0.0
        %2071 = vmatpush1.msra.mxu0 0.0
        %2072 = vmatprep.subr.mxu0 0.0
        %2073 = vmatpush1.msra.mxu0 0.0
        %2074 = vmatprep.subr.mxu0 0.0
        %2075 = vmatpush1.msra.mxu0 0.0
        %2076 = vmatprep.subr.mxu0 0.0
        %2077 = vmatpush1.msra.mxu0 0.0
        %2078 = vmatprep.subr.mxu0 0.0
        %2079 = vmatpush1.msra.mxu0 0.0
        %2080 = vmatprep.subr.mxu0 0.0
        %2081 = vmatpush1.msra.mxu0 0.0
        %2082 = vmatprep.subr.mxu0 0.0
        %2083 = vmatpush1.msra.mxu0 0.0
        %2084 = vmatprep.subr.mxu0 0.0
        %2085 = vmatpush1.msra.mxu0 0.0
        %2086 = vmatprep.subr.mxu0 0.0
        %2087 = vmatpush1.msra.mxu0 0.0
        %2088 = vmatprep.subr.mxu0 0.0
        %2089 = vmatpush1.msra.mxu0 0.0
        %2090 = vmatprep.subr.mxu0 0.0
        %2091 = vmatpush1.msra.mxu0 0.0
        %2092 = vmatprep.subr.mxu0 0.0
        %2093 = vmatpush1.msra.mxu0 0.0
        %2094 = vmatprep.subr.mxu0 0.0
        %2095 = vmatpush1.msra.mxu0 0.0
        %2096 = vmatprep.subr.mxu0 0.0
        %2097 = vmatpush1.msra.mxu0 0.0
        %2098 = vmatprep.subr.mxu0 0.0
        %2099 = vmatpush1.msra.mxu0 0.0
        %2100 = vmatprep.mubr.f32.mxu0 0.0
        %2101 = vmatmul.mubr.f32.gmra.mrb[0].mxu0 %v2013
        %v2102 = vpop.f32.mrb[0].mxu0
        %v2103 = vadd.f32 0.0, %v2102
        %v2104 = vpop.f32.mrb[0].mxu0
        %2105 = vmatprep.mubr.f32.mxu0 0.0
        %2106 = vmatmul.mubr.f32.gmra.mrb[0].mxu0 %v2016
        %v2107 = vpop.f32.mrb[0].mxu0
        %v2108 = vadd.f32 0.0, %v2107
        %v2109 = vpop.f32.mrb[0].mxu0
        %2110 = vmatprep.mubr.f32.mxu0 0.0
        %2111 = vmatmul.mubr.f32.gmra.mrb[0].mxu0 %v2019
        %v2112 = vpop.f32.mrb[0].mxu0
        %v2113 = vadd.f32 0.0, %v2112
        %v2114 = vpop.f32.mrb[0].mxu0
        %2115 = vmatprep.mubr.f32.mxu0 0.0
        %2116 = vmatmul.mubr.f32.gmra.mrb[0].mxu0 %v2022
        %v2117 = vpop.f32.mrb[0].mxu0
        %v2118 = vadd.f32 0.0, %v2117
        %v2119 = vpop.f32.mrb[0].mxu0
        %2120 = vmatprep.mubr.f32.mxu0 0.0
        %2121 = vmatmul.mubr.f32.gmra.mrb[0].mxu0 %v2025
        %v2122 = vpop.f32.mrb[0].mxu0
        %v2123 = vadd.f32 0.0, %v2122
        %v2124 = vpop.f32.mrb[0].mxu0
        %2125 = vmatprep.mubr.f32.mxu0 0.0
        %2126 = vmatmul.mubr.f32.gmra.mrb[0].mxu0 %v2028
        %v2127 = vpop.f32.mrb[0].mxu0
        %v2128 = vadd.f32 0.0, %v2127
        %v2129 = vpop.f32.mrb[0].mxu0
        %2130 = vmatprep.mubr.f32.mxu0 0.0
        %2131 = vmatmul.mubr.f32.gmra.mrb[0].mxu0 %v2031
        %v2132 = vpop.f32.mrb[0].mxu0
        %v2133 = vadd.f32 0.0, %v2132
        %v2134 = vpop.f32.mrb[0].mxu0
        %2135 = vmatprep.mubr.f32.mxu0 0.0
        %2136 = vmatmul.mubr.f32.gmra.mrb[0].mxu0 %v2034
        %v2137 = vpop.f32.mrb[0].mxu0
        %v2138 = vadd.f32 0.0, %v2137
        %v2139 = vpop.f32.mrb[0].mxu0
        %2140 = vdwg.mxu0
        %2141 = vrot.lane.b32.xlu0 %v701, 64
        %v2142 = vpop.permute.xlu0 %2141
        %2143 = vrot.lane.b32.xlu0 %v703, 64
        %v2144 = vpop.permute.xlu0 %2143
        %2145 = vrot.lane.b32.xlu0 %v705, 64
        %v2146 = vpop.permute.xlu0 %2145
        %2147 = vrot.lane.b32.xlu0 %v707, 64
        %v2148 = vpop.permute.xlu0 %2147
        %2149 = vrot.lane.b32.xlu0 %v709, 64
        %v2150 = vpop.permute.xlu0 %2149
        %2151 = vrot.lane.b32.xlu0 %v711, 64
        %v2152 = vpop.permute.xlu0 %2151
        %2153 = vrot.lane.b32.xlu0 %v713, 64
        %v2154 = vpop.permute.xlu0 %2153
        %2155 = vrot.lane.b32.xlu0 %v715, 64
        %v2156 = vpop.permute.xlu0 %2155
        %v2166 = vsel %vm1329, %v1674, 0
        %v2169 = vsel %vm1329, %v1675, 0
        %v2172 = vsel %vm1329, %v1676, 0
        %v2175 = vsel %vm1329, %v1677, 0
        %v2178 = vsel %vm1329, %v1678, 0
        %v2181 = vsel %vm1329, %v1679, 0
        %v2184 = vsel %vm1329, %v1680, 0
        %v2187 = vsel %vm1329, %v1681, 0
        %2189 = vmatprep.subr.mxu0 0.0
        %2190 = vmatpush1.msra.mxu0 %v2142
        %2191 = vmatprep.subr.mxu0 0.0
        %2192 = vmatpush1.msra.mxu0 %v2144
        %2193 = vmatprep.subr.mxu0 0.0
        %2194 = vmatpush1.msra.mxu0 %v2146
        %2195 = vmatprep.subr.mxu0 0.0
        %2196 = vmatpush1.msra.mxu0 %v2148
        %2197 = vmatprep.subr.mxu0 0.0
        %2198 = vmatpush1.msra.mxu0 %v2150
        %2199 = vmatprep.subr.mxu0 0.0
        %2200 = vmatpush1.msra.mxu0 %v2152
        %2201 = vmatprep.subr.mxu0 0.0
        %2202 = vmatpush1.msra.mxu0 %v2154
        %2203 = vmatprep.subr.mxu0 0.0
        %2204 = vmatpush1.msra.mxu0 %v2156
        %2205 = vmatprep.subr.mxu0 0.0
        %2206 = vmatpush1.msra.mxu0 0.0
        %2207 = vmatprep.subr.mxu0 0.0
        %2208 = vmatpush1.msra.mxu0 0.0
        %2209 = vmatprep.subr.mxu0 0.0
        %2210 = vmatpush1.msra.mxu0 0.0
        %2211 = vmatprep.subr.mxu0 0.0
        %2212 = vmatpush1.msra.mxu0 0.0
        %2213 = vmatprep.subr.mxu0 0.0
        %2214 = vmatpush1.msra.mxu0 0.0
        %2215 = vmatprep.subr.mxu0 0.0
        %2216 = vmatpush1.msra.mxu0 0.0
        %2217 = vmatprep.subr.mxu0 0.0
        %2218 = vmatpush1.msra.mxu0 0.0
        %2219 = vmatprep.subr.mxu0 0.0
        %2220 = vmatpush1.msra.mxu0 0.0
        %2221 = vmatprep.subr.mxu0 0.0
        %2222 = vmatpush1.msra.mxu0 0.0
        %2223 = vmatprep.subr.mxu0 0.0
        %2224 = vmatpush1.msra.mxu0 0.0
        %2225 = vmatprep.subr.mxu0 0.0
        %2226 = vmatpush1.msra.mxu0 0.0
        %2227 = vmatprep.subr.mxu0 0.0
        %2228 = vmatpush1.msra.mxu0 0.0
        %2229 = vmatprep.subr.mxu0 0.0
        %2230 = vmatpush1.msra.mxu0 0.0
        %2231 = vmatprep.subr.mxu0 0.0
        %2232 = vmatpush1.msra.mxu0 0.0
        %2233 = vmatprep.subr.mxu0 0.0
        %2234 = vmatpush1.msra.mxu0 0.0
        %2235 = vmatprep.subr.mxu0 0.0
        %2236 = vmatpush1.msra.mxu0 0.0
        %2237 = vmatprep.subr.mxu0 0.0
        %2238 = vmatpush1.msra.mxu0 0.0
        %2239 = vmatprep.subr.mxu0 0.0
        %2240 = vmatpush1.msra.mxu0 0.0
        %2241 = vmatprep.subr.mxu0 0.0
        %2242 = vmatpush1.msra.mxu0 0.0
        %2243 = vmatprep.subr.mxu0 0.0
        %2244 = vmatpush1.msra.mxu0 0.0
        %2245 = vmatprep.subr.mxu0 0.0
        %2246 = vmatpush1.msra.mxu0 0.0
        %2247 = vmatprep.subr.mxu0 0.0
        %2248 = vmatpush1.msra.mxu0 0.0
        %2249 = vmatprep.subr.mxu0 0.0
        %2250 = vmatpush1.msra.mxu0 0.0
        %2251 = vmatprep.subr.mxu0 0.0
        %2252 = vmatpush1.msra.mxu0 0.0
        %2253 = vmatprep.mubr.f32.mxu0 0.0
        %2254 = vmatmul.mubr.f32.gmra.mrb[0].mxu0 %v2166
        %v2255 = vpop.f32.mrb[0].mxu0
        %v2256 = vadd.f32 0.0, %v2255
        %v2257 = vpop.f32.mrb[0].mxu0
        %2258 = vmatprep.mubr.f32.mxu0 0.0
        %2259 = vmatmul.mubr.f32.gmra.mrb[0].mxu0 %v2169
        %v2260 = vpop.f32.mrb[0].mxu0
        %v2261 = vadd.f32 0.0, %v2260
        %v2262 = vpop.f32.mrb[0].mxu0
        %2263 = vmatprep.mubr.f32.mxu0 0.0
        %2264 = vmatmul.mubr.f32.gmra.mrb[0].mxu0 %v2172
        %v2265 = vpop.f32.mrb[0].mxu0
        %v2266 = vadd.f32 0.0, %v2265
        %v2267 = vpop.f32.mrb[0].mxu0
        %2268 = vmatprep.mubr.f32.mxu0 0.0
        %2269 = vmatmul.mubr.f32.gmra.mrb[0].mxu0 %v2175
        %v2270 = vpop.f32.mrb[0].mxu0
        %v2271 = vadd.f32 0.0, %v2270
        %v2272 = vpop.f32.mrb[0].mxu0
        %2273 = vmatprep.mubr.f32.mxu0 0.0
        %2274 = vmatmul.mubr.f32.gmra.mrb[0].mxu0 %v2178
        %v2275 = vpop.f32.mrb[0].mxu0
        %v2276 = vadd.f32 0.0, %v2275
        %v2277 = vpop.f32.mrb[0].mxu0
        %2278 = vmatprep.mubr.f32.mxu0 0.0
        %2279 = vmatmul.mubr.f32.gmra.mrb[0].mxu0 %v2181
        %v2280 = vpop.f32.mrb[0].mxu0
        %v2281 = vadd.f32 0.0, %v2280
        %v2282 = vpop.f32.mrb[0].mxu0
        %2283 = vmatprep.mubr.f32.mxu0 0.0
        %2284 = vmatmul.mubr.f32.gmra.mrb[0].mxu0 %v2184
        %v2285 = vpop.f32.mrb[0].mxu0
        %v2286 = vadd.f32 0.0, %v2285
        %v2287 = vpop.f32.mrb[0].mxu0
        %2288 = vmatprep.mubr.f32.mxu0 0.0
        %2289 = vmatmul.mubr.f32.gmra.mrb[0].mxu0 %v2187
        %v2290 = vpop.f32.mrb[0].mxu0
        %v2291 = vadd.f32 0.0, %v2290
        %v2292 = vpop.f32.mrb[0].mxu0
        %2293 = vdwg.mxu0
        %2302 = vrot.lane.b32.xlu0 %v1950, 8
        %v2303 = vpop.permute.xlu0 %2302
        %2304 = vrot.lane.b32.xlu0 %v1955, 8
        %v2305 = vpop.permute.xlu0 %2304
        %2306 = vrot.lane.b32.xlu0 %v1960, 8
        %v2307 = vpop.permute.xlu0 %2306
        %2308 = vrot.lane.b32.xlu0 %v1965, 8
        %v2309 = vpop.permute.xlu0 %2308
        %2310 = vrot.lane.b32.xlu0 %v1970, 8
        %v2311 = vpop.permute.xlu0 %2310
        %2312 = vrot.lane.b32.xlu0 %v1975, 8
        %v2313 = vpop.permute.xlu0 %2312
        %2314 = vrot.lane.b32.xlu0 %v1980, 8
        %v2315 = vpop.permute.xlu0 %2314
        %2316 = vrot.lane.b32.xlu0 %v1985, 8
        %v2317 = vpop.permute.xlu0 %2316
        %2334 = vrot.lane.b32.xlu0 %v2103, 16
        %v2335 = vpop.permute.xlu0 %2334
        %2336 = vrot.lane.b32.xlu0 %v2108, 16
        %v2337 = vpop.permute.xlu0 %2336
        %2338 = vrot.lane.b32.xlu0 %v2113, 16
        %v2339 = vpop.permute.xlu0 %2338
        %2340 = vrot.lane.b32.xlu0 %v2118, 16
        %v2341 = vpop.permute.xlu0 %2340
        %2342 = vrot.lane.b32.xlu0 %v2123, 16
        %v2343 = vpop.permute.xlu0 %2342
        %2344 = vrot.lane.b32.xlu0 %v2128, 16
        %v2345 = vpop.permute.xlu0 %2344
        %2346 = vrot.lane.b32.xlu0 %v2133, 16
        %v2347 = vpop.permute.xlu0 %2346
        %2348 = vrot.lane.b32.xlu0 %v2138, 16
        %v2349 = vpop.permute.xlu0 %2348
        %2366 = vrot.lane.b32.xlu0 %v2256, 24
        %v2367 = vpop.permute.xlu0 %2366
        %2368 = vrot.lane.b32.xlu0 %v2261, 24
        %v2369 = vpop.permute.xlu0 %2368
        %2370 = vrot.lane.b32.xlu0 %v2266, 24
        %v2371 = vpop.permute.xlu0 %2370
        %2372 = vrot.lane.b32.xlu0 %v2271, 24
        %v2373 = vpop.permute.xlu0 %2372
        %2374 = vrot.lane.b32.xlu0 %v2276, 24
        %v2375 = vpop.permute.xlu0 %2374
        %2376 = vrot.lane.b32.xlu0 %v2281, 24
        %v2377 = vpop.permute.xlu0 %2376
        %2378 = vrot.lane.b32.xlu0 %v2286, 24
        %v2379 = vpop.permute.xlu0 %2378
        %2380 = vrot.lane.b32.xlu0 %v2291, 24
        %v2381 = vpop.permute.xlu0 %2380
        %v2390 = vsel %vm732, %v1797, %v2303
        %v2391 = vsel %vm732, %v1802, %v2305
        %v2392 = vsel %vm732, %v1807, %v2307
        %v2393 = vsel %vm732, %v1812, %v2309
        %v2394 = vsel %vm732, %v1817, %v2311
        %v2395 = vsel %vm732, %v1822, %v2313
        %v2396 = vsel %vm732, %v1827, %v2315
        %v2397 = vsel %vm732, %v1832, %v2317
        %vm2398 = vcmask 130048
        %v2399 = vsel %vm2398, %v2390, %v2335
        %v2400 = vsel %vm2398, %v2391, %v2337
        %v2401 = vsel %vm2398, %v2392, %v2339
        %v2402 = vsel %vm2398, %v2393, %v2341
        %v2403 = vsel %vm2398, %v2394, %v2343
        %v2404 = vsel %vm2398, %v2395, %v2345
        %v2405 = vsel %vm2398, %v2396, %v2347
        %v2406 = vsel %vm2398, %v2397, %v2349
        %vm2407 = vcmask 195584
        %v2408 = vsel %vm2407, %v2399, %v2367
        %v2409 = vsel %vm2407, %v2400, %v2369
        %v2410 = vsel %vm2407, %v2401, %v2371
        %v2411 = vsel %vm2407, %v2402, %v2373
        %v2412 = vsel %vm2407, %v2403, %v2375
        %v2413 = vsel %vm2407, %v2404, %v2377
        %v2414 = vsel %vm2407, %v2405, %v2379
        %v2415 = vsel %vm2407, %v2406, %v2381
        %v2416 = vld [vmem:[#allocation3] sm:$0xff]
        %v2417 = vld [vmem:[#allocation3 + $0x8] sm:$0xff]
        %v2418 = vld [vmem:[#allocation3 + $0x10] sm:$0xff]
        %v2419 = vld [vmem:[#allocation3 + $0x18] sm:$0xff]
        %v2420 = vld [vmem:[%s4] sm:$0x1]
        %v2421 = vlaneseq
        %v2422 = vshrl.u32 %v2421, 7
        %v2423 = vsub.s32 0, %v2422
        %v2424 = vrot.slane %v2420, %v2423
        %v2426 = vsel %vm530, %v2408, 0
        %v2429 = vsel %vm530, %v2409, 0
        %v2432 = vsel %vm530, %v2410, 0
        %v2435 = vsel %vm530, %v2411, 0
        %v2438 = vsel %vm530, %v2412, 0
        %v2441 = vsel %vm530, %v2413, 0
        %v2444 = vsel %vm530, %v2414, 0
        %v2447 = vsel %vm530, %v2415, 0
        %2449 = vmatprep.subr.mxu0 0.0
        %2450 = vmatpush1.msra.mxu0 %v2416
        %2451 = vmatprep.subr.mxu0 0.0
        %2452 = vmatpush1.msra.mxu0 %v2417
        %2453 = vmatprep.subr.mxu0 0.0
        %2454 = vmatpush1.msra.mxu0 %v2418
        %2455 = vmatprep.subr.mxu0 0.0
        %2456 = vmatpush1.msra.mxu0 %v2419
        %2457 = vmatprep.subr.mxu0 0.0
        %2458 = vmatpush1.msra.mxu0 0.0
        %2459 = vmatprep.subr.mxu0 0.0
        %2460 = vmatpush1.msra.mxu0 0.0
        %2461 = vmatprep.subr.mxu0 0.0
        %2462 = vmatpush1.msra.mxu0 0.0
        %2463 = vmatprep.subr.mxu0 0.0
        %2464 = vmatpush1.msra.mxu0 0.0
        %2465 = vmatprep.subr.mxu0 0.0
        %2466 = vmatpush1.msra.mxu0 0.0
        %2467 = vmatprep.subr.mxu0 0.0
        %2468 = vmatpush1.msra.mxu0 0.0
        %2469 = vmatprep.subr.mxu0 0.0
        %2470 = vmatpush1.msra.mxu0 0.0
        %2471 = vmatprep.subr.mxu0 0.0
        %2472 = vmatpush1.msra.mxu0 0.0
        %2473 = vmatprep.subr.mxu0 0.0
        %2474 = vmatpush1.msra.mxu0 0.0
        %2475 = vmatprep.subr.mxu0 0.0
        %2476 = vmatpush1.msra.mxu0 0.0
        %2477 = vmatprep.subr.mxu0 0.0
        %2478 = vmatpush1.msra.mxu0 0.0
        %2479 = vmatprep.subr.mxu0 0.0
        %2480 = vmatpush1.msra.mxu0 0.0
        %2481 = vmatprep.subr.mxu0 0.0
        %2482 = vmatpush1.msra.mxu0 0.0
        %2483 = vmatprep.subr.mxu0 0.0
        %2484 = vmatpush1.msra.mxu0 0.0
        %2485 = vmatprep.subr.mxu0 0.0
        %2486 = vmatpush1.msra.mxu0 0.0
        %2487 = vmatprep.subr.mxu0 0.0
        %2488 = vmatpush1.msra.mxu0 0.0
        %2489 = vmatprep.subr.mxu0 0.0
        %2490 = vmatpush1.msra.mxu0 0.0
        %2491 = vmatprep.subr.mxu0 0.0
        %2492 = vmatpush1.msra.mxu0 0.0
        %2493 = vmatprep.subr.mxu0 0.0
        %2494 = vmatpush1.msra.mxu0 0.0
        %2495 = vmatprep.subr.mxu0 0.0
        %2496 = vmatpush1.msra.mxu0 0.0
        %2497 = vmatprep.subr.mxu0 0.0
        %2498 = vmatpush1.msra.mxu0 0.0
        %2499 = vmatprep.subr.mxu0 0.0
        %2500 = vmatpush1.msra.mxu0 0.0
        %2501 = vmatprep.subr.mxu0 0.0
        %2502 = vmatpush1.msra.mxu0 0.0
        %2503 = vmatprep.subr.mxu0 0.0
        %2504 = vmatpush1.msra.mxu0 0.0
        %2505 = vmatprep.subr.mxu0 0.0
        %2506 = vmatpush1.msra.mxu0 0.0
        %2507 = vmatprep.subr.mxu0 0.0
        %2508 = vmatpush1.msra.mxu0 0.0
        %2509 = vmatprep.subr.mxu0 0.0
        %2510 = vmatpush1.msra.mxu0 0.0
        %2511 = vmatprep.subr.mxu0 0.0
        %2512 = vmatpush1.msra.mxu0 0.0
        %2513 = vmatprep.mubr.f32.mxu0 0.0
        %2514 = vmatmul.mubr.f32.gmra.mrb[0].mxu0 %v2426
        %v2515 = vpop.f32.mrb[0].mxu0
        %v2516 = vadd.f32 %v2424, %v2515
        %v2517 = vpop.f32.mrb[0].mxu0
        %2518 = vmatprep.mubr.f32.mxu0 0.0
        %2519 = vmatmul.mubr.f32.gmra.mrb[0].mxu0 %v2429
        %v2520 = vpop.f32.mrb[0].mxu0
        %v2521 = vadd.f32 %v2424, %v2520
        %v2522 = vpop.f32.mrb[0].mxu0
        %2523 = vmatprep.mubr.f32.mxu0 0.0
        %2524 = vmatmul.mubr.f32.gmra.mrb[0].mxu0 %v2432
        %v2525 = vpop.f32.mrb[0].mxu0
        %v2526 = vadd.f32 %v2424, %v2525
        %v2527 = vpop.f32.mrb[0].mxu0
        %2528 = vmatprep.mubr.f32.mxu0 0.0
        %2529 = vmatmul.mubr.f32.gmra.mrb[0].mxu0 %v2435
        %v2530 = vpop.f32.mrb[0].mxu0
        %v2531 = vadd.f32 %v2424, %v2530
        %v2532 = vpop.f32.mrb[0].mxu0
        %2533 = vmatprep.mubr.f32.mxu0 0.0
        %2534 = vmatmul.mubr.f32.gmra.mrb[0].mxu0 %v2438
        %v2535 = vpop.f32.mrb[0].mxu0
        %v2536 = vadd.f32 %v2424, %v2535
        %v2537 = vpop.f32.mrb[0].mxu0
        %2538 = vmatprep.mubr.f32.mxu0 0.0
        %2539 = vmatmul.mubr.f32.gmra.mrb[0].mxu0 %v2441
        %v2540 = vpop.f32.mrb[0].mxu0
        %v2541 = vadd.f32 %v2424, %v2540
        %v2542 = vpop.f32.mrb[0].mxu0
        %2543 = vmatprep.mubr.f32.mxu0 0.0
        %2544 = vmatmul.mubr.f32.gmra.mrb[0].mxu0 %v2444
        %v2545 = vpop.f32.mrb[0].mxu0
        %v2546 = vadd.f32 %v2424, %v2545
        %v2547 = vpop.f32.mrb[0].mxu0
        %2548 = vmatprep.mubr.f32.mxu0 0.0
        %2549 = vmatmul.mubr.f32.gmra.mrb[0].mxu0 %v2447
        %v2550 = vpop.f32.mrb[0].mxu0
        %v2551 = vadd.f32 %v2424, %v2550
        %v2552 = vpop.f32.mrb[0].mxu0
        %2553 = vdwg.mxu0
        %v2554 = vadd.f32 %v477, %v2516
        %v2555 = vadd.f32 %v478, %v2521
        %v2556 = vadd.f32 %v479, %v2526
        %v2557 = vadd.f32 %v480, %v2531
        %v2558 = vadd.f32 %v481, %v2536
        %v2559 = vadd.f32 %v482, %v2541
        %v2560 = vadd.f32 %v483, %v2546
        %v2561 = vadd.f32 %v484, %v2551
        %v2562 = vld [vmem:[%s9] sm:$0x1]
        %v2563 = vld [vmem:[%s10] sm:$0x1]
        %v2564 = vsel %vm530, %v2554, 0.0
        %2565 = vadd.xlane.f32.xlu0 %v2564
        %v2566 = vpop.xlane.xlu0 %2565
        %v2567 = vsel %vm530, %v2555, 0.0
        %2568 = vadd.xlane.f32.xlu0 %v2567
        %v2569 = vpop.xlane.xlu0 %2568
        %v2570 = vsel %vm530, %v2556, 0.0
        %2571 = vadd.xlane.f32.xlu0 %v2570
        %v2572 = vpop.xlane.xlu0 %2571
        %v2573 = vsel %vm530, %v2557, 0.0
        %2574 = vadd.xlane.f32.xlu0 %v2573
        %v2575 = vpop.xlane.xlu0 %2574
        %v2576 = vsel %vm530, %v2558, 0.0
        %2577 = vadd.xlane.f32.xlu0 %v2576
        %v2578 = vpop.xlane.xlu0 %2577
        %v2579 = vsel %vm530, %v2559, 0.0
        %2580 = vadd.xlane.f32.xlu0 %v2579
        %v2581 = vpop.xlane.xlu0 %2580
        %v2582 = vsel %vm530, %v2560, 0.0
        %2583 = vadd.xlane.f32.xlu0 %v2582
        %v2584 = vpop.xlane.xlu0 %2583
        %v2585 = vsel %vm530, %v2561, 0.0
        %2586 = vadd.xlane.f32.xlu0 %v2585
        %v2587 = vpop.xlane.xlu0 %2586
        %v2588 = vrcp.pop 32.0
        %v2589 = vmul.f32 %v2566, %v2588
        %v2590 = vmul.f32 %v2569, %v2588
        %v2591 = vmul.f32 %v2572, %v2588
        %v2592 = vmul.f32 %v2575, %v2588
        %v2593 = vmul.f32 %v2578, %v2588
        %v2594 = vmul.f32 %v2581, %v2588
        %v2595 = vmul.f32 %v2584, %v2588
        %v2596 = vmul.f32 %v2587, %v2588
        %v2597 = vsub.f32 %v2554, %v2589
        %v2598 = vsub.f32 %v2555, %v2590
        %v2599 = vsub.f32 %v2556, %v2591
        %v2600 = vsub.f32 %v2557, %v2592
        %v2601 = vsub.f32 %v2558, %v2593
        %v2602 = vsub.f32 %v2559, %v2594
        %v2603 = vsub.f32 %v2560, %v2595
        %v2604 = vsub.f32 %v2561, %v2596
        %v2605 = vmul.f32 %v2597, %v2597
        %v2606 = vmul.f32 %v2598, %v2598
        %v2607 = vmul.f32 %v2599, %v2599
        %v2608 = vmul.f32 %v2600, %v2600
        %v2609 = vmul.f32 %v2601, %v2601
        %v2610 = vmul.f32 %v2602, %v2602
        %v2611 = vmul.f32 %v2603, %v2603
        %v2612 = vmul.f32 %v2604, %v2604
        %v2613 = vsel %vm530, %v2605, 0.0
        %2614 = vadd.xlane.f32.xlu0 %v2613
        %v2615 = vpop.xlane.xlu0 %2614
        %v2616 = vsel %vm530, %v2606, 0.0
        %2617 = vadd.xlane.f32.xlu0 %v2616
        %v2618 = vpop.xlane.xlu0 %2617
        %v2619 = vsel %vm530, %v2607, 0.0
        %2620 = vadd.xlane.f32.xlu0 %v2619
        %v2621 = vpop.xlane.xlu0 %2620
        %v2622 = vsel %vm530, %v2608, 0.0
        %2623 = vadd.xlane.f32.xlu0 %v2622
        %v2624 = vpop.xlane.xlu0 %2623
        %v2625 = vsel %vm530, %v2609, 0.0
        %2626 = vadd.xlane.f32.xlu0 %v2625
        %v2627 = vpop.xlane.xlu0 %2626
        %v2628 = vsel %vm530, %v2610, 0.0
        %2629 = vadd.xlane.f32.xlu0 %v2628
        %v2630 = vpop.xlane.xlu0 %2629
        %v2631 = vsel %vm530, %v2611, 0.0
        %2632 = vadd.xlane.f32.xlu0 %v2631
        %v2633 = vpop.xlane.xlu0 %2632
        %v2634 = vsel %vm530, %v2612, 0.0
        %2635 = vadd.xlane.f32.xlu0 %v2634
        %v2636 = vpop.xlane.xlu0 %2635
        %v2637 = vmul.f32 %v2615, %v2588
        %v2638 = vmul.f32 %v2618, %v2588
        %v2639 = vmul.f32 %v2621, %v2588
        %v2640 = vmul.f32 %v2624, %v2588
        %v2641 = vmul.f32 %v2627, %v2588
        %v2642 = vmul.f32 %v2630, %v2588
        %v2643 = vmul.f32 %v2633, %v2588
        %v2644 = vmul.f32 %v2636, %v2588
        %v2645 = vadd.f32 %v2637, 1e-05
        %v2646 = vadd.f32 %v2638, 1e-05
        %v2647 = vadd.f32 %v2639, 1e-05
        %v2648 = vadd.f32 %v2640, 1e-05
        %v2649 = vadd.f32 %v2641, 1e-05
        %v2650 = vadd.f32 %v2642, 1e-05
        %v2651 = vadd.f32 %v2643, 1e-05
        %v2652 = vadd.f32 %v2644, 1e-05
        %v2653 = vrsqrt.pop %v2645
        %v2654 = vrsqrt.pop %v2646
        %v2655 = vrsqrt.pop %v2647
        %v2656 = vrsqrt.pop %v2648
        %v2657 = vrsqrt.pop %v2649
        %v2658 = vrsqrt.pop %v2650
        %v2659 = vrsqrt.pop %v2651
        %v2660 = vrsqrt.pop %v2652
        %v2661 = vmul.f32 %v2597, %v2653
        %v2662 = vmul.f32 %v2598, %v2654
        %v2663 = vmul.f32 %v2599, %v2655
        %v2664 = vmul.f32 %v2600, %v2656
        %v2665 = vmul.f32 %v2601, %v2657
        %v2666 = vmul.f32 %v2602, %v2658
        %v2667 = vmul.f32 %v2603, %v2659
        %v2668 = vmul.f32 %v2604, %v2660
        %v2669 = vlaneseq
        %v2670 = vshrl.u32 %v2669, 7
        %v2671 = vsub.s32 0, %v2670
        %v2672 = vrot.slane %v2562, %v2671
        %v2673 = vmul.f32 %v2661, %v2672
        %v2674 = vmul.f32 %v2662, %v2672
        %v2675 = vmul.f32 %v2663, %v2672
        %v2676 = vmul.f32 %v2664, %v2672
        %v2677 = vmul.f32 %v2665, %v2672
        %v2678 = vmul.f32 %v2666, %v2672
        %v2679 = vmul.f32 %v2667, %v2672
        %v2680 = vmul.f32 %v2668, %v2672
        %v2681 = vlaneseq
        %v2682 = vshrl.u32 %v2681, 7
        %v2683 = vsub.s32 0, %v2682
        %v2684 = vrot.slane %v2563, %v2683
        %v2685 = vadd.f32 %v2673, %v2684
        %v2686 = vadd.f32 %v2674, %v2684
        %v2687 = vadd.f32 %v2675, %v2684
        %v2688 = vadd.f32 %v2676, %v2684
        %v2689 = vadd.f32 %v2677, %v2684
        %v2690 = vadd.f32 %v2678, %v2684
        %v2691 = vadd.f32 %v2679, %v2684
        %v2692 = vadd.f32 %v2680, %v2684
        %v2693 = vld [vmem:[#allocation6] sm:$0xff]
        %v2694 = vld [vmem:[#allocation6 + $0x8] sm:$0xff]
        %v2695 = vld [vmem:[#allocation6 + $0x10] sm:$0xff]
        %v2696 = vld [vmem:[#allocation6 + $0x18] sm:$0xff]
        %v2697 = vld [vmem:[%s6] sm:$0x1]
        %v2698 = vlaneseq
        %v2699 = vshrl.u32 %v2698, 7
        %v2700 = vsub.s32 0, %v2699
        %v2701 = vrot.slane %v2697, %v2700
        %v2703 = vsel %vm530, %v2685, 0
        %v2706 = vsel %vm530, %v2686, 0
        %v2709 = vsel %vm530, %v2687, 0
        %v2712 = vsel %vm530, %v2688, 0
        %v2715 = vsel %vm530, %v2689, 0
        %v2718 = vsel %vm530, %v2690, 0
        %v2721 = vsel %vm530, %v2691, 0
        %v2724 = vsel %vm530, %v2692, 0
        %2726 = vmatprep.subr.mxu0 0.0
        %2727 = vmatpush1.msra.mxu0 %v2693
        %2728 = vmatprep.subr.mxu0 0.0
        %2729 = vmatpush1.msra.mxu0 %v2694
        %2730 = vmatprep.subr.mxu0 0.0
        %2731 = vmatpush1.msra.mxu0 %v2695
        %2732 = vmatprep.subr.mxu0 0.0
        %2733 = vmatpush1.msra.mxu0 %v2696
        %2734 = vmatprep.subr.mxu0 0.0
        %2735 = vmatpush1.msra.mxu0 0.0
        %2736 = vmatprep.subr.mxu0 0.0
        %2737 = vmatpush1.msra.mxu0 0.0
        %2738 = vmatprep.subr.mxu0 0.0
        %2739 = vmatpush1.msra.mxu0 0.0
        %2740 = vmatprep.subr.mxu0 0.0
        %2741 = vmatpush1.msra.mxu0 0.0
        %2742 = vmatprep.subr.mxu0 0.0
        %2743 = vmatpush1.msra.mxu0 0.0
        %2744 = vmatprep.subr.mxu0 0.0
        %2745 = vmatpush1.msra.mxu0 0.0
        %2746 = vmatprep.subr.mxu0 0.0
        %2747 = vmatpush1.msra.mxu0 0.0
        %2748 = vmatprep.subr.mxu0 0.0
        %2749 = vmatpush1.msra.mxu0 0.0
        %2750 = vmatprep.subr.mxu0 0.0
        %2751 = vmatpush1.msra.mxu0 0.0
        %2752 = vmatprep.subr.mxu0 0.0
        %2753 = vmatpush1.msra.mxu0 0.0
        %2754 = vmatprep.subr.mxu0 0.0
        %2755 = vmatpush1.msra.mxu0 0.0
        %2756 = vmatprep.subr.mxu0 0.0
        %2757 = vmatpush1.msra.mxu0 0.0
        %2758 = vmatprep.subr.mxu0 0.0
        %2759 = vmatpush1.msra.mxu0 0.0
        %2760 = vmatprep.subr.mxu0 0.0
        %2761 = vmatpush1.msra.mxu0 0.0
        %2762 = vmatprep.subr.mxu0 0.0
        %2763 = vmatpush1.msra.mxu0 0.0
        %2764 = vmatprep.subr.mxu0 0.0
        %2765 = vmatpush1.msra.mxu0 0.0
        %2766 = vmatprep.subr.mxu0 0.0
        %2767 = vmatpush1.msra.mxu0 0.0
        %2768 = vmatprep.subr.mxu0 0.0
        %2769 = vmatpush1.msra.mxu0 0.0
        %2770 = vmatprep.subr.mxu0 0.0
        %2771 = vmatpush1.msra.mxu0 0.0
        %2772 = vmatprep.subr.mxu0 0.0
        %2773 = vmatpush1.msra.mxu0 0.0
        %2774 = vmatprep.subr.mxu0 0.0
        %2775 = vmatpush1.msra.mxu0 0.0
        %2776 = vmatprep.subr.mxu0 0.0
        %2777 = vmatpush1.msra.mxu0 0.0
        %2778 = vmatprep.subr.mxu0 0.0
        %2779 = vmatpush1.msra.mxu0 0.0
        %2780 = vmatprep.subr.mxu0 0.0
        %2781 = vmatpush1.msra.mxu0 0.0
        %2782 = vmatprep.subr.mxu0 0.0
        %2783 = vmatpush1.msra.mxu0 0.0
        %2784 = vmatprep.subr.mxu0 0.0
        %2785 = vmatpush1.msra.mxu0 0.0
        %2786 = vmatprep.subr.mxu0 0.0
        %2787 = vmatpush1.msra.mxu0 0.0
        %2788 = vmatprep.subr.mxu0 0.0
        %2789 = vmatpush1.msra.mxu0 0.0
        %2790 = vmatprep.mubr.f32.mxu0 0.0
        %2791 = vmatmul.mubr.f32.gmra.mrb[0].mxu0 %v2703
        %v2792 = vpop.f32.mrb[0].mxu0
        %v2793 = vadd.f32 %v2701, %v2792
        %v2794 = vpop.f32.mrb[0].mxu0
        %2795 = vmatprep.mubr.f32.mxu0 0.0
        %2796 = vmatmul.mubr.f32.gmra.mrb[0].mxu0 %v2706
        %v2797 = vpop.f32.mrb[0].mxu0
        %v2798 = vadd.f32 %v2701, %v2797
        %v2799 = vpop.f32.mrb[0].mxu0
        %2800 = vmatprep.mubr.f32.mxu0 0.0
        %2801 = vmatmul.mubr.f32.gmra.mrb[0].mxu0 %v2709
        %v2802 = vpop.f32.mrb[0].mxu0
        %v2803 = vadd.f32 %v2701, %v2802
        %v2804 = vpop.f32.mrb[0].mxu0
        %2805 = vmatprep.mubr.f32.mxu0 0.0
        %2806 = vmatmul.mubr.f32.gmra.mrb[0].mxu0 %v2712
        %v2807 = vpop.f32.mrb[0].mxu0
        %v2808 = vadd.f32 %v2701, %v2807
        %v2809 = vpop.f32.mrb[0].mxu0
        %2810 = vmatprep.mubr.f32.mxu0 0.0
        %2811 = vmatmul.mubr.f32.gmra.mrb[0].mxu0 %v2715
        %v2812 = vpop.f32.mrb[0].mxu0
        %v2813 = vadd.f32 %v2701, %v2812
        %v2814 = vpop.f32.mrb[0].mxu0
        %2815 = vmatprep.mubr.f32.mxu0 0.0
        %2816 = vmatmul.mubr.f32.gmra.mrb[0].mxu0 %v2718
        %v2817 = vpop.f32.mrb[0].mxu0
        %v2818 = vadd.f32 %v2701, %v2817
        %v2819 = vpop.f32.mrb[0].mxu0
        %2820 = vmatprep.mubr.f32.mxu0 0.0
        %2821 = vmatmul.mubr.f32.gmra.mrb[0].mxu0 %v2721
        %v2822 = vpop.f32.mrb[0].mxu0
        %v2823 = vadd.f32 %v2701, %v2822
        %v2824 = vpop.f32.mrb[0].mxu0
        %2825 = vmatprep.mubr.f32.mxu0 0.0
        %2826 = vmatmul.mubr.f32.gmra.mrb[0].mxu0 %v2724
        %v2827 = vpop.f32.mrb[0].mxu0
        %v2828 = vadd.f32 %v2701, %v2827
        %v2829 = vpop.f32.mrb[0].mxu0
        %2830 = vdwg.mxu0
        %v2831 = vmax.f32 %v2793, 0.0
        %v2832 = vmax.f32 %v2798, 0.0
        %v2833 = vmax.f32 %v2803, 0.0
        %v2834 = vmax.f32 %v2808, 0.0
        %v2835 = vmax.f32 %v2813, 0.0
        %v2836 = vmax.f32 %v2818, 0.0
        %v2837 = vmax.f32 %v2823, 0.0
        %v2838 = vmax.f32 %v2828, 0.0
        %v2839 = vld [vmem:[%s7] sm:$0xff]
        %v2840 = vld [vmem:[%s7 + $0x8] sm:$0xff]
        %v2841 = vld [vmem:[%s7 + $0x10] sm:$0xff]
        %v2842 = vld [vmem:[%s7 + $0x18] sm:$0xff]
        %v2843 = vld [vmem:[%s7 + $0x20] sm:$0xff]
        %v2844 = vld [vmem:[%s7 + $0x28] sm:$0xff]
        %v2845 = vld [vmem:[%s7 + $0x30] sm:$0xff]
        %v2846 = vld [vmem:[%s7 + $0x38] sm:$0xff]
        %v2847 = vld [vmem:[%s8] sm:$0x1]
        %v2848 = vlaneseq
        %v2849 = vshrl.u32 %v2848, 7
        %v2850 = vsub.s32 0, %v2849
        %v2851 = vrot.slane %v2847, %v2850
        %v2853 = vsel %vm1329, %v2831, 0
        %v2856 = vsel %vm1329, %v2832, 0
        %v2859 = vsel %vm1329, %v2833, 0
        %v2862 = vsel %vm1329, %v2834, 0
        %v2865 = vsel %vm1329, %v2835, 0
        %v2868 = vsel %vm1329, %v2836, 0
        %v2871 = vsel %vm1329, %v2837, 0
        %v2874 = vsel %vm1329, %v2838, 0
        %2876 = vmatprep.subr.mxu0 0.0
        %2877 = vmatpush1.msra.mxu0 %v2839
        %2878 = vmatprep.subr.mxu0 0.0
        %2879 = vmatpush1.msra.mxu0 %v2840
        %2880 = vmatprep.subr.mxu0 0.0
        %2881 = vmatpush1.msra.mxu0 %v2841
        %2882 = vmatprep.subr.mxu0 0.0
        %2883 = vmatpush1.msra.mxu0 %v2842
        %2884 = vmatprep.subr.mxu0 0.0
        %2885 = vmatpush1.msra.mxu0 %v2843
        %2886 = vmatprep.subr.mxu0 0.0
        %2887 = vmatpush1.msra.mxu0 %v2844
        %2888 = vmatprep.subr.mxu0 0.0
        %2889 = vmatpush1.msra.mxu0 %v2845
        %2890 = vmatprep.subr.mxu0 0.0
        %2891 = vmatpush1.msra.mxu0 %v2846
        %2892 = vmatprep.subr.mxu0 0.0
        %2893 = vmatpush1.msra.mxu0 0.0
        %2894 = vmatprep.subr.mxu0 0.0
        %2895 = vmatpush1.msra.mxu0 0.0
        %2896 = vmatprep.subr.mxu0 0.0
        %2897 = vmatpush1.msra.mxu0 0.0
        %2898 = vmatprep.subr.mxu0 0.0
        %2899 = vmatpush1.msra.mxu0 0.0
        %2900 = vmatprep.subr.mxu0 0.0
        %2901 = vmatpush1.msra.mxu0 0.0
        %2902 = vmatprep.subr.mxu0 0.0
        %2903 = vmatpush1.msra.mxu0 0.0
        %2904 = vmatprep.subr.mxu0 0.0
        %2905 = vmatpush1.msra.mxu0 0.0
        %2906 = vmatprep.subr.mxu0 0.0
        %2907 = vmatpush1.msra.mxu0 0.0
        %2908 = vmatprep.subr.mxu0 0.0
        %2909 = vmatpush1.msra.mxu0 0.0
        %2910 = vmatprep.subr.mxu0 0.0
        %2911 = vmatpush1.msra.mxu0 0.0
        %2912 = vmatprep.subr.mxu0 0.0
        %2913 = vmatpush1.msra.mxu0 0.0
        %2914 = vmatprep.subr.mxu0 0.0
        %2915 = vmatpush1.msra.mxu0 0.0
        %2916 = vmatprep.subr.mxu0 0.0
        %2917 = vmatpush1.msra.mxu0 0.0
        %2918 = vmatprep.subr.mxu0 0.0
        %2919 = vmatpush1.msra.mxu0 0.0
        %2920 = vmatprep.subr.mxu0 0.0
        %2921 = vmatpush1.msra.mxu0 0.0
        %2922 = vmatprep.subr.mxu0 0.0
        %2923 = vmatpush1.msra.mxu0 0.0
        %2924 = vmatprep.subr.mxu0 0.0
        %2925 = vmatpush1.msra.mxu0 0.0
        %2926 = vmatprep.subr.mxu0 0.0
        %2927 = vmatpush1.msra.mxu0 0.0
        %2928 = vmatprep.subr.mxu0 0.0
        %2929 = vmatpush1.msra.mxu0 0.0
        %2930 = vmatprep.subr.mxu0 0.0
        %2931 = vmatpush1.msra.mxu0 0.0
        %2932 = vmatprep.subr.mxu0 0.0
        %2933 = vmatpush1.msra.mxu0 0.0
        %2934 = vmatprep.subr.mxu0 0.0
        %2935 = vmatpush1.msra.mxu0 0.0
        %2936 = vmatprep.subr.mxu0 0.0
        %2937 = vmatpush1.msra.mxu0 0.0
        %2938 = vmatprep.subr.mxu0 0.0
        %2939 = vmatpush1.msra.mxu0 0.0
        %2940 = vmatprep.mubr.f32.mxu0 0.0
        %2941 = vmatmul.mubr.f32.gmra.mrb[0].mxu0 %v2853
        %v2942 = vpop.f32.mrb[0].mxu0
        %v2943 = vadd.f32 %v2851, %v2942
        %v2944 = vpop.f32.mrb[0].mxu0
        %2945 = vmatprep.mubr.f32.mxu0 0.0
        %2946 = vmatmul.mubr.f32.gmra.mrb[0].mxu0 %v2856
        %v2947 = vpop.f32.mrb[0].mxu0
        %v2948 = vadd.f32 %v2851, %v2947
        %v2949 = vpop.f32.mrb[0].mxu0
        %2950 = vmatprep.mubr.f32.mxu0 0.0
        %2951 = vmatmul.mubr.f32.gmra.mrb[0].mxu0 %v2859
        %v2952 = vpop.f32.mrb[0].mxu0
        %v2953 = vadd.f32 %v2851, %v2952
        %v2954 = vpop.f32.mrb[0].mxu0
        %2955 = vmatprep.mubr.f32.mxu0 0.0
        %2956 = vmatmul.mubr.f32.gmra.mrb[0].mxu0 %v2862
        %v2957 = vpop.f32.mrb[0].mxu0
        %v2958 = vadd.f32 %v2851, %v2957
        %v2959 = vpop.f32.mrb[0].mxu0
        %2960 = vmatprep.mubr.f32.mxu0 0.0
        %2961 = vmatmul.mubr.f32.gmra.mrb[0].mxu0 %v2865
        %v2962 = vpop.f32.mrb[0].mxu0
        %v2963 = vadd.f32 %v2851, %v2962
        %v2964 = vpop.f32.mrb[0].mxu0
        %2965 = vmatprep.mubr.f32.mxu0 0.0
        %2966 = vmatmul.mubr.f32.gmra.mrb[0].mxu0 %v2868
        %v2967 = vpop.f32.mrb[0].mxu0
        %v2968 = vadd.f32 %v2851, %v2967
        %v2969 = vpop.f32.mrb[0].mxu0
        %2970 = vmatprep.mubr.f32.mxu0 0.0
        %2971 = vmatmul.mubr.f32.gmra.mrb[0].mxu0 %v2871
        %v2972 = vpop.f32.mrb[0].mxu0
        %v2973 = vadd.f32 %v2851, %v2972
        %v2974 = vpop.f32.mrb[0].mxu0
        %2975 = vmatprep.mubr.f32.mxu0 0.0
        %2976 = vmatmul.mubr.f32.gmra.mrb[0].mxu0 %v2874
        %v2977 = vpop.f32.mrb[0].mxu0
        %v2978 = vadd.f32 %v2851, %v2977
        %v2979 = vpop.f32.mrb[0].mxu0
        %2980 = vdwg.mxu0
        %v2981 = vadd.f32 %v2685, %v2943
        %v2982 = vadd.f32 %v2686, %v2948
        %v2983 = vadd.f32 %v2687, %v2953
        %v2984 = vadd.f32 %v2688, %v2958
        %v2985 = vadd.f32 %v2689, %v2963
        %v2986 = vadd.f32 %v2690, %v2968
        %v2987 = vadd.f32 %v2691, %v2973
        %v2988 = vadd.f32 %v2692, %v2978
        %v2989 = vld [vmem:[%s9 + $0x1] sm:$0x1]
        %v2990 = vld [vmem:[%s10 + $0x1] sm:$0x1]
        %v2991 = vsel %vm530, %v2981, 0.0
        %2992 = vadd.xlane.f32.xlu0 %v2991
        %v2993 = vpop.xlane.xlu0 %2992
        %v2994 = vsel %vm530, %v2982, 0.0
        %2995 = vadd.xlane.f32.xlu0 %v2994
        %v2996 = vpop.xlane.xlu0 %2995
        %v2997 = vsel %vm530, %v2983, 0.0
        %2998 = vadd.xlane.f32.xlu0 %v2997
        %v2999 = vpop.xlane.xlu0 %2998
        %v3000 = vsel %vm530, %v2984, 0.0
        %3001 = vadd.xlane.f32.xlu0 %v3000
        %v3002 = vpop.xlane.xlu0 %3001
        %v3003 = vsel %vm530, %v2985, 0.0
        %3004 = vadd.xlane.f32.xlu0 %v3003
        %v3005 = vpop.xlane.xlu0 %3004
        %v3006 = vsel %vm530, %v2986, 0.0
        %3007 = vadd.xlane.f32.xlu0 %v3006
        %v3008 = vpop.xlane.xlu0 %3007
        %v3009 = vsel %vm530, %v2987, 0.0
        %3010 = vadd.xlane.f32.xlu0 %v3009
        %v3011 = vpop.xlane.xlu0 %3010
        %v3012 = vsel %vm530, %v2988, 0.0
        %3013 = vadd.xlane.f32.xlu0 %v3012
        %v3014 = vpop.xlane.xlu0 %3013
        %v3015 = vmul.f32 %v2993, %v2588
        %v3016 = vmul.f32 %v2996, %v2588
        %v3017 = vmul.f32 %v2999, %v2588
        %v3018 = vmul.f32 %v3002, %v2588
        %v3019 = vmul.f32 %v3005, %v2588
        %v3020 = vmul.f32 %v3008, %v2588
        %v3021 = vmul.f32 %v3011, %v2588
        %v3022 = vmul.f32 %v3014, %v2588
        %v3023 = vsub.f32 %v2981, %v3015
        %v3024 = vsub.f32 %v2982, %v3016
        %v3025 = vsub.f32 %v2983, %v3017
        %v3026 = vsub.f32 %v2984, %v3018
        %v3027 = vsub.f32 %v2985, %v3019
        %v3028 = vsub.f32 %v2986, %v3020
        %v3029 = vsub.f32 %v2987, %v3021
        %v3030 = vsub.f32 %v2988, %v3022
        %v3031 = vmul.f32 %v3023, %v3023
        %v3032 = vmul.f32 %v3024, %v3024
        %v3033 = vmul.f32 %v3025, %v3025
        %v3034 = vmul.f32 %v3026, %v3026
        %v3035 = vmul.f32 %v3027, %v3027
        %v3036 = vmul.f32 %v3028, %v3028
        %v3037 = vmul.f32 %v3029, %v3029
        %v3038 = vmul.f32 %v3030, %v3030
        %v3039 = vsel %vm530, %v3031, 0.0
        %3040 = vadd.xlane.f32.xlu0 %v3039
        %v3041 = vpop.xlane.xlu0 %3040
        %v3042 = vsel %vm530, %v3032, 0.0
        %3043 = vadd.xlane.f32.xlu0 %v3042
        %v3044 = vpop.xlane.xlu0 %3043
        %v3045 = vsel %vm530, %v3033, 0.0
        %3046 = vadd.xlane.f32.xlu0 %v3045
        %v3047 = vpop.xlane.xlu0 %3046
        %v3048 = vsel %vm530, %v3034, 0.0
        %3049 = vadd.xlane.f32.xlu0 %v3048
        %v3050 = vpop.xlane.xlu0 %3049
        %v3051 = vsel %vm530, %v3035, 0.0
        %3052 = vadd.xlane.f32.xlu0 %v3051
        %v3053 = vpop.xlane.xlu0 %3052
        %v3054 = vsel %vm530, %v3036, 0.0
        %3055 = vadd.xlane.f32.xlu0 %v3054
        %v3056 = vpop.xlane.xlu0 %3055
        %v3057 = vsel %vm530, %v3037, 0.0
        %3058 = vadd.xlane.f32.xlu0 %v3057
        %v3059 = vpop.xlane.xlu0 %3058
        %v3060 = vsel %vm530, %v3038, 0.0
        %3061 = vadd.xlane.f32.xlu0 %v3060
        %v3062 = vpop.xlane.xlu0 %3061
        %v3063 = vmul.f32 %v3041, %v2588
        %v3064 = vmul.f32 %v3044, %v2588
        %v3065 = vmul.f32 %v3047, %v2588
        %v3066 = vmul.f32 %v3050, %v2588
        %v3067 = vmul.f32 %v3053, %v2588
        %v3068 = vmul.f32 %v3056, %v2588
        %v3069 = vmul.f32 %v3059, %v2588
        %v3070 = vmul.f32 %v3062, %v2588
        %v3071 = vadd.f32 %v3063, 1e-05
        %v3072 = vadd.f32 %v3064, 1e-05
        %v3073 = vadd.f32 %v3065, 1e-05
        %v3074 = vadd.f32 %v3066, 1e-05
        %v3075 = vadd.f32 %v3067, 1e-05
        %v3076 = vadd.f32 %v3068, 1e-05
        %v3077 = vadd.f32 %v3069, 1e-05
        %v3078 = vadd.f32 %v3070, 1e-05
        %v3079 = vrsqrt.pop %v3071
        %v3080 = vrsqrt.pop %v3072
        %v3081 = vrsqrt.pop %v3073
        %v3082 = vrsqrt.pop %v3074
        %v3083 = vrsqrt.pop %v3075
        %v3084 = vrsqrt.pop %v3076
        %v3085 = vrsqrt.pop %v3077
        %v3086 = vrsqrt.pop %v3078
        %v3087 = vmul.f32 %v3023, %v3079
        %v3088 = vmul.f32 %v3024, %v3080
        %v3089 = vmul.f32 %v3025, %v3081
        %v3090 = vmul.f32 %v3026, %v3082
        %v3091 = vmul.f32 %v3027, %v3083
        %v3092 = vmul.f32 %v3028, %v3084
        %v3093 = vmul.f32 %v3029, %v3085
        %v3094 = vmul.f32 %v3030, %v3086
        %v3095 = vlaneseq
        %v3096 = vshrl.u32 %v3095, 7
        %v3097 = vsub.s32 0, %v3096
        %v3098 = vrot.slane %v2989, %v3097
        %v3099 = vmul.f32 %v3087, %v3098
        %v3100 = vmul.f32 %v3088, %v3098
        %v3101 = vmul.f32 %v3089, %v3098
        %v3102 = vmul.f32 %v3090, %v3098
        %v3103 = vmul.f32 %v3091, %v3098
        %v3104 = vmul.f32 %v3092, %v3098
        %v3105 = vmul.f32 %v3093, %v3098
        %v3106 = vmul.f32 %v3094, %v3098
        %v3107 = vlaneseq
        %v3108 = vshrl.u32 %v3107, 7
        %v3109 = vsub.s32 0, %v3108
        %v3110 = vrot.slane %v2990, %v3109
        %v3111 = vadd.f32 %v3099, %v3110
        %v3112 = vadd.f32 %v3100, %v3110
        %v3113 = vadd.f32 %v3101, %v3110
        %v3114 = vadd.f32 %v3102, %v3110
        %v3115 = vadd.f32 %v3103, %v3110
        %v3116 = vadd.f32 %v3104, %v3110
        %v3117 = vadd.f32 %v3105, %v3110
        %v3118 = vadd.f32 %v3106, %v3110
        %s3119 = scalar_lea.vmem %s1, 32
        %v3120 = vld [vmem:[%s3119] sm:$0xff]
        %v3121 = vld [vmem:[%s3119 + $0x8] sm:$0xff]
        %v3122 = vld [vmem:[%s3119 + $0x10] sm:$0xff]
        %v3123 = vld [vmem:[%s3119 + $0x18] sm:$0xff]
        %v3124 = vld [vmem:[%s2 + $0x1] sm:$0x1]
        %v3125 = vlaneseq
        %v3126 = vshrl.u32 %v3125, 7
        %v3127 = vsub.s32 0, %v3126
        %v3128 = vrot.slane %v3124, %v3127
        %v3130 = vsel %vm530, %v3111, 0
        %v3133 = vsel %vm530, %v3112, 0
        %v3136 = vsel %vm530, %v3113, 0
        %v3139 = vsel %vm530, %v3114, 0
        %v3142 = vsel %vm530, %v3115, 0
        %v3145 = vsel %vm530, %v3116, 0
        %v3148 = vsel %vm530, %v3117, 0
        %v3151 = vsel %vm530, %v3118, 0
        %3153 = vmatprep.subr.mxu0 0.0
        %3154 = vmatpush1.msra.mxu0 %v3120
        %3155 = vmatprep.subr.mxu0 0.0
        %3156 = vmatpush1.msra.mxu0 %v3121
        %3157 = vmatprep.subr.mxu0 0.0
        %3158 = vmatpush1.msra.mxu0 %v3122
        %3159 = vmatprep.subr.mxu0 0.0
        %3160 = vmatpush1.msra.mxu0 %v3123
        %3161 = vmatprep.subr.mxu0 0.0
        %3162 = vmatpush1.msra.mxu0 0.0
        %3163 = vmatprep.subr.mxu0 0.0
        %3164 = vmatpush1.msra.mxu0 0.0
        %3165 = vmatprep.subr.mxu0 0.0
        %3166 = vmatpush1.msra.mxu0 0.0
        %3167 = vmatprep.subr.mxu0 0.0
        %3168 = vmatpush1.msra.mxu0 0.0
        %3169 = vmatprep.subr.mxu0 0.0
        %3170 = vmatpush1.msra.mxu0 0.0
        %3171 = vmatprep.subr.mxu0 0.0
        %3172 = vmatpush1.msra.mxu0 0.0
        %3173 = vmatprep.subr.mxu0 0.0
        %3174 = vmatpush1.msra.mxu0 0.0
        %3175 = vmatprep.subr.mxu0 0.0
        %3176 = vmatpush1.msra.mxu0 0.0
        %3177 = vmatprep.subr.mxu0 0.0
        %3178 = vmatpush1.msra.mxu0 0.0
        %3179 = vmatprep.subr.mxu0 0.0
        %3180 = vmatpush1.msra.mxu0 0.0
        %3181 = vmatprep.subr.mxu0 0.0
        %3182 = vmatpush1.msra.mxu0 0.0
        %3183 = vmatprep.subr.mxu0 0.0
        %3184 = vmatpush1.msra.mxu0 0.0
        %3185 = vmatprep.subr.mxu0 0.0
        %3186 = vmatpush1.msra.mxu0 0.0
        %3187 = vmatprep.subr.mxu0 0.0
        %3188 = vmatpush1.msra.mxu0 0.0
        %3189 = vmatprep.subr.mxu0 0.0
        %3190 = vmatpush1.msra.mxu0 0.0
        %3191 = vmatprep.subr.mxu0 0.0
        %3192 = vmatpush1.msra.mxu0 0.0
        %3193 = vmatprep.subr.mxu0 0.0
        %3194 = vmatpush1.msra.mxu0 0.0
        %3195 = vmatprep.subr.mxu0 0.0
        %3196 = vmatpush1.msra.mxu0 0.0
        %3197 = vmatprep.subr.mxu0 0.0
        %3198 = vmatpush1.msra.mxu0 0.0
        %3199 = vmatprep.subr.mxu0 0.0
        %3200 = vmatpush1.msra.mxu0 0.0
        %3201 = vmatprep.subr.mxu0 0.0
        %3202 = vmatpush1.msra.mxu0 0.0
        %3203 = vmatprep.subr.mxu0 0.0
        %3204 = vmatpush1.msra.mxu0 0.0
        %3205 = vmatprep.subr.mxu0 0.0
        %3206 = vmatpush1.msra.mxu0 0.0
        %3207 = vmatprep.subr.mxu0 0.0
        %3208 = vmatpush1.msra.mxu0 0.0
        %3209 = vmatprep.subr.mxu0 0.0
        %3210 = vmatpush1.msra.mxu0 0.0
        %3211 = vmatprep.subr.mxu0 0.0
        %3212 = vmatpush1.msra.mxu0 0.0
        %3213 = vmatprep.subr.mxu0 0.0
        %3214 = vmatpush1.msra.mxu0 0.0
        %3215 = vmatprep.subr.mxu0 0.0
        %3216 = vmatpush1.msra.mxu0 0.0
        %3217 = vmatprep.mubr.f32.mxu0 0.0
        %3218 = vmatmul.mubr.f32.gmra.mrb[0].mxu0 %v3130
        %v3219 = vpop.f32.mrb[0].mxu0
        %v3220 = vadd.f32 %v3128, %v3219
        %v3221 = vpop.f32.mrb[0].mxu0
        %3222 = vmatprep.mubr.f32.mxu0 0.0
        %3223 = vmatmul.mubr.f32.gmra.mrb[0].mxu0 %v3133
        %v3224 = vpop.f32.mrb[0].mxu0
        %v3225 = vadd.f32 %v3128, %v3224
        %v3226 = vpop.f32.mrb[0].mxu0
        %3227 = vmatprep.mubr.f32.mxu0 0.0
        %3228 = vmatmul.mubr.f32.gmra.mrb[0].mxu0 %v3136
        %v3229 = vpop.f32.mrb[0].mxu0
        %v3230 = vadd.f32 %v3128, %v3229
        %v3231 = vpop.f32.mrb[0].mxu0
        %3232 = vmatprep.mubr.f32.mxu0 0.0
        %3233 = vmatmul.mubr.f32.gmra.mrb[0].mxu0 %v3139
        %v3234 = vpop.f32.mrb[0].mxu0
        %v3235 = vadd.f32 %v3128, %v3234
        %v3236 = vpop.f32.mrb[0].mxu0
        %3237 = vmatprep.mubr.f32.mxu0 0.0
        %3238 = vmatmul.mubr.f32.gmra.mrb[0].mxu0 %v3142
        %v3239 = vpop.f32.mrb[0].mxu0
        %v3240 = vadd.f32 %v3128, %v3239
        %v3241 = vpop.f32.mrb[0].mxu0
        %3242 = vmatprep.mubr.f32.mxu0 0.0
        %3243 = vmatmul.mubr.f32.gmra.mrb[0].mxu0 %v3145
        %v3244 = vpop.f32.mrb[0].mxu0
        %v3245 = vadd.f32 %v3128, %v3244
        %v3246 = vpop.f32.mrb[0].mxu0
        %3247 = vmatprep.mubr.f32.mxu0 0.0
        %3248 = vmatmul.mubr.f32.gmra.mrb[0].mxu0 %v3148
        %v3249 = vpop.f32.mrb[0].mxu0
        %v3250 = vadd.f32 %v3128, %v3249
        %v3251 = vpop.f32.mrb[0].mxu0
        %3252 = vmatprep.mubr.f32.mxu0 0.0
        %3253 = vmatmul.mubr.f32.gmra.mrb[0].mxu0 %v3151
        %v3254 = vpop.f32.mrb[0].mxu0
        %v3255 = vadd.f32 %v3128, %v3254
        %v3256 = vpop.f32.mrb[0].mxu0
        %3257 = vdwg.mxu0
        %3266 = vrot.lane.b32.xlu0 %v3220, 120
        %v3267 = vpop.permute.xlu0 %3266
        %3268 = vrot.lane.b32.xlu0 %v3225, 120
        %v3269 = vpop.permute.xlu0 %3268
        %3270 = vrot.lane.b32.xlu0 %v3230, 120
        %v3271 = vpop.permute.xlu0 %3270
        %3272 = vrot.lane.b32.xlu0 %v3235, 120
        %v3273 = vpop.permute.xlu0 %3272
        %3274 = vrot.lane.b32.xlu0 %v3240, 120
        %v3275 = vpop.permute.xlu0 %3274
        %3276 = vrot.lane.b32.xlu0 %v3245, 120
        %v3277 = vpop.permute.xlu0 %3276
        %3278 = vrot.lane.b32.xlu0 %v3250, 120
        %v3279 = vpop.permute.xlu0 %3278
        %3280 = vrot.lane.b32.xlu0 %v3255, 120
        %v3281 = vpop.permute.xlu0 %3280
        %3282 = vrot.lane.b32.xlu0 %v3220, 112
        %v3283 = vpop.permute.xlu0 %3282
        %3284 = vrot.lane.b32.xlu0 %v3225, 112
        %v3285 = vpop.permute.xlu0 %3284
        %3286 = vrot.lane.b32.xlu0 %v3230, 112
        %v3287 = vpop.permute.xlu0 %3286
        %3288 = vrot.lane.b32.xlu0 %v3235, 112
        %v3289 = vpop.permute.xlu0 %3288
        %3290 = vrot.lane.b32.xlu0 %v3240, 112
        %v3291 = vpop.permute.xlu0 %3290
        %3292 = vrot.lane.b32.xlu0 %v3245, 112
        %v3293 = vpop.permute.xlu0 %3292
        %3294 = vrot.lane.b32.xlu0 %v3250, 112
        %v3295 = vpop.permute.xlu0 %3294
        %3296 = vrot.lane.b32.xlu0 %v3255, 112
        %v3297 = vpop.permute.xlu0 %3296
        %3298 = vrot.lane.b32.xlu0 %v3220, 104
        %v3299 = vpop.permute.xlu0 %3298
        %3300 = vrot.lane.b32.xlu0 %v3225, 104
        %v3301 = vpop.permute.xlu0 %3300
        %3302 = vrot.lane.b32.xlu0 %v3230, 104
        %v3303 = vpop.permute.xlu0 %3302
        %3304 = vrot.lane.b32.xlu0 %v3235, 104
        %v3305 = vpop.permute.xlu0 %3304
        %3306 = vrot.lane.b32.xlu0 %v3240, 104
        %v3307 = vpop.permute.xlu0 %3306
        %3308 = vrot.lane.b32.xlu0 %v3245, 104
        %v3309 = vpop.permute.xlu0 %3308
        %3310 = vrot.lane.b32.xlu0 %v3250, 104
        %v3311 = vpop.permute.xlu0 %3310
        %3312 = vrot.lane.b32.xlu0 %v3255, 104
        %v3313 = vpop.permute.xlu0 %3312
        %3314 = vrot.lane.b32.xlu0 %v3220, 96
        %v3315 = vpop.permute.xlu0 %3314
        %3316 = vrot.lane.b32.xlu0 %v3225, 96
        %v3317 = vpop.permute.xlu0 %3316
        %3318 = vrot.lane.b32.xlu0 %v3230, 96
        %v3319 = vpop.permute.xlu0 %3318
        %3320 = vrot.lane.b32.xlu0 %v3235, 96
        %v3321 = vpop.permute.xlu0 %3320
        %3322 = vrot.lane.b32.xlu0 %v3240, 96
        %v3323 = vpop.permute.xlu0 %3322
        %3324 = vrot.lane.b32.xlu0 %v3245, 96
        %v3325 = vpop.permute.xlu0 %3324
        %3326 = vrot.lane.b32.xlu0 %v3250, 96
        %v3327 = vpop.permute.xlu0 %3326
        %3328 = vrot.lane.b32.xlu0 %v3255, 96
        %v3329 = vpop.permute.xlu0 %3328
        %v3330 = vsel %vm732, %v3220, 0
        %v3332 = vsel %vm732, %v3225, 0
        %v3334 = vsel %vm732, %v3230, 0
        %v3336 = vsel %vm732, %v3235, 0
        %v3338 = vsel %vm732, %v3240, 0
        %v3340 = vsel %vm732, %v3245, 0
        %v3342 = vsel %vm732, %v3250, 0
        %v3344 = vsel %vm732, %v3255, 0
        %v3346 = vsel %vm732, %v3315, 0
        %v3348 = vsel %vm732, %v3317, 0
        %v3350 = vsel %vm732, %v3319, 0
        %v3352 = vsel %vm732, %v3321, 0
        %v3354 = vsel %vm732, %v3323, 0
        %v3356 = vsel %vm732, %v3325, 0
        %v3358 = vsel %vm732, %v3327, 0
        %v3360 = vsel %vm732, %v3329, 0
        %3362 = vmatprep.subr.mxu0 0.0
        %3363 = vmatpush1.xpose.msra.mxu0 %v3346
        %3364 = vmatprep.subr.mxu0 0.0
        %3365 = vmatpush1.xpose.msra.mxu0 %v3348
        %3366 = vmatprep.subr.mxu0 0.0
        %3367 = vmatpush1.xpose.msra.mxu0 %v3350
        %3368 = vmatprep.subr.mxu0 0.0
        %3369 = vmatpush1.xpose.msra.mxu0 %v3352
        %3370 = vmatprep.subr.mxu0 0.0
        %3371 = vmatpush1.xpose.msra.mxu0 %v3354
        %3372 = vmatprep.subr.mxu0 0.0
        %3373 = vmatpush1.xpose.msra.mxu0 %v3356
        %3374 = vmatprep.subr.mxu0 0.0
        %3375 = vmatpush1.xpose.msra.mxu0 %v3358
        %3376 = vmatprep.subr.mxu0 0.0
        %3377 = vmatpush1.xpose.msra.mxu0 %v3360
        %3378 = vmatprep.subr.mxu0 0.0
        %3379 = vmatpush1.xpose.msra.mxu0 0.0
        %3380 = vmatprep.subr.mxu0 0.0
        %3381 = vmatpush1.xpose.msra.mxu0 0.0
        %3382 = vmatprep.subr.mxu0 0.0
        %3383 = vmatpush1.xpose.msra.mxu0 0.0
        %3384 = vmatprep.subr.mxu0 0.0
        %3385 = vmatpush1.xpose.msra.mxu0 0.0
        %3386 = vmatprep.subr.mxu0 0.0
        %3387 = vmatpush1.xpose.msra.mxu0 0.0
        %3388 = vmatprep.subr.mxu0 0.0
        %3389 = vmatpush1.xpose.msra.mxu0 0.0
        %3390 = vmatprep.subr.mxu0 0.0
        %3391 = vmatpush1.xpose.msra.mxu0 0.0
        %3392 = vmatprep.subr.mxu0 0.0
        %3393 = vmatpush1.xpose.msra.mxu0 0.0
        %3394 = vmatprep.subr.mxu0 0.0
        %3395 = vmatpush1.xpose.msra.mxu0 0.0
        %3396 = vmatprep.subr.mxu0 0.0
        %3397 = vmatpush1.xpose.msra.mxu0 0.0
        %3398 = vmatprep.subr.mxu0 0.0
        %3399 = vmatpush1.xpose.msra.mxu0 0.0
        %3400 = vmatprep.subr.mxu0 0.0
        %3401 = vmatpush1.xpose.msra.mxu0 0.0
        %3402 = vmatprep.subr.mxu0 0.0
        %3403 = vmatpush1.xpose.msra.mxu0 0.0
        %3404 = vmatprep.subr.mxu0 0.0
        %3405 = vmatpush1.xpose.msra.mxu0 0.0
        %3406 = vmatprep.subr.mxu0 0.0
        %3407 = vmatpush1.xpose.msra.mxu0 0.0
        %3408 = vmatprep.subr.mxu0 0.0
        %3409 = vmatpush1.xpose.msra.mxu0 0.0
        %3410 = vmatprep.subr.mxu0 0.0
        %3411 = vmatpush1.xpose.msra.mxu0 0.0
        %3412 = vmatprep.subr.mxu0 0.0
        %3413 = vmatpush1.xpose.msra.mxu0 0.0
        %3414 = vmatprep.subr.mxu0 0.0
        %3415 = vmatpush1.xpose.msra.mxu0 0.0
        %3416 = vmatprep.subr.mxu0 0.0
        %3417 = vmatpush1.xpose.msra.mxu0 0.0
        %3418 = vmatprep.subr.mxu0 0.0
        %3419 = vmatpush1.xpose.msra.mxu0 0.0
        %3420 = vmatprep.subr.mxu0 0.0
        %3421 = vmatpush1.xpose.msra.mxu0 0.0
        %3422 = vmatprep.subr.mxu0 0.0
        %3423 = vmatpush1.xpose.msra.mxu0 0.0
        %3424 = vmatprep.subr.mxu0 0.0
        %3425 = vmatpush1.xpose.msra.mxu0 0.0
        %3426 = vmatprep.mubr.f32.mxu0 0.0
        %3427 = vmatmul.mubr.f32.gmra.mrb[0].mxu0 %v3330
        %v3428 = vpop.f32.mrb[0].mxu0
        %v3429 = vadd.f32 %v513, %v3428
        %v3430 = vpop.f32.mrb[0].mxu0
        %3431 = vmatprep.mubr.f32.mxu0 0.0
        %3432 = vmatmul.mubr.f32.gmra.mrb[0].mxu0 %v3332
        %v3433 = vpop.f32.mrb[0].mxu0
        %v3434 = vadd.f32 %v514, %v3433
        %v3435 = vpop.f32.mrb[0].mxu0
        %3436 = vmatprep.mubr.f32.mxu0 0.0
        %3437 = vmatmul.mubr.f32.gmra.mrb[0].mxu0 %v3334
        %v3438 = vpop.f32.mrb[0].mxu0
        %v3439 = vadd.f32 %v515, %v3438
        %v3440 = vpop.f32.mrb[0].mxu0
        %3441 = vmatprep.mubr.f32.mxu0 0.0
        %3442 = vmatmul.mubr.f32.gmra.mrb[0].mxu0 %v3336
        %v3443 = vpop.f32.mrb[0].mxu0
        %v3444 = vadd.f32 %v516, %v3443
        %v3445 = vpop.f32.mrb[0].mxu0
        %3446 = vmatprep.mubr.f32.mxu0 0.0
        %3447 = vmatmul.mubr.f32.gmra.mrb[0].mxu0 %v3338
        %v3448 = vpop.f32.mrb[0].mxu0
        %v3449 = vadd.f32 %v517, %v3448
        %v3450 = vpop.f32.mrb[0].mxu0
        %3451 = vmatprep.mubr.f32.mxu0 0.0
        %3452 = vmatmul.mubr.f32.gmra.mrb[0].mxu0 %v3340
        %v3453 = vpop.f32.mrb[0].mxu0
        %v3454 = vadd.f32 %v518, %v3453
        %v3455 = vpop.f32.mrb[0].mxu0
        %3456 = vmatprep.mubr.f32.mxu0 0.0
        %3457 = vmatmul.mubr.f32.gmra.mrb[0].mxu0 %v3342
        %v3458 = vpop.f32.mrb[0].mxu0
        %v3459 = vadd.f32 %v519, %v3458
        %v3460 = vpop.f32.mrb[0].mxu0
        %3461 = vmatprep.mubr.f32.mxu0 0.0
        %3462 = vmatmul.mubr.f32.gmra.mrb[0].mxu0 %v3344
        %v3463 = vpop.f32.mrb[0].mxu0
        %v3464 = vadd.f32 %v520, %v3463
        %v3465 = vpop.f32.mrb[0].mxu0
        %3466 = vdwg.mxu0
        %3467 = vrot.lane.b32.xlu0 %v3267, 96
        %v3468 = vpop.permute.xlu0 %3467
        %3469 = vrot.lane.b32.xlu0 %v3269, 96
        %v3470 = vpop.permute.xlu0 %3469
        %3471 = vrot.lane.b32.xlu0 %v3271, 96
        %v3472 = vpop.permute.xlu0 %3471
        %3473 = vrot.lane.b32.xlu0 %v3273, 96
        %v3474 = vpop.permute.xlu0 %3473
        %3475 = vrot.lane.b32.xlu0 %v3275, 96
        %v3476 = vpop.permute.xlu0 %3475
        %3477 = vrot.lane.b32.xlu0 %v3277, 96
        %v3478 = vpop.permute.xlu0 %3477
        %3479 = vrot.lane.b32.xlu0 %v3279, 96
        %v3480 = vpop.permute.xlu0 %3479
        %3481 = vrot.lane.b32.xlu0 %v3281, 96
        %v3482 = vpop.permute.xlu0 %3481
        %v3483 = vsel %vm732, %v3267, 0
        %v3485 = vsel %vm732, %v3269, 0
        %v3487 = vsel %vm732, %v3271, 0
        %v3489 = vsel %vm732, %v3273, 0
        %v3491 = vsel %vm732, %v3275, 0
        %v3493 = vsel %vm732, %v3277, 0
        %v3495 = vsel %vm732, %v3279, 0
        %v3497 = vsel %vm732, %v3281, 0
        %v3499 = vsel %vm732, %v3468, 0
        %v3501 = vsel %vm732, %v3470, 0
        %v3503 = vsel %vm732, %v3472, 0
        %v3505 = vsel %vm732, %v3474, 0
        %v3507 = vsel %vm732, %v3476, 0
        %v3509 = vsel %vm732, %v3478, 0
        %v3511 = vsel %vm732, %v3480, 0
        %v3513 = vsel %vm732, %v3482, 0
        %3515 = vmatprep.subr.mxu0 0.0
        %3516 = vmatpush1.xpose.msra.mxu0 %v3499
        %3517 = vmatprep.subr.mxu0 0.0
        %3518 = vmatpush1.xpose.msra.mxu0 %v3501
        %3519 = vmatprep.subr.mxu0 0.0
        %3520 = vmatpush1.xpose.msra.mxu0 %v3503
        %3521 = vmatprep.subr.mxu0 0.0
        %3522 = vmatpush1.xpose.msra.mxu0 %v3505
        %3523 = vmatprep.subr.mxu0 0.0
        %3524 = vmatpush1.xpose.msra.mxu0 %v3507
        %3525 = vmatprep.subr.mxu0 0.0
        %3526 = vmatpush1.xpose.msra.mxu0 %v3509
        %3527 = vmatprep.subr.mxu0 0.0
        %3528 = vmatpush1.xpose.msra.mxu0 %v3511
        %3529 = vmatprep.subr.mxu0 0.0
        %3530 = vmatpush1.xpose.msra.mxu0 %v3513
        %3531 = vmatprep.subr.mxu0 0.0
        %3532 = vmatpush1.xpose.msra.mxu0 0.0
        %3533 = vmatprep.subr.mxu0 0.0
        %3534 = vmatpush1.xpose.msra.mxu0 0.0
        %3535 = vmatprep.subr.mxu0 0.0
        %3536 = vmatpush1.xpose.msra.mxu0 0.0
        %3537 = vmatprep.subr.mxu0 0.0
        %3538 = vmatpush1.xpose.msra.mxu0 0.0
        %3539 = vmatprep.subr.mxu0 0.0
        %3540 = vmatpush1.xpose.msra.mxu0 0.0
        %3541 = vmatprep.subr.mxu0 0.0
        %3542 = vmatpush1.xpose.msra.mxu0 0.0
        %3543 = vmatprep.subr.mxu0 0.0
        %3544 = vmatpush1.xpose.msra.mxu0 0.0
        %3545 = vmatprep.subr.mxu0 0.0
        %3546 = vmatpush1.xpose.msra.mxu0 0.0
        %3547 = vmatprep.subr.mxu0 0.0
        %3548 = vmatpush1.xpose.msra.mxu0 0.0
        %3549 = vmatprep.subr.mxu0 0.0
        %3550 = vmatpush1.xpose.msra.mxu0 0.0
        %3551 = vmatprep.subr.mxu0 0.0
        %3552 = vmatpush1.xpose.msra.mxu0 0.0
        %3553 = vmatprep.subr.mxu0 0.0
        %3554 = vmatpush1.xpose.msra.mxu0 0.0
        %3555 = vmatprep.subr.mxu0 0.0
        %3556 = vmatpush1.xpose.msra.mxu0 0.0
        %3557 = vmatprep.subr.mxu0 0.0
        %3558 = vmatpush1.xpose.msra.mxu0 0.0
        %3559 = vmatprep.subr.mxu0 0.0
        %3560 = vmatpush1.xpose.msra.mxu0 0.0
        %3561 = vmatprep.subr.mxu0 0.0
        %3562 = vmatpush1.xpose.msra.mxu0 0.0
        %3563 = vmatprep.subr.mxu0 0.0
        %3564 = vmatpush1.xpose.msra.mxu0 0.0
        %3565 = vmatprep.subr.mxu0 0.0
        %3566 = vmatpush1.xpose.msra.mxu0 0.0
        %3567 = vmatprep.subr.mxu0 0.0
        %3568 = vmatpush1.xpose.msra.mxu0 0.0
        %3569 = vmatprep.subr.mxu0 0.0
        %3570 = vmatpush1.xpose.msra.mxu0 0.0
        %3571 = vmatprep.subr.mxu0 0.0
        %3572 = vmatpush1.xpose.msra.mxu0 0.0
        %3573 = vmatprep.subr.mxu0 0.0
        %3574 = vmatpush1.xpose.msra.mxu0 0.0
        %3575 = vmatprep.subr.mxu0 0.0
        %3576 = vmatpush1.xpose.msra.mxu0 0.0
        %3577 = vmatprep.subr.mxu0 0.0
        %3578 = vmatpush1.xpose.msra.mxu0 0.0
        %3579 = vmatprep.mubr.f32.mxu0 0.0
        %3580 = vmatmul.mubr.f32.gmra.mrb[0].mxu0 %v3483
        %v3581 = vpop.f32.mrb[0].mxu0
        %v3582 = vadd.f32 %v513, %v3581
        %v3583 = vpop.f32.mrb[0].mxu0
        %3584 = vmatprep.mubr.f32.mxu0 0.0
        %3585 = vmatmul.mubr.f32.gmra.mrb[0].mxu0 %v3485
        %v3586 = vpop.f32.mrb[0].mxu0
        %v3587 = vadd.f32 %v514, %v3586
        %v3588 = vpop.f32.mrb[0].mxu0
        %3589 = vmatprep.mubr.f32.mxu0 0.0
        %3590 = vmatmul.mubr.f32.gmra.mrb[0].mxu0 %v3487
        %v3591 = vpop.f32.mrb[0].mxu0
        %v3592 = vadd.f32 %v515, %v3591
        %v3593 = vpop.f32.mrb[0].mxu0
        %3594 = vmatprep.mubr.f32.mxu0 0.0
        %3595 = vmatmul.mubr.f32.gmra.mrb[0].mxu0 %v3489
        %v3596 = vpop.f32.mrb[0].mxu0
        %v3597 = vadd.f32 %v516, %v3596
        %v3598 = vpop.f32.mrb[0].mxu0
        %3599 = vmatprep.mubr.f32.mxu0 0.0
        %3600 = vmatmul.mubr.f32.gmra.mrb[0].mxu0 %v3491
        %v3601 = vpop.f32.mrb[0].mxu0
        %v3602 = vadd.f32 %v517, %v3601
        %v3603 = vpop.f32.mrb[0].mxu0
        %3604 = vmatprep.mubr.f32.mxu0 0.0
        %3605 = vmatmul.mubr.f32.gmra.mrb[0].mxu0 %v3493
        %v3606 = vpop.f32.mrb[0].mxu0
        %v3607 = vadd.f32 %v518, %v3606
        %v3608 = vpop.f32.mrb[0].mxu0
        %3609 = vmatprep.mubr.f32.mxu0 0.0
        %3610 = vmatmul.mubr.f32.gmra.mrb[0].mxu0 %v3495
        %v3611 = vpop.f32.mrb[0].mxu0
        %v3612 = vadd.f32 %v519, %v3611
        %v3613 = vpop.f32.mrb[0].mxu0
        %3614 = vmatprep.mubr.f32.mxu0 0.0
        %3615 = vmatmul.mubr.f32.gmra.mrb[0].mxu0 %v3497
        %v3616 = vpop.f32.mrb[0].mxu0
        %v3617 = vadd.f32 %v520, %v3616
        %v3618 = vpop.f32.mrb[0].mxu0
        %3619 = vdwg.mxu0
        %3620 = vrot.lane.b32.xlu0 %v3283, 96
        %v3621 = vpop.permute.xlu0 %3620
        %3622 = vrot.lane.b32.xlu0 %v3285, 96
        %v3623 = vpop.permute.xlu0 %3622
        %3624 = vrot.lane.b32.xlu0 %v3287, 96
        %v3625 = vpop.permute.xlu0 %3624
        %3626 = vrot.lane.b32.xlu0 %v3289, 96
        %v3627 = vpop.permute.xlu0 %3626
        %3628 = vrot.lane.b32.xlu0 %v3291, 96
        %v3629 = vpop.permute.xlu0 %3628
        %3630 = vrot.lane.b32.xlu0 %v3293, 96
        %v3631 = vpop.permute.xlu0 %3630
        %3632 = vrot.lane.b32.xlu0 %v3295, 96
        %v3633 = vpop.permute.xlu0 %3632
        %3634 = vrot.lane.b32.xlu0 %v3297, 96
        %v3635 = vpop.permute.xlu0 %3634
        %v3636 = vsel %vm732, %v3283, 0
        %v3638 = vsel %vm732, %v3285, 0
        %v3640 = vsel %vm732, %v3287, 0
        %v3642 = vsel %vm732, %v3289, 0
        %v3644 = vsel %vm732, %v3291, 0
        %v3646 = vsel %vm732, %v3293, 0
        %v3648 = vsel %vm732, %v3295, 0
        %v3650 = vsel %vm732, %v3297, 0
        %v3652 = vsel %vm732, %v3621, 0
        %v3654 = vsel %vm732, %v3623, 0
        %v3656 = vsel %vm732, %v3625, 0
        %v3658 = vsel %vm732, %v3627, 0
        %v3660 = vsel %vm732, %v3629, 0
        %v3662 = vsel %vm732, %v3631, 0
        %v3664 = vsel %vm732, %v3633, 0
        %v3666 = vsel %vm732, %v3635, 0
        %3668 = vmatprep.subr.mxu0 0.0
        %3669 = vmatpush1.xpose.msra.mxu0 %v3652
        %3670 = vmatprep.subr.mxu0 0.0
        %3671 = vmatpush1.xpose.msra.mxu0 %v3654
        %3672 = vmatprep.subr.mxu0 0.0
        %3673 = vmatpush1.xpose.msra.mxu0 %v3656
        %3674 = vmatprep.subr.mxu0 0.0
        %3675 = vmatpush1.xpose.msra.mxu0 %v3658
        %3676 = vmatprep.subr.mxu0 0.0
        %3677 = vmatpush1.xpose.msra.mxu0 %v3660
        %3678 = vmatprep.subr.mxu0 0.0
        %3679 = vmatpush1.xpose.msra.mxu0 %v3662
        %3680 = vmatprep.subr.mxu0 0.0
        %3681 = vmatpush1.xpose.msra.mxu0 %v3664
        %3682 = vmatprep.subr.mxu0 0.0
        %3683 = vmatpush1.xpose.msra.mxu0 %v3666
        %3684 = vmatprep.subr.mxu0 0.0
        %3685 = vmatpush1.xpose.msra.mxu0 0.0
        %3686 = vmatprep.subr.mxu0 0.0
        %3687 = vmatpush1.xpose.msra.mxu0 0.0
        %3688 = vmatprep.subr.mxu0 0.0
        %3689 = vmatpush1.xpose.msra.mxu0 0.0
        %3690 = vmatprep.subr.mxu0 0.0
        %3691 = vmatpush1.xpose.msra.mxu0 0.0
        %3692 = vmatprep.subr.mxu0 0.0
        %3693 = vmatpush1.xpose.msra.mxu0 0.0
        %3694 = vmatprep.subr.mxu0 0.0
        %3695 = vmatpush1.xpose.msra.mxu0 0.0
        %3696 = vmatprep.subr.mxu0 0.0
        %3697 = vmatpush1.xpose.msra.mxu0 0.0
        %3698 = vmatprep.subr.mxu0 0.0
        %3699 = vmatpush1.xpose.msra.mxu0 0.0
        %3700 = vmatprep.subr.mxu0 0.0
        %3701 = vmatpush1.xpose.msra.mxu0 0.0
        %3702 = vmatprep.subr.mxu0 0.0
        %3703 = vmatpush1.xpose.msra.mxu0 0.0
        %3704 = vmatprep.subr.mxu0 0.0
        %3705 = vmatpush1.xpose.msra.mxu0 0.0
        %3706 = vmatprep.subr.mxu0 0.0
        %3707 = vmatpush1.xpose.msra.mxu0 0.0
        %3708 = vmatprep.subr.mxu0 0.0
        %3709 = vmatpush1.xpose.msra.mxu0 0.0
        %3710 = vmatprep.subr.mxu0 0.0
        %3711 = vmatpush1.xpose.msra.mxu0 0.0
        %3712 = vmatprep.subr.mxu0 0.0
        %3713 = vmatpush1.xpose.msra.mxu0 0.0
        %3714 = vmatprep.subr.mxu0 0.0
        %3715 = vmatpush1.xpose.msra.mxu0 0.0
        %3716 = vmatprep.subr.mxu0 0.0
        %3717 = vmatpush1.xpose.msra.mxu0 0.0
        %3718 = vmatprep.subr.mxu0 0.0
        %3719 = vmatpush1.xpose.msra.mxu0 0.0
        %3720 = vmatprep.subr.mxu0 0.0
        %3721 = vmatpush1.xpose.msra.mxu0 0.0
        %3722 = vmatprep.subr.mxu0 0.0
        %3723 = vmatpush1.xpose.msra.mxu0 0.0
        %3724 = vmatprep.subr.mxu0 0.0
        %3725 = vmatpush1.xpose.msra.mxu0 0.0
        %3726 = vmatprep.subr.mxu0 0.0
        %3727 = vmatpush1.xpose.msra.mxu0 0.0
        %3728 = vmatprep.subr.mxu0 0.0
        %3729 = vmatpush1.xpose.msra.mxu0 0.0
        %3730 = vmatprep.subr.mxu0 0.0
        %3731 = vmatpush1.xpose.msra.mxu0 0.0
        %3732 = vmatprep.mubr.f32.mxu0 0.0
        %3733 = vmatmul.mubr.f32.gmra.mrb[0].mxu0 %v3636
        %v3734 = vpop.f32.mrb[0].mxu0
        %v3735 = vadd.f32 %v513, %v3734
        %v3736 = vpop.f32.mrb[0].mxu0
        %3737 = vmatprep.mubr.f32.mxu0 0.0
        %3738 = vmatmul.mubr.f32.gmra.mrb[0].mxu0 %v3638
        %v3739 = vpop.f32.mrb[0].mxu0
        %v3740 = vadd.f32 %v514, %v3739
        %v3741 = vpop.f32.mrb[0].mxu0
        %3742 = vmatprep.mubr.f32.mxu0 0.0
        %3743 = vmatmul.mubr.f32.gmra.mrb[0].mxu0 %v3640
        %v3744 = vpop.f32.mrb[0].mxu0
        %v3745 = vadd.f32 %v515, %v3744
        %v3746 = vpop.f32.mrb[0].mxu0
        %3747 = vmatprep.mubr.f32.mxu0 0.0
        %3748 = vmatmul.mubr.f32.gmra.mrb[0].mxu0 %v3642
        %v3749 = vpop.f32.mrb[0].mxu0
        %v3750 = vadd.f32 %v516, %v3749
        %v3751 = vpop.f32.mrb[0].mxu0
        %3752 = vmatprep.mubr.f32.mxu0 0.0
        %3753 = vmatmul.mubr.f32.gmra.mrb[0].mxu0 %v3644
        %v3754 = vpop.f32.mrb[0].mxu0
        %v3755 = vadd.f32 %v517, %v3754
        %v3756 = vpop.f32.mrb[0].mxu0
        %3757 = vmatprep.mubr.f32.mxu0 0.0
        %3758 = vmatmul.mubr.f32.gmra.mrb[0].mxu0 %v3646
        %v3759 = vpop.f32.mrb[0].mxu0
        %v3760 = vadd.f32 %v518, %v3759
        %v3761 = vpop.f32.mrb[0].mxu0
        %3762 = vmatprep.mubr.f32.mxu0 0.0
        %3763 = vmatmul.mubr.f32.gmra.mrb[0].mxu0 %v3648
        %v3764 = vpop.f32.mrb[0].mxu0
        %v3765 = vadd.f32 %v519, %v3764
        %v3766 = vpop.f32.mrb[0].mxu0
        %3767 = vmatprep.mubr.f32.mxu0 0.0
        %3768 = vmatmul.mubr.f32.gmra.mrb[0].mxu0 %v3650
        %v3769 = vpop.f32.mrb[0].mxu0
        %v3770 = vadd.f32 %v520, %v3769
        %v3771 = vpop.f32.mrb[0].mxu0
        %3772 = vdwg.mxu0
        %3773 = vrot.lane.b32.xlu0 %v3299, 96
        %v3774 = vpop.permute.xlu0 %3773
        %3775 = vrot.lane.b32.xlu0 %v3301, 96
        %v3776 = vpop.permute.xlu0 %3775
        %3777 = vrot.lane.b32.xlu0 %v3303, 96
        %v3778 = vpop.permute.xlu0 %3777
        %3779 = vrot.lane.b32.xlu0 %v3305, 96
        %v3780 = vpop.permute.xlu0 %3779
        %3781 = vrot.lane.b32.xlu0 %v3307, 96
        %v3782 = vpop.permute.xlu0 %3781
        %3783 = vrot.lane.b32.xlu0 %v3309, 96
        %v3784 = vpop.permute.xlu0 %3783
        %3785 = vrot.lane.b32.xlu0 %v3311, 96
        %v3786 = vpop.permute.xlu0 %3785
        %3787 = vrot.lane.b32.xlu0 %v3313, 96
        %v3788 = vpop.permute.xlu0 %3787
        %v3789 = vsel %vm732, %v3299, 0
        %v3791 = vsel %vm732, %v3301, 0
        %v3793 = vsel %vm732, %v3303, 0
        %v3795 = vsel %vm732, %v3305, 0
        %v3797 = vsel %vm732, %v3307, 0
        %v3799 = vsel %vm732, %v3309, 0
        %v3801 = vsel %vm732, %v3311, 0
        %v3803 = vsel %vm732, %v3313, 0
        %v3805 = vsel %vm732, %v3774, 0
        %v3807 = vsel %vm732, %v3776, 0
        %v3809 = vsel %vm732, %v3778, 0
        %v3811 = vsel %vm732, %v3780, 0
        %v3813 = vsel %vm732, %v3782, 0
        %v3815 = vsel %vm732, %v3784, 0
        %v3817 = vsel %vm732, %v3786, 0
        %v3819 = vsel %vm732, %v3788, 0
        %3821 = vmatprep.subr.mxu0 0.0
        %3822 = vmatpush1.xpose.msra.mxu0 %v3805
        %3823 = vmatprep.subr.mxu0 0.0
        %3824 = vmatpush1.xpose.msra.mxu0 %v3807
        %3825 = vmatprep.subr.mxu0 0.0
        %3826 = vmatpush1.xpose.msra.mxu0 %v3809
        %3827 = vmatprep.subr.mxu0 0.0
        %3828 = vmatpush1.xpose.msra.mxu0 %v3811
        %3829 = vmatprep.subr.mxu0 0.0
        %3830 = vmatpush1.xpose.msra.mxu0 %v3813
        %3831 = vmatprep.subr.mxu0 0.0
        %3832 = vmatpush1.xpose.msra.mxu0 %v3815
        %3833 = vmatprep.subr.mxu0 0.0
        %3834 = vmatpush1.xpose.msra.mxu0 %v3817
        %3835 = vmatprep.subr.mxu0 0.0
        %3836 = vmatpush1.xpose.msra.mxu0 %v3819
        %3837 = vmatprep.subr.mxu0 0.0
        %3838 = vmatpush1.xpose.msra.mxu0 0.0
        %3839 = vmatprep.subr.mxu0 0.0
        %3840 = vmatpush1.xpose.msra.mxu0 0.0
        %3841 = vmatprep.subr.mxu0 0.0
        %3842 = vmatpush1.xpose.msra.mxu0 0.0
        %3843 = vmatprep.subr.mxu0 0.0
        %3844 = vmatpush1.xpose.msra.mxu0 0.0
        %3845 = vmatprep.subr.mxu0 0.0
        %3846 = vmatpush1.xpose.msra.mxu0 0.0
        %3847 = vmatprep.subr.mxu0 0.0
        %3848 = vmatpush1.xpose.msra.mxu0 0.0
        %3849 = vmatprep.subr.mxu0 0.0
        %3850 = vmatpush1.xpose.msra.mxu0 0.0
        %3851 = vmatprep.subr.mxu0 0.0
        %3852 = vmatpush1.xpose.msra.mxu0 0.0
        %3853 = vmatprep.subr.mxu0 0.0
        %3854 = vmatpush1.xpose.msra.mxu0 0.0
        %3855 = vmatprep.subr.mxu0 0.0
        %3856 = vmatpush1.xpose.msra.mxu0 0.0
        %3857 = vmatprep.subr.mxu0 0.0
        %3858 = vmatpush1.xpose.msra.mxu0 0.0
        %3859 = vmatprep.subr.mxu0 0.0
        %3860 = vmatpush1.xpose.msra.mxu0 0.0
        %3861 = vmatprep.subr.mxu0 0.0
        %3862 = vmatpush1.xpose.msra.mxu0 0.0
        %3863 = vmatprep.subr.mxu0 0.0
        %3864 = vmatpush1.xpose.msra.mxu0 0.0
        %3865 = vmatprep.subr.mxu0 0.0
        %3866 = vmatpush1.xpose.msra.mxu0 0.0
        %3867 = vmatprep.subr.mxu0 0.0
        %3868 = vmatpush1.xpose.msra.mxu0 0.0
        %3869 = vmatprep.subr.mxu0 0.0
        %3870 = vmatpush1.xpose.msra.mxu0 0.0
        %3871 = vmatprep.subr.mxu0 0.0
        %3872 = vmatpush1.xpose.msra.mxu0 0.0
        %3873 = vmatprep.subr.mxu0 0.0
        %3874 = vmatpush1.xpose.msra.mxu0 0.0
        %3875 = vmatprep.subr.mxu0 0.0
        %3876 = vmatpush1.xpose.msra.mxu0 0.0
        %3877 = vmatprep.subr.mxu0 0.0
        %3878 = vmatpush1.xpose.msra.mxu0 0.0
        %3879 = vmatprep.subr.mxu0 0.0
        %3880 = vmatpush1.xpose.msra.mxu0 0.0
        %3881 = vmatprep.subr.mxu0 0.0
        %3882 = vmatpush1.xpose.msra.mxu0 0.0
        %3883 = vmatprep.subr.mxu0 0.0
        %3884 = vmatpush1.xpose.msra.mxu0 0.0
        %3885 = vmatprep.mubr.f32.mxu0 0.0
        %3886 = vmatmul.mubr.f32.gmra.mrb[0].mxu0 %v3789
        %v3887 = vpop.f32.mrb[0].mxu0
        %v3888 = vadd.f32 %v513, %v3887
        %v3889 = vpop.f32.mrb[0].mxu0
        %3890 = vmatprep.mubr.f32.mxu0 0.0
        %3891 = vmatmul.mubr.f32.gmra.mrb[0].mxu0 %v3791
        %v3892 = vpop.f32.mrb[0].mxu0
        %v3893 = vadd.f32 %v514, %v3892
        %v3894 = vpop.f32.mrb[0].mxu0
        %3895 = vmatprep.mubr.f32.mxu0 0.0
        %3896 = vmatmul.mubr.f32.gmra.mrb[0].mxu0 %v3793
        %v3897 = vpop.f32.mrb[0].mxu0
        %v3898 = vadd.f32 %v515, %v3897
        %v3899 = vpop.f32.mrb[0].mxu0
        %3900 = vmatprep.mubr.f32.mxu0 0.0
        %3901 = vmatmul.mubr.f32.gmra.mrb[0].mxu0 %v3795
        %v3902 = vpop.f32.mrb[0].mxu0
        %v3903 = vadd.f32 %v516, %v3902
        %v3904 = vpop.f32.mrb[0].mxu0
        %3905 = vmatprep.mubr.f32.mxu0 0.0
        %3906 = vmatmul.mubr.f32.gmra.mrb[0].mxu0 %v3797
        %v3907 = vpop.f32.mrb[0].mxu0
        %v3908 = vadd.f32 %v517, %v3907
        %v3909 = vpop.f32.mrb[0].mxu0
        %3910 = vmatprep.mubr.f32.mxu0 0.0
        %3911 = vmatmul.mubr.f32.gmra.mrb[0].mxu0 %v3799
        %v3912 = vpop.f32.mrb[0].mxu0
        %v3913 = vadd.f32 %v518, %v3912
        %v3914 = vpop.f32.mrb[0].mxu0
        %3915 = vmatprep.mubr.f32.mxu0 0.0
        %3916 = vmatmul.mubr.f32.gmra.mrb[0].mxu0 %v3801
        %v3917 = vpop.f32.mrb[0].mxu0
        %v3918 = vadd.f32 %v519, %v3917
        %v3919 = vpop.f32.mrb[0].mxu0
        %3920 = vmatprep.mubr.f32.mxu0 0.0
        %3921 = vmatmul.mubr.f32.gmra.mrb[0].mxu0 %v3803
        %v3922 = vpop.f32.mrb[0].mxu0
        %v3923 = vadd.f32 %v520, %v3922
        %v3924 = vpop.f32.mrb[0].mxu0
        %3925 = vdwg.mxu0
        %v3926 = vsel %vm1329, %v3429, -inf
        %3927 = vmax.xlane.f32.xlu0 %v3926
        %v3928 = vpop.xlane.xlu0 %3927
        %v3929 = vsel %vm1329, %v3434, -inf
        %3930 = vmax.xlane.f32.xlu0 %v3929
        %v3931 = vpop.xlane.xlu0 %3930
        %v3932 = vsel %vm1329, %v3439, -inf
        %3933 = vmax.xlane.f32.xlu0 %v3932
        %v3934 = vpop.xlane.xlu0 %3933
        %v3935 = vsel %vm1329, %v3444, -inf
        %3936 = vmax.xlane.f32.xlu0 %v3935
        %v3937 = vpop.xlane.xlu0 %3936
        %v3938 = vsel %vm1329, %v3449, -inf
        %3939 = vmax.xlane.f32.xlu0 %v3938
        %v3940 = vpop.xlane.xlu0 %3939
        %v3941 = vsel %vm1329, %v3454, -inf
        %3942 = vmax.xlane.f32.xlu0 %v3941
        %v3943 = vpop.xlane.xlu0 %3942
        %v3944 = vsel %vm1329, %v3459, -inf
        %3945 = vmax.xlane.f32.xlu0 %v3944
        %v3946 = vpop.xlane.xlu0 %3945
        %v3947 = vsel %vm1329, %v3464, -inf
        %3948 = vmax.xlane.f32.xlu0 %v3947
        %v3949 = vpop.xlane.xlu0 %3948
        %v3950 = vsel %vm1329, %v3582, -inf
        %3951 = vmax.xlane.f32.xlu0 %v3950
        %v3952 = vpop.xlane.xlu0 %3951
        %v3953 = vsel %vm1329, %v3587, -inf
        %3954 = vmax.xlane.f32.xlu0 %v3953
        %v3955 = vpop.xlane.xlu0 %3954
        %v3956 = vsel %vm1329, %v3592, -inf
        %3957 = vmax.xlane.f32.xlu0 %v3956
        %v3958 = vpop.xlane.xlu0 %3957
        %v3959 = vsel %vm1329, %v3597, -inf
        %3960 = vmax.xlane.f32.xlu0 %v3959
        %v3961 = vpop.xlane.xlu0 %3960
        %v3962 = vsel %vm1329, %v3602, -inf
        %3963 = vmax.xlane.f32.xlu0 %v3962
        %v3964 = vpop.xlane.xlu0 %3963
        %v3965 = vsel %vm1329, %v3607, -inf
        %3966 = vmax.xlane.f32.xlu0 %v3965
        %v3967 = vpop.xlane.xlu0 %3966
        %v3968 = vsel %vm1329, %v3612, -inf
        %3969 = vmax.xlane.f32.xlu0 %v3968
        %v3970 = vpop.xlane.xlu0 %3969
        %v3971 = vsel %vm1329, %v3617, -inf
        %3972 = vmax.xlane.f32.xlu0 %v3971
        %v3973 = vpop.xlane.xlu0 %3972
        %v3974 = vsel %vm1329, %v3735, -inf
        %3975 = vmax.xlane.f32.xlu0 %v3974
        %v3976 = vpop.xlane.xlu0 %3975
        %v3977 = vsel %vm1329, %v3740, -inf
        %3978 = vmax.xlane.f32.xlu0 %v3977
        %v3979 = vpop.xlane.xlu0 %3978
        %v3980 = vsel %vm1329, %v3745, -inf
        %3981 = vmax.xlane.f32.xlu0 %v3980
        %v3982 = vpop.xlane.xlu0 %3981
        %v3983 = vsel %vm1329, %v3750, -inf
        %3984 = vmax.xlane.f32.xlu0 %v3983
        %v3985 = vpop.xlane.xlu0 %3984
        %v3986 = vsel %vm1329, %v3755, -inf
        %3987 = vmax.xlane.f32.xlu0 %v3986
        %v3988 = vpop.xlane.xlu0 %3987
        %v3989 = vsel %vm1329, %v3760, -inf
        %3990 = vmax.xlane.f32.xlu0 %v3989
        %v3991 = vpop.xlane.xlu0 %3990
        %v3992 = vsel %vm1329, %v3765, -inf
        %3993 = vmax.xlane.f32.xlu0 %v3992
        %v3994 = vpop.xlane.xlu0 %3993
        %v3995 = vsel %vm1329, %v3770, -inf
        %3996 = vmax.xlane.f32.xlu0 %v3995
        %v3997 = vpop.xlane.xlu0 %3996
        %v3998 = vsel %vm1329, %v3888, -inf
        %3999 = vmax.xlane.f32.xlu0 %v3998
        %v4000 = vpop.xlane.xlu0 %3999
        %v4001 = vsel %vm1329, %v3893, -inf
        %4002 = vmax.xlane.f32.xlu0 %v4001
        %v4003 = vpop.xlane.xlu0 %4002
        %v4004 = vsel %vm1329, %v3898, -inf
        %4005 = vmax.xlane.f32.xlu0 %v4004
        %v4006 = vpop.xlane.xlu0 %4005
        %v4007 = vsel %vm1329, %v3903, -inf
        %4008 = vmax.xlane.f32.xlu0 %v4007
        %v4009 = vpop.xlane.xlu0 %4008
        %v4010 = vsel %vm1329, %v3908, -inf
        %4011 = vmax.xlane.f32.xlu0 %v4010
        %v4012 = vpop.xlane.xlu0 %4011
        %v4013 = vsel %vm1329, %v3913, -inf
        %4014 = vmax.xlane.f32.xlu0 %v4013
        %v4015 = vpop.xlane.xlu0 %4014
        %v4016 = vsel %vm1329, %v3918, -inf
        %4017 = vmax.xlane.f32.xlu0 %v4016
        %v4018 = vpop.xlane.xlu0 %4017
        %v4019 = vsel %vm1329, %v3923, -inf
        %4020 = vmax.xlane.f32.xlu0 %v4019
        %v4021 = vpop.xlane.xlu0 %4020
        %v4022 = vsub.f32 %v3429, %v3928
        %v4023 = vsub.f32 %v3434, %v3931
        %v4024 = vsub.f32 %v3439, %v3934
        %v4025 = vsub.f32 %v3444, %v3937
        %v4026 = vsub.f32 %v3449, %v3940
        %v4027 = vsub.f32 %v3454, %v3943
        %v4028 = vsub.f32 %v3459, %v3946
        %v4029 = vsub.f32 %v3464, %v3949
        %v4030 = vsub.f32 %v3582, %v3952
        %v4031 = vsub.f32 %v3587, %v3955
        %v4032 = vsub.f32 %v3592, %v3958
        %v4033 = vsub.f32 %v3597, %v3961
        %v4034 = vsub.f32 %v3602, %v3964
        %v4035 = vsub.f32 %v3607, %v3967
        %v4036 = vsub.f32 %v3612, %v3970
        %v4037 = vsub.f32 %v3617, %v3973
        %v4038 = vsub.f32 %v3735, %v3976
        %v4039 = vsub.f32 %v3740, %v3979
        %v4040 = vsub.f32 %v3745, %v3982
        %v4041 = vsub.f32 %v3750, %v3985
        %v4042 = vsub.f32 %v3755, %v3988
        %v4043 = vsub.f32 %v3760, %v3991
        %v4044 = vsub.f32 %v3765, %v3994
        %v4045 = vsub.f32 %v3770, %v3997
        %v4046 = vsub.f32 %v3888, %v4000
        %v4047 = vsub.f32 %v3893, %v4003
        %v4048 = vsub.f32 %v3898, %v4006
        %v4049 = vsub.f32 %v3903, %v4009
        %v4050 = vsub.f32 %v3908, %v4012
        %v4051 = vsub.f32 %v3913, %v4015
        %v4052 = vsub.f32 %v3918, %v4018
        %v4053 = vsub.f32 %v3923, %v4021
        %v4054 = vmul.f32 %v4022, 1.442695
        %v4055 = vpow.pop %v4054
        %v4056 = vmul.f32 %v4023, 1.442695
        %v4057 = vpow.pop %v4056
        %v4058 = vmul.f32 %v4024, 1.442695
        %v4059 = vpow.pop %v4058
        %v4060 = vmul.f32 %v4025, 1.442695
        %v4061 = vpow.pop %v4060
        %v4062 = vmul.f32 %v4026, 1.442695
        %v4063 = vpow.pop %v4062
        %v4064 = vmul.f32 %v4027, 1.442695
        %v4065 = vpow.pop %v4064
        %v4066 = vmul.f32 %v4028, 1.442695
        %v4067 = vpow.pop %v4066
        %v4068 = vmul.f32 %v4029, 1.442695
        %v4069 = vpow.pop %v4068
        %v4070 = vmul.f32 %v4030, 1.442695
        %v4071 = vpow.pop %v4070
        %v4072 = vmul.f32 %v4031, 1.442695
        %v4073 = vpow.pop %v4072
        %v4074 = vmul.f32 %v4032, 1.442695
        %v4075 = vpow.pop %v4074
        %v4076 = vmul.f32 %v4033, 1.442695
        %v4077 = vpow.pop %v4076
        %v4078 = vmul.f32 %v4034, 1.442695
        %v4079 = vpow.pop %v4078
        %v4080 = vmul.f32 %v4035, 1.442695
        %v4081 = vpow.pop %v4080
        %v4082 = vmul.f32 %v4036, 1.442695
        %v4083 = vpow.pop %v4082
        %v4084 = vmul.f32 %v4037, 1.442695
        %v4085 = vpow.pop %v4084
        %v4086 = vmul.f32 %v4038, 1.442695
        %v4087 = vpow.pop %v4086
        %v4088 = vmul.f32 %v4039, 1.442695
        %v4089 = vpow.pop %v4088
        %v4090 = vmul.f32 %v4040, 1.442695
        %v4091 = vpow.pop %v4090
        %v4092 = vmul.f32 %v4041, 1.442695
        %v4093 = vpow.pop %v4092
        %v4094 = vmul.f32 %v4042, 1.442695
        %v4095 = vpow.pop %v4094
        %v4096 = vmul.f32 %v4043, 1.442695
        %v4097 = vpow.pop %v4096
        %v4098 = vmul.f32 %v4044, 1.442695
        %v4099 = vpow.pop %v4098
        %v4100 = vmul.f32 %v4045, 1.442695
        %v4101 = vpow.pop %v4100
        %v4102 = vmul.f32 %v4046, 1.442695
        %v4103 = vpow.pop %v4102
        %v4104 = vmul.f32 %v4047, 1.442695
        %v4105 = vpow.pop %v4104
        %v4106 = vmul.f32 %v4048, 1.442695
        %v4107 = vpow.pop %v4106
        %v4108 = vmul.f32 %v4049, 1.442695
        %v4109 = vpow.pop %v4108
        %v4110 = vmul.f32 %v4050, 1.442695
        %v4111 = vpow.pop %v4110
        %v4112 = vmul.f32 %v4051, 1.442695
        %v4113 = vpow.pop %v4112
        %v4114 = vmul.f32 %v4052, 1.442695
        %v4115 = vpow.pop %v4114
        %v4116 = vmul.f32 %v4053, 1.442695
        %v4117 = vpow.pop %v4116
        %v4118 = vsel %vm1329, %v4055, 0.0
        %4119 = vadd.xlane.f32.xlu0 %v4118
        %v4120 = vpop.xlane.xlu0 %4119
        %v4121 = vsel %vm1329, %v4057, 0.0
        %4122 = vadd.xlane.f32.xlu0 %v4121
        %v4123 = vpop.xlane.xlu0 %4122
        %v4124 = vsel %vm1329, %v4059, 0.0
        %4125 = vadd.xlane.f32.xlu0 %v4124
        %v4126 = vpop.xlane.xlu0 %4125
        %v4127 = vsel %vm1329, %v4061, 0.0
        %4128 = vadd.xlane.f32.xlu0 %v4127
        %v4129 = vpop.xlane.xlu0 %4128
        %v4130 = vsel %vm1329, %v4063, 0.0
        %4131 = vadd.xlane.f32.xlu0 %v4130
        %v4132 = vpop.xlane.xlu0 %4131
        %v4133 = vsel %vm1329, %v4065, 0.0
        %4134 = vadd.xlane.f32.xlu0 %v4133
        %v4135 = vpop.xlane.xlu0 %4134
        %v4136 = vsel %vm1329, %v4067, 0.0
        %4137 = vadd.xlane.f32.xlu0 %v4136
        %v4138 = vpop.xlane.xlu0 %4137
        %v4139 = vsel %vm1329, %v4069, 0.0
        %4140 = vadd.xlane.f32.xlu0 %v4139
        %v4141 = vpop.xlane.xlu0 %4140
        %v4142 = vsel %vm1329, %v4071, 0.0
        %4143 = vadd.xlane.f32.xlu0 %v4142
        %v4144 = vpop.xlane.xlu0 %4143
        %v4145 = vsel %vm1329, %v4073, 0.0
        %4146 = vadd.xlane.f32.xlu0 %v4145
        %v4147 = vpop.xlane.xlu0 %4146
        %v4148 = vsel %vm1329, %v4075, 0.0
        %4149 = vadd.xlane.f32.xlu0 %v4148
        %v4150 = vpop.xlane.xlu0 %4149
        %v4151 = vsel %vm1329, %v4077, 0.0
        %4152 = vadd.xlane.f32.xlu0 %v4151
        %v4153 = vpop.xlane.xlu0 %4152
        %v4154 = vsel %vm1329, %v4079, 0.0
        %4155 = vadd.xlane.f32.xlu0 %v4154
        %v4156 = vpop.xlane.xlu0 %4155
        %v4157 = vsel %vm1329, %v4081, 0.0
        %4158 = vadd.xlane.f32.xlu0 %v4157
        %v4159 = vpop.xlane.xlu0 %4158
        %v4160 = vsel %vm1329, %v4083, 0.0
        %4161 = vadd.xlane.f32.xlu0 %v4160
        %v4162 = vpop.xlane.xlu0 %4161
        %v4163 = vsel %vm1329, %v4085, 0.0
        %4164 = vadd.xlane.f32.xlu0 %v4163
        %v4165 = vpop.xlane.xlu0 %4164
        %v4166 = vsel %vm1329, %v4087, 0.0
        %4167 = vadd.xlane.f32.xlu0 %v4166
        %v4168 = vpop.xlane.xlu0 %4167
        %v4169 = vsel %vm1329, %v4089, 0.0
        %4170 = vadd.xlane.f32.xlu0 %v4169
        %v4171 = vpop.xlane.xlu0 %4170
        %v4172 = vsel %vm1329, %v4091, 0.0
        %4173 = vadd.xlane.f32.xlu0 %v4172
        %v4174 = vpop.xlane.xlu0 %4173
        %v4175 = vsel %vm1329, %v4093, 0.0
        %4176 = vadd.xlane.f32.xlu0 %v4175
        %v4177 = vpop.xlane.xlu0 %4176
        %v4178 = vsel %vm1329, %v4095, 0.0
        %4179 = vadd.xlane.f32.xlu0 %v4178
        %v4180 = vpop.xlane.xlu0 %4179
        %v4181 = vsel %vm1329, %v4097, 0.0
        %4182 = vadd.xlane.f32.xlu0 %v4181
        %v4183 = vpop.xlane.xlu0 %4182
        %v4184 = vsel %vm1329, %v4099, 0.0
        %4185 = vadd.xlane.f32.xlu0 %v4184
        %v4186 = vpop.xlane.xlu0 %4185
        %v4187 = vsel %vm1329, %v4101, 0.0
        %4188 = vadd.xlane.f32.xlu0 %v4187
        %v4189 = vpop.xlane.xlu0 %4188
        %v4190 = vsel %vm1329, %v4103, 0.0
        %4191 = vadd.xlane.f32.xlu0 %v4190
        %v4192 = vpop.xlane.xlu0 %4191
        %v4193 = vsel %vm1329, %v4105, 0.0
        %4194 = vadd.xlane.f32.xlu0 %v4193
        %v4195 = vpop.xlane.xlu0 %4194
        %v4196 = vsel %vm1329, %v4107, 0.0
        %4197 = vadd.xlane.f32.xlu0 %v4196
        %v4198 = vpop.xlane.xlu0 %4197
        %v4199 = vsel %vm1329, %v4109, 0.0
        %4200 = vadd.xlane.f32.xlu0 %v4199
        %v4201 = vpop.xlane.xlu0 %4200
        %v4202 = vsel %vm1329, %v4111, 0.0
        %4203 = vadd.xlane.f32.xlu0 %v4202
        %v4204 = vpop.xlane.xlu0 %4203
        %v4205 = vsel %vm1329, %v4113, 0.0
        %4206 = vadd.xlane.f32.xlu0 %v4205
        %v4207 = vpop.xlane.xlu0 %4206
        %v4208 = vsel %vm1329, %v4115, 0.0
        %4209 = vadd.xlane.f32.xlu0 %v4208
        %v4210 = vpop.xlane.xlu0 %4209
        %v4211 = vsel %vm1329, %v4117, 0.0
        %4212 = vadd.xlane.f32.xlu0 %v4211
        %v4213 = vpop.xlane.xlu0 %4212
        %v4214 = vrcp.pop %v4120
        %v4215 = vrcp.pop %v4123
        %v4216 = vrcp.pop %v4126
        %v4217 = vrcp.pop %v4129
        %v4218 = vrcp.pop %v4132
        %v4219 = vrcp.pop %v4135
        %v4220 = vrcp.pop %v4138
        %v4221 = vrcp.pop %v4141
        %v4222 = vrcp.pop %v4144
        %v4223 = vrcp.pop %v4147
        %v4224 = vrcp.pop %v4150
        %v4225 = vrcp.pop %v4153
        %v4226 = vrcp.pop %v4156
        %v4227 = vrcp.pop %v4159
        %v4228 = vrcp.pop %v4162
        %v4229 = vrcp.pop %v4165
        %v4230 = vrcp.pop %v4168
        %v4231 = vrcp.pop %v4171
        %v4232 = vrcp.pop %v4174
        %v4233 = vrcp.pop %v4177
        %v4234 = vrcp.pop %v4180
        %v4235 = vrcp.pop %v4183
        %v4236 = vrcp.pop %v4186
        %v4237 = vrcp.pop %v4189
        %v4238 = vrcp.pop %v4192
        %v4239 = vrcp.pop %v4195
        %v4240 = vrcp.pop %v4198
        %v4241 = vrcp.pop %v4201
        %v4242 = vrcp.pop %v4204
        %v4243 = vrcp.pop %v4207
        %v4244 = vrcp.pop %v4210
        %v4245 = vrcp.pop %v4213
        %v4246 = vmul.f32 %v4055, %v4214
        %v4247 = vmul.f32 %v4057, %v4215
        %v4248 = vmul.f32 %v4059, %v4216
        %v4249 = vmul.f32 %v4061, %v4217
        %v4250 = vmul.f32 %v4063, %v4218
        %v4251 = vmul.f32 %v4065, %v4219
        %v4252 = vmul.f32 %v4067, %v4220
        %v4253 = vmul.f32 %v4069, %v4221
        %v4254 = vmul.f32 %v4071, %v4222
        %v4255 = vmul.f32 %v4073, %v4223
        %v4256 = vmul.f32 %v4075, %v4224
        %v4257 = vmul.f32 %v4077, %v4225
        %v4258 = vmul.f32 %v4079, %v4226
        %v4259 = vmul.f32 %v4081, %v4227
        %v4260 = vmul.f32 %v4083, %v4228
        %v4261 = vmul.f32 %v4085, %v4229
        %v4262 = vmul.f32 %v4087, %v4230
        %v4263 = vmul.f32 %v4089, %v4231
        %v4264 = vmul.f32 %v4091, %v4232
        %v4265 = vmul.f32 %v4093, %v4233
        %v4266 = vmul.f32 %v4095, %v4234
        %v4267 = vmul.f32 %v4097, %v4235
        %v4268 = vmul.f32 %v4099, %v4236
        %v4269 = vmul.f32 %v4101, %v4237
        %v4270 = vmul.f32 %v4103, %v4238
        %v4271 = vmul.f32 %v4105, %v4239
        %v4272 = vmul.f32 %v4107, %v4240
        %v4273 = vmul.f32 %v4109, %v4241
        %v4274 = vmul.f32 %v4111, %v4242
        %v4275 = vmul.f32 %v4113, %v4243
        %v4276 = vmul.f32 %v4115, %v4244
        %v4277 = vmul.f32 %v4117, %v4245
        %4278 = vrot.lane.b32.xlu0 %v3220, 64
        %v4279 = vpop.permute.xlu0 %4278
        %4280 = vrot.lane.b32.xlu0 %v3225, 64
        %v4281 = vpop.permute.xlu0 %4280
        %4282 = vrot.lane.b32.xlu0 %v3230, 64
        %v4283 = vpop.permute.xlu0 %4282
        %4284 = vrot.lane.b32.xlu0 %v3235, 64
        %v4285 = vpop.permute.xlu0 %4284
        %4286 = vrot.lane.b32.xlu0 %v3240, 64
        %v4287 = vpop.permute.xlu0 %4286
        %4288 = vrot.lane.b32.xlu0 %v3245, 64
        %v4289 = vpop.permute.xlu0 %4288
        %4290 = vrot.lane.b32.xlu0 %v3250, 64
        %v4291 = vpop.permute.xlu0 %4290
        %4292 = vrot.lane.b32.xlu0 %v3255, 64
        %v4293 = vpop.permute.xlu0 %4292
        %v4303 = vsel %vm1329, %v4246, 0
        %v4306 = vsel %vm1329, %v4247, 0
        %v4309 = vsel %vm1329, %v4248, 0
        %v4312 = vsel %vm1329, %v4249, 0
        %v4315 = vsel %vm1329, %v4250, 0
        %v4318 = vsel %vm1329, %v4251, 0
        %v4321 = vsel %vm1329, %v4252, 0
        %v4324 = vsel %vm1329, %v4253, 0
        %4326 = vmatprep.subr.mxu0 0.0
        %4327 = vmatpush1.msra.mxu0 %v4279
        %4328 = vmatprep.subr.mxu0 0.0
        %4329 = vmatpush1.msra.mxu0 %v4281
        %4330 = vmatprep.subr.mxu0 0.0
        %4331 = vmatpush1.msra.mxu0 %v4283
        %4332 = vmatprep.subr.mxu0 0.0
        %4333 = vmatpush1.msra.mxu0 %v4285
        %4334 = vmatprep.subr.mxu0 0.0
        %4335 = vmatpush1.msra.mxu0 %v4287
        %4336 = vmatprep.subr.mxu0 0.0
        %4337 = vmatpush1.msra.mxu0 %v4289
        %4338 = vmatprep.subr.mxu0 0.0
        %4339 = vmatpush1.msra.mxu0 %v4291
        %4340 = vmatprep.subr.mxu0 0.0
        %4341 = vmatpush1.msra.mxu0 %v4293
        %4342 = vmatprep.subr.mxu0 0.0
        %4343 = vmatpush1.msra.mxu0 0.0
        %4344 = vmatprep.subr.mxu0 0.0
        %4345 = vmatpush1.msra.mxu0 0.0
        %4346 = vmatprep.subr.mxu0 0.0
        %4347 = vmatpush1.msra.mxu0 0.0
        %4348 = vmatprep.subr.mxu0 0.0
        %4349 = vmatpush1.msra.mxu0 0.0
        %4350 = vmatprep.subr.mxu0 0.0
        %4351 = vmatpush1.msra.mxu0 0.0
        %4352 = vmatprep.subr.mxu0 0.0
        %4353 = vmatpush1.msra.mxu0 0.0
        %4354 = vmatprep.subr.mxu0 0.0
        %4355 = vmatpush1.msra.mxu0 0.0
        %4356 = vmatprep.subr.mxu0 0.0
        %4357 = vmatpush1.msra.mxu0 0.0
        %4358 = vmatprep.subr.mxu0 0.0
        %4359 = vmatpush1.msra.mxu0 0.0
        %4360 = vmatprep.subr.mxu0 0.0
        %4361 = vmatpush1.msra.mxu0 0.0
        %4362 = vmatprep.subr.mxu0 0.0
        %4363 = vmatpush1.msra.mxu0 0.0
        %4364 = vmatprep.subr.mxu0 0.0
        %4365 = vmatpush1.msra.mxu0 0.0
        %4366 = vmatprep.subr.mxu0 0.0
        %4367 = vmatpush1.msra.mxu0 0.0
        %4368 = vmatprep.subr.mxu0 0.0
        %4369 = vmatpush1.msra.mxu0 0.0
        %4370 = vmatprep.subr.mxu0 0.0
        %4371 = vmatpush1.msra.mxu0 0.0
        %4372 = vmatprep.subr.mxu0 0.0
        %4373 = vmatpush1.msra.mxu0 0.0
        %4374 = vmatprep.subr.mxu0 0.0
        %4375 = vmatpush1.msra.mxu0 0.0
        %4376 = vmatprep.subr.mxu0 0.0
        %4377 = vmatpush1.msra.mxu0 0.0
        %4378 = vmatprep.subr.mxu0 0.0
        %4379 = vmatpush1.msra.mxu0 0.0
        %4380 = vmatprep.subr.mxu0 0.0
        %4381 = vmatpush1.msra.mxu0 0.0
        %4382 = vmatprep.subr.mxu0 0.0
        %4383 = vmatpush1.msra.mxu0 0.0
        %4384 = vmatprep.subr.mxu0 0.0
        %4385 = vmatpush1.msra.mxu0 0.0
        %4386 = vmatprep.subr.mxu0 0.0
        %4387 = vmatpush1.msra.mxu0 0.0
        %4388 = vmatprep.subr.mxu0 0.0
        %4389 = vmatpush1.msra.mxu0 0.0
        %4390 = vmatprep.mubr.f32.mxu0 0.0
        %4391 = vmatmul.mubr.f32.gmra.mrb[0].mxu0 %v4303
        %v4392 = vpop.f32.mrb[0].mxu0
        %v4393 = vadd.f32 0.0, %v4392
        %v4394 = vpop.f32.mrb[0].mxu0
        %4395 = vmatprep.mubr.f32.mxu0 0.0
        %4396 = vmatmul.mubr.f32.gmra.mrb[0].mxu0 %v4306
        %v4397 = vpop.f32.mrb[0].mxu0
        %v4398 = vadd.f32 0.0, %v4397
        %v4399 = vpop.f32.mrb[0].mxu0
        %4400 = vmatprep.mubr.f32.mxu0 0.0
        %4401 = vmatmul.mubr.f32.gmra.mrb[0].mxu0 %v4309
        %v4402 = vpop.f32.mrb[0].mxu0
        %v4403 = vadd.f32 0.0, %v4402
        %v4404 = vpop.f32.mrb[0].mxu0
        %4405 = vmatprep.mubr.f32.mxu0 0.0
        %4406 = vmatmul.mubr.f32.gmra.mrb[0].mxu0 %v4312
        %v4407 = vpop.f32.mrb[0].mxu0
        %v4408 = vadd.f32 0.0, %v4407
        %v4409 = vpop.f32.mrb[0].mxu0
        %4410 = vmatprep.mubr.f32.mxu0 0.0
        %4411 = vmatmul.mubr.f32.gmra.mrb[0].mxu0 %v4315
        %v4412 = vpop.f32.mrb[0].mxu0
        %v4413 = vadd.f32 0.0, %v4412
        %v4414 = vpop.f32.mrb[0].mxu0
        %4415 = vmatprep.mubr.f32.mxu0 0.0
        %4416 = vmatmul.mubr.f32.gmra.mrb[0].mxu0 %v4318
        %v4417 = vpop.f32.mrb[0].mxu0
        %v4418 = vadd.f32 0.0, %v4417
        %v4419 = vpop.f32.mrb[0].mxu0
        %4420 = vmatprep.mubr.f32.mxu0 0.0
        %4421 = vmatmul.mubr.f32.gmra.mrb[0].mxu0 %v4321
        %v4422 = vpop.f32.mrb[0].mxu0
        %v4423 = vadd.f32 0.0, %v4422
        %v4424 = vpop.f32.mrb[0].mxu0
        %4425 = vmatprep.mubr.f32.mxu0 0.0
        %4426 = vmatmul.mubr.f32.gmra.mrb[0].mxu0 %v4324
        %v4427 = vpop.f32.mrb[0].mxu0
        %v4428 = vadd.f32 0.0, %v4427
        %v4429 = vpop.f32.mrb[0].mxu0
        %4430 = vdwg.mxu0
        %4431 = vrot.lane.b32.xlu0 %v3267, 64
        %v4432 = vpop.permute.xlu0 %4431
        %4433 = vrot.lane.b32.xlu0 %v3269, 64
        %v4434 = vpop.permute.xlu0 %4433
        %4435 = vrot.lane.b32.xlu0 %v3271, 64
        %v4436 = vpop.permute.xlu0 %4435
        %4437 = vrot.lane.b32.xlu0 %v3273, 64
        %v4438 = vpop.permute.xlu0 %4437
        %4439 = vrot.lane.b32.xlu0 %v3275, 64
        %v4440 = vpop.permute.xlu0 %4439
        %4441 = vrot.lane.b32.xlu0 %v3277, 64
        %v4442 = vpop.permute.xlu0 %4441
        %4443 = vrot.lane.b32.xlu0 %v3279, 64
        %v4444 = vpop.permute.xlu0 %4443
        %4445 = vrot.lane.b32.xlu0 %v3281, 64
        %v4446 = vpop.permute.xlu0 %4445
        %v4456 = vsel %vm1329, %v4254, 0
        %v4459 = vsel %vm1329, %v4255, 0
        %v4462 = vsel %vm1329, %v4256, 0
        %v4465 = vsel %vm1329, %v4257, 0
        %v4468 = vsel %vm1329, %v4258, 0
        %v4471 = vsel %vm1329, %v4259, 0
        %v4474 = vsel %vm1329, %v4260, 0
        %v4477 = vsel %vm1329, %v4261, 0
        %4479 = vmatprep.subr.mxu0 0.0
        %4480 = vmatpush1.msra.mxu0 %v4432
        %4481 = vmatprep.subr.mxu0 0.0
        %4482 = vmatpush1.msra.mxu0 %v4434
        %4483 = vmatprep.subr.mxu0 0.0
        %4484 = vmatpush1.msra.mxu0 %v4436
        %4485 = vmatprep.subr.mxu0 0.0
        %4486 = vmatpush1.msra.mxu0 %v4438
        %4487 = vmatprep.subr.mxu0 0.0
        %4488 = vmatpush1.msra.mxu0 %v4440
        %4489 = vmatprep.subr.mxu0 0.0
        %4490 = vmatpush1.msra.mxu0 %v4442
        %4491 = vmatprep.subr.mxu0 0.0
        %4492 = vmatpush1.msra.mxu0 %v4444
        %4493 = vmatprep.subr.mxu0 0.0
        %4494 = vmatpush1.msra.mxu0 %v4446
        %4495 = vmatprep.subr.mxu0 0.0
        %4496 = vmatpush1.msra.mxu0 0.0
        %4497 = vmatprep.subr.mxu0 0.0
        %4498 = vmatpush1.msra.mxu0 0.0
        %4499 = vmatprep.subr.mxu0 0.0
        %4500 = vmatpush1.msra.mxu0 0.0
        %4501 = vmatprep.subr.mxu0 0.0
        %4502 = vmatpush1.msra.mxu0 0.0
        %4503 = vmatprep.subr.mxu0 0.0
        %4504 = vmatpush1.msra.mxu0 0.0
        %4505 = vmatprep.subr.mxu0 0.0
        %4506 = vmatpush1.msra.mxu0 0.0
        %4507 = vmatprep.subr.mxu0 0.0
        %4508 = vmatpush1.msra.mxu0 0.0
        %4509 = vmatprep.subr.mxu0 0.0
        %4510 = vmatpush1.msra.mxu0 0.0
        %4511 = vmatprep.subr.mxu0 0.0
        %4512 = vmatpush1.msra.mxu0 0.0
        %4513 = vmatprep.subr.mxu0 0.0
        %4514 = vmatpush1.msra.mxu0 0.0
        %4515 = vmatprep.subr.mxu0 0.0
        %4516 = vmatpush1.msra.mxu0 0.0
        %4517 = vmatprep.subr.mxu0 0.0
        %4518 = vmatpush1.msra.mxu0 0.0
        %4519 = vmatprep.subr.mxu0 0.0
        %4520 = vmatpush1.msra.mxu0 0.0
        %4521 = vmatprep.subr.mxu0 0.0
        %4522 = vmatpush1.msra.mxu0 0.0
        %4523 = vmatprep.subr.mxu0 0.0
        %4524 = vmatpush1.msra.mxu0 0.0
        %4525 = vmatprep.subr.mxu0 0.0
        %4526 = vmatpush1.msra.mxu0 0.0
        %4527 = vmatprep.subr.mxu0 0.0
        %4528 = vmatpush1.msra.mxu0 0.0
        %4529 = vmatprep.subr.mxu0 0.0
        %4530 = vmatpush1.msra.mxu0 0.0
        %4531 = vmatprep.subr.mxu0 0.0
        %4532 = vmatpush1.msra.mxu0 0.0
        %4533 = vmatprep.subr.mxu0 0.0
        %4534 = vmatpush1.msra.mxu0 0.0
        %4535 = vmatprep.subr.mxu0 0.0
        %4536 = vmatpush1.msra.mxu0 0.0
        %4537 = vmatprep.subr.mxu0 0.0
        %4538 = vmatpush1.msra.mxu0 0.0
        %4539 = vmatprep.subr.mxu0 0.0
        %4540 = vmatpush1.msra.mxu0 0.0
        %4541 = vmatprep.subr.mxu0 0.0
        %4542 = vmatpush1.msra.mxu0 0.0
        %4543 = vmatprep.mubr.f32.mxu0 0.0
        %4544 = vmatmul.mubr.f32.gmra.mrb[0].mxu0 %v4456
        %v4545 = vpop.f32.mrb[0].mxu0
        %v4546 = vadd.f32 0.0, %v4545
        %v4547 = vpop.f32.mrb[0].mxu0
        %4548 = vmatprep.mubr.f32.mxu0 0.0
        %4549 = vmatmul.mubr.f32.gmra.mrb[0].mxu0 %v4459
        %v4550 = vpop.f32.mrb[0].mxu0
        %v4551 = vadd.f32 0.0, %v4550
        %v4552 = vpop.f32.mrb[0].mxu0
        %4553 = vmatprep.mubr.f32.mxu0 0.0
        %4554 = vmatmul.mubr.f32.gmra.mrb[0].mxu0 %v4462
        %v4555 = vpop.f32.mrb[0].mxu0
        %v4556 = vadd.f32 0.0, %v4555
        %v4557 = vpop.f32.mrb[0].mxu0
        %4558 = vmatprep.mubr.f32.mxu0 0.0
        %4559 = vmatmul.mubr.f32.gmra.mrb[0].mxu0 %v4465
        %v4560 = vpop.f32.mrb[0].mxu0
        %v4561 = vadd.f32 0.0, %v4560
        %v4562 = vpop.f32.mrb[0].mxu0
        %4563 = vmatprep.mubr.f32.mxu0 0.0
        %4564 = vmatmul.mubr.f32.gmra.mrb[0].mxu0 %v4468
        %v4565 = vpop.f32.mrb[0].mxu0
        %v4566 = vadd.f32 0.0, %v4565
        %v4567 = vpop.f32.mrb[0].mxu0
        %4568 = vmatprep.mubr.f32.mxu0 0.0
        %4569 = vmatmul.mubr.f32.gmra.mrb[0].mxu0 %v4471
        %v4570 = vpop.f32.mrb[0].mxu0
        %v4571 = vadd.f32 0.0, %v4570
        %v4572 = vpop.f32.mrb[0].mxu0
        %4573 = vmatprep.mubr.f32.mxu0 0.0
        %4574 = vmatmul.mubr.f32.gmra.mrb[0].mxu0 %v4474
        %v4575 = vpop.f32.mrb[0].mxu0
        %v4576 = vadd.f32 0.0, %v4575
        %v4577 = vpop.f32.mrb[0].mxu0
        %4578 = vmatprep.mubr.f32.mxu0 0.0
        %4579 = vmatmul.mubr.f32.gmra.mrb[0].mxu0 %v4477
        %v4580 = vpop.f32.mrb[0].mxu0
        %v4581 = vadd.f32 0.0, %v4580
        %v4582 = vpop.f32.mrb[0].mxu0
        %4583 = vdwg.mxu0
        %4584 = vrot.lane.b32.xlu0 %v3283, 64
        %v4585 = vpop.permute.xlu0 %4584
        %4586 = vrot.lane.b32.xlu0 %v3285, 64
        %v4587 = vpop.permute.xlu0 %4586
        %4588 = vrot.lane.b32.xlu0 %v3287, 64
        %v4589 = vpop.permute.xlu0 %4588
        %4590 = vrot.lane.b32.xlu0 %v3289, 64
        %v4591 = vpop.permute.xlu0 %4590
        %4592 = vrot.lane.b32.xlu0 %v3291, 64
        %v4593 = vpop.permute.xlu0 %4592
        %4594 = vrot.lane.b32.xlu0 %v3293, 64
        %v4595 = vpop.permute.xlu0 %4594
        %4596 = vrot.lane.b32.xlu0 %v3295, 64
        %v4597 = vpop.permute.xlu0 %4596
        %4598 = vrot.lane.b32.xlu0 %v3297, 64
        %v4599 = vpop.permute.xlu0 %4598
        %v4609 = vsel %vm1329, %v4262, 0
        %v4612 = vsel %vm1329, %v4263, 0
        %v4615 = vsel %vm1329, %v4264, 0
        %v4618 = vsel %vm1329, %v4265, 0
        %v4621 = vsel %vm1329, %v4266, 0
        %v4624 = vsel %vm1329, %v4267, 0
        %v4627 = vsel %vm1329, %v4268, 0
        %v4630 = vsel %vm1329, %v4269, 0
        %4632 = vmatprep.subr.mxu0 0.0
        %4633 = vmatpush1.msra.mxu0 %v4585
        %4634 = vmatprep.subr.mxu0 0.0
        %4635 = vmatpush1.msra.mxu0 %v4587
        %4636 = vmatprep.subr.mxu0 0.0
        %4637 = vmatpush1.msra.mxu0 %v4589
        %4638 = vmatprep.subr.mxu0 0.0
        %4639 = vmatpush1.msra.mxu0 %v4591
        %4640 = vmatprep.subr.mxu0 0.0
        %4641 = vmatpush1.msra.mxu0 %v4593
        %4642 = vmatprep.subr.mxu0 0.0
        %4643 = vmatpush1.msra.mxu0 %v4595
        %4644 = vmatprep.subr.mxu0 0.0
        %4645 = vmatpush1.msra.mxu0 %v4597
        %4646 = vmatprep.subr.mxu0 0.0
        %4647 = vmatpush1.msra.mxu0 %v4599
        %4648 = vmatprep.subr.mxu0 0.0
        %4649 = vmatpush1.msra.mxu0 0.0
        %4650 = vmatprep.subr.mxu0 0.0
        %4651 = vmatpush1.msra.mxu0 0.0
        %4652 = vmatprep.subr.mxu0 0.0
        %4653 = vmatpush1.msra.mxu0 0.0
        %4654 = vmatprep.subr.mxu0 0.0
        %4655 = vmatpush1.msra.mxu0 0.0
        %4656 = vmatprep.subr.mxu0 0.0
        %4657 = vmatpush1.msra.mxu0 0.0
        %4658 = vmatprep.subr.mxu0 0.0
        %4659 = vmatpush1.msra.mxu0 0.0
        %4660 = vmatprep.subr.mxu0 0.0
        %4661 = vmatpush1.msra.mxu0 0.0
        %4662 = vmatprep.subr.mxu0 0.0
        %4663 = vmatpush1.msra.mxu0 0.0
        %4664 = vmatprep.subr.mxu0 0.0
        %4665 = vmatpush1.msra.mxu0 0.0
        %4666 = vmatprep.subr.mxu0 0.0
        %4667 = vmatpush1.msra.mxu0 0.0
        %4668 = vmatprep.subr.mxu0 0.0
        %4669 = vmatpush1.msra.mxu0 0.0
        %4670 = vmatprep.subr.mxu0 0.0
        %4671 = vmatpush1.msra.mxu0 0.0
        %4672 = vmatprep.subr.mxu0 0.0
        %4673 = vmatpush1.msra.mxu0 0.0
        %4674 = vmatprep.subr.mxu0 0.0
        %4675 = vmatpush1.msra.mxu0 0.0
        %4676 = vmatprep.subr.mxu0 0.0
        %4677 = vmatpush1.msra.mxu0 0.0
        %4678 = vmatprep.subr.mxu0 0.0
        %4679 = vmatpush1.msra.mxu0 0.0
        %4680 = vmatprep.subr.mxu0 0.0
        %4681 = vmatpush1.msra.mxu0 0.0
        %4682 = vmatprep.subr.mxu0 0.0
        %4683 = vmatpush1.msra.mxu0 0.0
        %4684 = vmatprep.subr.mxu0 0.0
        %4685 = vmatpush1.msra.mxu0 0.0
        %4686 = vmatprep.subr.mxu0 0.0
        %4687 = vmatpush1.msra.mxu0 0.0
        %4688 = vmatprep.subr.mxu0 0.0
        %4689 = vmatpush1.msra.mxu0 0.0
        %4690 = vmatprep.subr.mxu0 0.0
        %4691 = vmatpush1.msra.mxu0 0.0
        %4692 = vmatprep.subr.mxu0 0.0
        %4693 = vmatpush1.msra.mxu0 0.0
        %4694 = vmatprep.subr.mxu0 0.0
        %4695 = vmatpush1.msra.mxu0 0.0
        %4696 = vmatprep.mubr.f32.mxu0 0.0
        %4697 = vmatmul.mubr.f32.gmra.mrb[0].mxu0 %v4609
        %v4698 = vpop.f32.mrb[0].mxu0
        %v4699 = vadd.f32 0.0, %v4698
        %v4700 = vpop.f32.mrb[0].mxu0
        %4701 = vmatprep.mubr.f32.mxu0 0.0
        %4702 = vmatmul.mubr.f32.gmra.mrb[0].mxu0 %v4612
        %v4703 = vpop.f32.mrb[0].mxu0
        %v4704 = vadd.f32 0.0, %v4703
        %v4705 = vpop.f32.mrb[0].mxu0
        %4706 = vmatprep.mubr.f32.mxu0 0.0
        %4707 = vmatmul.mubr.f32.gmra.mrb[0].mxu0 %v4615
        %v4708 = vpop.f32.mrb[0].mxu0
        %v4709 = vadd.f32 0.0, %v4708
        %v4710 = vpop.f32.mrb[0].mxu0
        %4711 = vmatprep.mubr.f32.mxu0 0.0
        %4712 = vmatmul.mubr.f32.gmra.mrb[0].mxu0 %v4618
        %v4713 = vpop.f32.mrb[0].mxu0
        %v4714 = vadd.f32 0.0, %v4713
        %v4715 = vpop.f32.mrb[0].mxu0
        %4716 = vmatprep.mubr.f32.mxu0 0.0
        %4717 = vmatmul.mubr.f32.gmra.mrb[0].mxu0 %v4621
        %v4718 = vpop.f32.mrb[0].mxu0
        %v4719 = vadd.f32 0.0, %v4718
        %v4720 = vpop.f32.mrb[0].mxu0
        %4721 = vmatprep.mubr.f32.mxu0 0.0
        %4722 = vmatmul.mubr.f32.gmra.mrb[0].mxu0 %v4624
        %v4723 = vpop.f32.mrb[0].mxu0
        %v4724 = vadd.f32 0.0, %v4723
        %v4725 = vpop.f32.mrb[0].mxu0
        %4726 = vmatprep.mubr.f32.mxu0 0.0
        %4727 = vmatmul.mubr.f32.gmra.mrb[0].mxu0 %v4627
        %v4728 = vpop.f32.mrb[0].mxu0
        %v4729 = vadd.f32 0.0, %v4728
        %v4730 = vpop.f32.mrb[0].mxu0
        %4731 = vmatprep.mubr.f32.mxu0 0.0
        %4732 = vmatmul.mubr.f32.gmra.mrb[0].mxu0 %v4630
        %v4733 = vpop.f32.mrb[0].mxu0
        %v4734 = vadd.f32 0.0, %v4733
        %v4735 = vpop.f32.mrb[0].mxu0
        %4736 = vdwg.mxu0
        %4737 = vrot.lane.b32.xlu0 %v3299, 64
        %v4738 = vpop.permute.xlu0 %4737
        %4739 = vrot.lane.b32.xlu0 %v3301, 64
        %v4740 = vpop.permute.xlu0 %4739
        %4741 = vrot.lane.b32.xlu0 %v3303, 64
        %v4742 = vpop.permute.xlu0 %4741
        %4743 = vrot.lane.b32.xlu0 %v3305, 64
        %v4744 = vpop.permute.xlu0 %4743
        %4745 = vrot.lane.b32.xlu0 %v3307, 64
        %v4746 = vpop.permute.xlu0 %4745
        %4747 = vrot.lane.b32.xlu0 %v3309, 64
        %v4748 = vpop.permute.xlu0 %4747
        %4749 = vrot.lane.b32.xlu0 %v3311, 64
        %v4750 = vpop.permute.xlu0 %4749
        %4751 = vrot.lane.b32.xlu0 %v3313, 64
        %v4752 = vpop.permute.xlu0 %4751
        %v4762 = vsel %vm1329, %v4270, 0
        %v4765 = vsel %vm1329, %v4271, 0
        %v4768 = vsel %vm1329, %v4272, 0
        %v4771 = vsel %vm1329, %v4273, 0
        %v4774 = vsel %vm1329, %v4274, 0
        %v4777 = vsel %vm1329, %v4275, 0
        %v4780 = vsel %vm1329, %v4276, 0
        %v4783 = vsel %vm1329, %v4277, 0
        %4785 = vmatprep.subr.mxu0 0.0
        %4786 = vmatpush1.msra.mxu0 %v4738
        %4787 = vmatprep.subr.mxu0 0.0
        %4788 = vmatpush1.msra.mxu0 %v4740
        %4789 = vmatprep.subr.mxu0 0.0
        %4790 = vmatpush1.msra.mxu0 %v4742
        %4791 = vmatprep.subr.mxu0 0.0
        %4792 = vmatpush1.msra.mxu0 %v4744
        %4793 = vmatprep.subr.mxu0 0.0
        %4794 = vmatpush1.msra.mxu0 %v4746
        %4795 = vmatprep.subr.mxu0 0.0
        %4796 = vmatpush1.msra.mxu0 %v4748
        %4797 = vmatprep.subr.mxu0 0.0
        %4798 = vmatpush1.msra.mxu0 %v4750
        %4799 = vmatprep.subr.mxu0 0.0
        %4800 = vmatpush1.msra.mxu0 %v4752
        %4801 = vmatprep.subr.mxu0 0.0
        %4802 = vmatpush1.msra.mxu0 0.0
        %4803 = vmatprep.subr.mxu0 0.0
        %4804 = vmatpush1.msra.mxu0 0.0
        %4805 = vmatprep.subr.mxu0 0.0
        %4806 = vmatpush1.msra.mxu0 0.0
        %4807 = vmatprep.subr.mxu0 0.0
        %4808 = vmatpush1.msra.mxu0 0.0
        %4809 = vmatprep.subr.mxu0 0.0
        %4810 = vmatpush1.msra.mxu0 0.0
        %4811 = vmatprep.subr.mxu0 0.0
        %4812 = vmatpush1.msra.mxu0 0.0
        %4813 = vmatprep.subr.mxu0 0.0
        %4814 = vmatpush1.msra.mxu0 0.0
        %4815 = vmatprep.subr.mxu0 0.0
        %4816 = vmatpush1.msra.mxu0 0.0
        %4817 = vmatprep.subr.mxu0 0.0
        %4818 = vmatpush1.msra.mxu0 0.0
        %4819 = vmatprep.subr.mxu0 0.0
        %4820 = vmatpush1.msra.mxu0 0.0
        %4821 = vmatprep.subr.mxu0 0.0
        %4822 = vmatpush1.msra.mxu0 0.0
        %4823 = vmatprep.subr.mxu0 0.0
        %4824 = vmatpush1.msra.mxu0 0.0
        %4825 = vmatprep.subr.mxu0 0.0
        %4826 = vmatpush1.msra.mxu0 0.0
        %4827 = vmatprep.subr.mxu0 0.0
        %4828 = vmatpush1.msra.mxu0 0.0
        %4829 = vmatprep.subr.mxu0 0.0
        %4830 = vmatpush1.msra.mxu0 0.0
        %4831 = vmatprep.subr.mxu0 0.0
        %4832 = vmatpush1.msra.mxu0 0.0
        %4833 = vmatprep.subr.mxu0 0.0
        %4834 = vmatpush1.msra.mxu0 0.0
        %4835 = vmatprep.subr.mxu0 0.0
        %4836 = vmatpush1.msra.mxu0 0.0
        %4837 = vmatprep.subr.mxu0 0.0
        %4838 = vmatpush1.msra.mxu0 0.0
        %4839 = vmatprep.subr.mxu0 0.0
        %4840 = vmatpush1.msra.mxu0 0.0
        %4841 = vmatprep.subr.mxu0 0.0
        %4842 = vmatpush1.msra.mxu0 0.0
        %4843 = vmatprep.subr.mxu0 0.0
        %4844 = vmatpush1.msra.mxu0 0.0
        %4845 = vmatprep.subr.mxu0 0.0
        %4846 = vmatpush1.msra.mxu0 0.0
        %4847 = vmatprep.subr.mxu0 0.0
        %4848 = vmatpush1.msra.mxu0 0.0
        %4849 = vmatprep.mubr.f32.mxu0 0.0
        %4850 = vmatmul.mubr.f32.gmra.mrb[0].mxu0 %v4762
        %v4851 = vpop.f32.mrb[0].mxu0
        %v4852 = vadd.f32 0.0, %v4851
        %v4853 = vpop.f32.mrb[0].mxu0
        %4854 = vmatprep.mubr.f32.mxu0 0.0
        %4855 = vmatmul.mubr.f32.gmra.mrb[0].mxu0 %v4765
        %v4856 = vpop.f32.mrb[0].mxu0
        %v4857 = vadd.f32 0.0, %v4856
        %v4858 = vpop.f32.mrb[0].mxu0
        %4859 = vmatprep.mubr.f32.mxu0 0.0
        %4860 = vmatmul.mubr.f32.gmra.mrb[0].mxu0 %v4768
        %v4861 = vpop.f32.mrb[0].mxu0
        %v4862 = vadd.f32 0.0, %v4861
        %v4863 = vpop.f32.mrb[0].mxu0
        %4864 = vmatprep.mubr.f32.mxu0 0.0
        %4865 = vmatmul.mubr.f32.gmra.mrb[0].mxu0 %v4771
        %v4866 = vpop.f32.mrb[0].mxu0
        %v4867 = vadd.f32 0.0, %v4866
        %v4868 = vpop.f32.mrb[0].mxu0
        %4869 = vmatprep.mubr.f32.mxu0 0.0
        %4870 = vmatmul.mubr.f32.gmra.mrb[0].mxu0 %v4774
        %v4871 = vpop.f32.mrb[0].mxu0
        %v4872 = vadd.f32 0.0, %v4871
        %v4873 = vpop.f32.mrb[0].mxu0
        %4874 = vmatprep.mubr.f32.mxu0 0.0
        %4875 = vmatmul.mubr.f32.gmra.mrb[0].mxu0 %v4777
        %v4876 = vpop.f32.mrb[0].mxu0
        %v4877 = vadd.f32 0.0, %v4876
        %v4878 = vpop.f32.mrb[0].mxu0
        %4879 = vmatprep.mubr.f32.mxu0 0.0
        %4880 = vmatmul.mubr.f32.gmra.mrb[0].mxu0 %v4780
        %v4881 = vpop.f32.mrb[0].mxu0
        %v4882 = vadd.f32 0.0, %v4881
        %v4883 = vpop.f32.mrb[0].mxu0
        %4884 = vmatprep.mubr.f32.mxu0 0.0
        %4885 = vmatmul.mubr.f32.gmra.mrb[0].mxu0 %v4783
        %v4886 = vpop.f32.mrb[0].mxu0
        %v4887 = vadd.f32 0.0, %v4886
        %v4888 = vpop.f32.mrb[0].mxu0
        %4889 = vdwg.mxu0
        %4898 = vrot.lane.b32.xlu0 %v4546, 8
        %v4899 = vpop.permute.xlu0 %4898
        %4900 = vrot.lane.b32.xlu0 %v4551, 8
        %v4901 = vpop.permute.xlu0 %4900
        %4902 = vrot.lane.b32.xlu0 %v4556, 8
        %v4903 = vpop.permute.xlu0 %4902
        %4904 = vrot.lane.b32.xlu0 %v4561, 8
        %v4905 = vpop.permute.xlu0 %4904
        %4906 = vrot.lane.b32.xlu0 %v4566, 8
        %v4907 = vpop.permute.xlu0 %4906
        %4908 = vrot.lane.b32.xlu0 %v4571, 8
        %v4909 = vpop.permute.xlu0 %4908
        %4910 = vrot.lane.b32.xlu0 %v4576, 8
        %v4911 = vpop.permute.xlu0 %4910
        %4912 = vrot.lane.b32.xlu0 %v4581, 8
        %v4913 = vpop.permute.xlu0 %4912
        %4930 = vrot.lane.b32.xlu0 %v4699, 16
        %v4931 = vpop.permute.xlu0 %4930
        %4932 = vrot.lane.b32.xlu0 %v4704, 16
        %v4933 = vpop.permute.xlu0 %4932
        %4934 = vrot.lane.b32.xlu0 %v4709, 16
        %v4935 = vpop.permute.xlu0 %4934
        %4936 = vrot.lane.b32.xlu0 %v4714, 16
        %v4937 = vpop.permute.xlu0 %4936
        %4938 = vrot.lane.b32.xlu0 %v4719, 16
        %v4939 = vpop.permute.xlu0 %4938
        %4940 = vrot.lane.b32.xlu0 %v4724, 16
        %v4941 = vpop.permute.xlu0 %4940
        %4942 = vrot.lane.b32.xlu0 %v4729, 16
        %v4943 = vpop.permute.xlu0 %4942
        %4944 = vrot.lane.b32.xlu0 %v4734, 16
        %v4945 = vpop.permute.xlu0 %4944
        %4962 = vrot.lane.b32.xlu0 %v4852, 24
        %v4963 = vpop.permute.xlu0 %4962
        %4964 = vrot.lane.b32.xlu0 %v4857, 24
        %v4965 = vpop.permute.xlu0 %4964
        %4966 = vrot.lane.b32.xlu0 %v4862, 24
        %v4967 = vpop.permute.xlu0 %4966
        %4968 = vrot.lane.b32.xlu0 %v4867, 24
        %v4969 = vpop.permute.xlu0 %4968
        %4970 = vrot.lane.b32.xlu0 %v4872, 24
        %v4971 = vpop.permute.xlu0 %4970
        %4972 = vrot.lane.b32.xlu0 %v4877, 24
        %v4973 = vpop.permute.xlu0 %4972
        %4974 = vrot.lane.b32.xlu0 %v4882, 24
        %v4975 = vpop.permute.xlu0 %4974
        %4976 = vrot.lane.b32.xlu0 %v4887, 24
        %v4977 = vpop.permute.xlu0 %4976
        %v4986 = vsel %vm732, %v4393, %v4899
        %v4987 = vsel %vm732, %v4398, %v4901
        %v4988 = vsel %vm732, %v4403, %v4903
        %v4989 = vsel %vm732, %v4408, %v4905
        %v4990 = vsel %vm732, %v4413, %v4907
        %v4991 = vsel %vm732, %v4418, %v4909
        %v4992 = vsel %vm732, %v4423, %v4911
        %v4993 = vsel %vm732, %v4428, %v4913
        %v4994 = vsel %vm2398, %v4986, %v4931
        %v4995 = vsel %vm2398, %v4987, %v4933
        %v4996 = vsel %vm2398, %v4988, %v4935
        %v4997 = vsel %vm2398, %v4989, %v4937
        %v4998 = vsel %vm2398, %v4990, %v4939
        %v4999 = vsel %vm2398, %v4991, %v4941
        %v5000 = vsel %vm2398, %v4992, %v4943
        %v5001 = vsel %vm2398, %v4993, %v4945
        %v5002 = vsel %vm2407, %v4994, %v4963
        %v5003 = vsel %vm2407, %v4995, %v4965
        %v5004 = vsel %vm2407, %v4996, %v4967
        %v5005 = vsel %vm2407, %v4997, %v4969
        %v5006 = vsel %vm2407, %v4998, %v4971
        %v5007 = vsel %vm2407, %v4999, %v4973
        %v5008 = vsel %vm2407, %v5000, %v4975
        %v5009 = vsel %vm2407, %v5001, %v4977
        %s5010 = scalar_lea.vmem [#allocation3], 32
        %v5011 = vld [vmem:[%s5010] sm:$0xff]
        %v5012 = vld [vmem:[%s5010 + $0x8] sm:$0xff]
        %v5013 = vld [vmem:[%s5010 + $0x10] sm:$0xff]
        %v5014 = vld [vmem:[%s5010 + $0x18] sm:$0xff]
        %v5015 = vld [vmem:[%s4 + $0x1] sm:$0x1]
        %v5016 = vlaneseq
        %v5017 = vshrl.u32 %v5016, 7
        %v5018 = vsub.s32 0, %v5017
        %v5019 = vrot.slane %v5015, %v5018
        %v5021 = vsel %vm530, %v5002, 0
        %v5024 = vsel %vm530, %v5003, 0
        %v5027 = vsel %vm530, %v5004, 0
        %v5030 = vsel %vm530, %v5005, 0
        %v5033 = vsel %vm530, %v5006, 0
        %v5036 = vsel %vm530, %v5007, 0
        %v5039 = vsel %vm530, %v5008, 0
        %v5042 = vsel %vm530, %v5009, 0
        %5044 = vmatprep.subr.mxu0 0.0
        %5045 = vmatpush1.msra.mxu0 %v5011
        %5046 = vmatprep.subr.mxu0 0.0
        %5047 = vmatpush1.msra.mxu0 %v5012
        %5048 = vmatprep.subr.mxu0 0.0
        %5049 = vmatpush1.msra.mxu0 %v5013
        %5050 = vmatprep.subr.mxu0 0.0
        %5051 = vmatpush1.msra.mxu0 %v5014
        %5052 = vmatprep.subr.mxu0 0.0
        %5053 = vmatpush1.msra.mxu0 0.0
        %5054 = vmatprep.subr.mxu0 0.0
        %5055 = vmatpush1.msra.mxu0 0.0
        %5056 = vmatprep.subr.mxu0 0.0
        %5057 = vmatpush1.msra.mxu0 0.0
        %5058 = vmatprep.subr.mxu0 0.0
        %5059 = vmatpush1.msra.mxu0 0.0
        %5060 = vmatprep.subr.mxu0 0.0
        %5061 = vmatpush1.msra.mxu0 0.0
        %5062 = vmatprep.subr.mxu0 0.0
        %5063 = vmatpush1.msra.mxu0 0.0
        %5064 = vmatprep.subr.mxu0 0.0
        %5065 = vmatpush1.msra.mxu0 0.0
        %5066 = vmatprep.subr.mxu0 0.0
        %5067 = vmatpush1.msra.mxu0 0.0
        %5068 = vmatprep.subr.mxu0 0.0
        %5069 = vmatpush1.msra.mxu0 0.0
        %5070 = vmatprep.subr.mxu0 0.0
        %5071 = vmatpush1.msra.mxu0 0.0
        %5072 = vmatprep.subr.mxu0 0.0
        %5073 = vmatpush1.msra.mxu0 0.0
        %5074 = vmatprep.subr.mxu0 0.0
        %5075 = vmatpush1.msra.mxu0 0.0
        %5076 = vmatprep.subr.mxu0 0.0
        %5077 = vmatpush1.msra.mxu0 0.0
        %5078 = vmatprep.subr.mxu0 0.0
        %5079 = vmatpush1.msra.mxu0 0.0
        %5080 = vmatprep.subr.mxu0 0.0
        %5081 = vmatpush1.msra.mxu0 0.0
        %5082 = vmatprep.subr.mxu0 0.0
        %5083 = vmatpush1.msra.mxu0 0.0
        %5084 = vmatprep.subr.mxu0 0.0
        %5085 = vmatpush1.msra.mxu0 0.0
        %5086 = vmatprep.subr.mxu0 0.0
        %5087 = vmatpush1.msra.mxu0 0.0
        %5088 = vmatprep.subr.mxu0 0.0
        %5089 = vmatpush1.msra.mxu0 0.0
        %5090 = vmatprep.subr.mxu0 0.0
        %5091 = vmatpush1.msra.mxu0 0.0
        %5092 = vmatprep.subr.mxu0 0.0
        %5093 = vmatpush1.msra.mxu0 0.0
        %5094 = vmatprep.subr.mxu0 0.0
        %5095 = vmatpush1.msra.mxu0 0.0
        %5096 = vmatprep.subr.mxu0 0.0
        %5097 = vmatpush1.msra.mxu0 0.0
        %5098 = vmatprep.subr.mxu0 0.0
        %5099 = vmatpush1.msra.mxu0 0.0
        %5100 = vmatprep.subr.mxu0 0.0
        %5101 = vmatpush1.msra.mxu0 0.0
        %5102 = vmatprep.subr.mxu0 0.0
        %5103 = vmatpush1.msra.mxu0 0.0
        %5104 = vmatprep.subr.mxu0 0.0
        %5105 = vmatpush1.msra.mxu0 0.0
        %5106 = vmatprep.subr.mxu0 0.0
        %5107 = vmatpush1.msra.mxu0 0.0
        %5108 = vmatprep.mubr.f32.mxu0 0.0
        %5109 = vmatmul.mubr.f32.gmra.mrb[0].mxu0 %v5021
        %v5110 = vpop.f32.mrb[0].mxu0
        %v5111 = vadd.f32 %v5019, %v5110
        %v5112 = vpop.f32.mrb[0].mxu0
        %5113 = vmatprep.mubr.f32.mxu0 0.0
        %5114 = vmatmul.mubr.f32.gmra.mrb[0].mxu0 %v5024
        %v5115 = vpop.f32.mrb[0].mxu0
        %v5116 = vadd.f32 %v5019, %v5115
        %v5117 = vpop.f32.mrb[0].mxu0
        %5118 = vmatprep.mubr.f32.mxu0 0.0
        %5119 = vmatmul.mubr.f32.gmra.mrb[0].mxu0 %v5027
        %v5120 = vpop.f32.mrb[0].mxu0
        %v5121 = vadd.f32 %v5019, %v5120
        %v5122 = vpop.f32.mrb[0].mxu0
        %5123 = vmatprep.mubr.f32.mxu0 0.0
        %5124 = vmatmul.mubr.f32.gmra.mrb[0].mxu0 %v5030
        %v5125 = vpop.f32.mrb[0].mxu0
        %v5126 = vadd.f32 %v5019, %v5125
        %v5127 = vpop.f32.mrb[0].mxu0
        %5128 = vmatprep.mubr.f32.mxu0 0.0
        %5129 = vmatmul.mubr.f32.gmra.mrb[0].mxu0 %v5033
        %v5130 = vpop.f32.mrb[0].mxu0
        %v5131 = vadd.f32 %v5019, %v5130
        %v5132 = vpop.f32.mrb[0].mxu0
        %5133 = vmatprep.mubr.f32.mxu0 0.0
        %5134 = vmatmul.mubr.f32.gmra.mrb[0].mxu0 %v5036
        %v5135 = vpop.f32.mrb[0].mxu0
        %v5136 = vadd.f32 %v5019, %v5135
        %v5137 = vpop.f32.mrb[0].mxu0
        %5138 = vmatprep.mubr.f32.mxu0 0.0
        %5139 = vmatmul.mubr.f32.gmra.mrb[0].mxu0 %v5039
        %v5140 = vpop.f32.mrb[0].mxu0
        %v5141 = vadd.f32 %v5019, %v5140
        %v5142 = vpop.f32.mrb[0].mxu0
        %5143 = vmatprep.mubr.f32.mxu0 0.0
        %5144 = vmatmul.mubr.f32.gmra.mrb[0].mxu0 %v5042
        %v5145 = vpop.f32.mrb[0].mxu0
        %v5146 = vadd.f32 %v5019, %v5145
        %v5147 = vpop.f32.mrb[0].mxu0
        %5148 = vdwg.mxu0
        %v5149 = vadd.f32 %v3111, %v5111
        %v5150 = vadd.f32 %v3112, %v5116
        %v5151 = vadd.f32 %v3113, %v5121
        %v5152 = vadd.f32 %v3114, %v5126
        %v5153 = vadd.f32 %v3115, %v5131
        %v5154 = vadd.f32 %v3116, %v5136
        %v5155 = vadd.f32 %v3117, %v5141
        %v5156 = vadd.f32 %v3118, %v5146
        %v5157 = vld [vmem:[%s9 + $0x2] sm:$0x1]
        %v5158 = vld [vmem:[%s10 + $0x2] sm:$0x1]
        %v5159 = vsel %vm530, %v5149, 0.0
        %5160 = vadd.xlane.f32.xlu0 %v5159
        %v5161 = vpop.xlane.xlu0 %5160
        %v5162 = vsel %vm530, %v5150, 0.0
        %5163 = vadd.xlane.f32.xlu0 %v5162
        %v5164 = vpop.xlane.xlu0 %5163
        %v5165 = vsel %vm530, %v5151, 0.0
        %5166 = vadd.xlane.f32.xlu0 %v5165
        %v5167 = vpop.xlane.xlu0 %5166
        %v5168 = vsel %vm530, %v5152, 0.0
        %5169 = vadd.xlane.f32.xlu0 %v5168
        %v5170 = vpop.xlane.xlu0 %5169
        %v5171 = vsel %vm530, %v5153, 0.0
        %5172 = vadd.xlane.f32.xlu0 %v5171
        %v5173 = vpop.xlane.xlu0 %5172
        %v5174 = vsel %vm530, %v5154, 0.0
        %5175 = vadd.xlane.f32.xlu0 %v5174
        %v5176 = vpop.xlane.xlu0 %5175
        %v5177 = vsel %vm530, %v5155, 0.0
        %5178 = vadd.xlane.f32.xlu0 %v5177
        %v5179 = vpop.xlane.xlu0 %5178
        %v5180 = vsel %vm530, %v5156, 0.0
        %5181 = vadd.xlane.f32.xlu0 %v5180
        %v5182 = vpop.xlane.xlu0 %5181
        %v5183 = vmul.f32 %v5161, %v2588
        %v5184 = vmul.f32 %v5164, %v2588
        %v5185 = vmul.f32 %v5167, %v2588
        %v5186 = vmul.f32 %v5170, %v2588
        %v5187 = vmul.f32 %v5173, %v2588
        %v5188 = vmul.f32 %v5176, %v2588
        %v5189 = vmul.f32 %v5179, %v2588
        %v5190 = vmul.f32 %v5182, %v2588
        %v5191 = vsub.f32 %v5149, %v5183
        %v5192 = vsub.f32 %v5150, %v5184
        %v5193 = vsub.f32 %v5151, %v5185
        %v5194 = vsub.f32 %v5152, %v5186
        %v5195 = vsub.f32 %v5153, %v5187
        %v5196 = vsub.f32 %v5154, %v5188
        %v5197 = vsub.f32 %v5155, %v5189
        %v5198 = vsub.f32 %v5156, %v5190
        %v5199 = vmul.f32 %v5191, %v5191
        %v5200 = vmul.f32 %v5192, %v5192
        %v5201 = vmul.f32 %v5193, %v5193
        %v5202 = vmul.f32 %v5194, %v5194
        %v5203 = vmul.f32 %v5195, %v5195
        %v5204 = vmul.f32 %v5196, %v5196
        %v5205 = vmul.f32 %v5197, %v5197
        %v5206 = vmul.f32 %v5198, %v5198
        %v5207 = vsel %vm530, %v5199, 0.0
        %5208 = vadd.xlane.f32.xlu0 %v5207
        %v5209 = vpop.xlane.xlu0 %5208
        %v5210 = vsel %vm530, %v5200, 0.0
        %5211 = vadd.xlane.f32.xlu0 %v5210
        %v5212 = vpop.xlane.xlu0 %5211
        %v5213 = vsel %vm530, %v5201, 0.0
        %5214 = vadd.xlane.f32.xlu0 %v5213
        %v5215 = vpop.xlane.xlu0 %5214
        %v5216 = vsel %vm530, %v5202, 0.0
        %5217 = vadd.xlane.f32.xlu0 %v5216
        %v5218 = vpop.xlane.xlu0 %5217
        %v5219 = vsel %vm530, %v5203, 0.0
        %5220 = vadd.xlane.f32.xlu0 %v5219
        %v5221 = vpop.xlane.xlu0 %5220
        %v5222 = vsel %vm530, %v5204, 0.0
        %5223 = vadd.xlane.f32.xlu0 %v5222
        %v5224 = vpop.xlane.xlu0 %5223
        %v5225 = vsel %vm530, %v5205, 0.0
        %5226 = vadd.xlane.f32.xlu0 %v5225
        %v5227 = vpop.xlane.xlu0 %5226
        %v5228 = vsel %vm530, %v5206, 0.0
        %5229 = vadd.xlane.f32.xlu0 %v5228
        %v5230 = vpop.xlane.xlu0 %5229
        %v5231 = vmul.f32 %v5209, %v2588
        %v5232 = vmul.f32 %v5212, %v2588
        %v5233 = vmul.f32 %v5215, %v2588
        %v5234 = vmul.f32 %v5218, %v2588
        %v5235 = vmul.f32 %v5221, %v2588
        %v5236 = vmul.f32 %v5224, %v2588
        %v5237 = vmul.f32 %v5227, %v2588
        %v5238 = vmul.f32 %v5230, %v2588
        %v5239 = vadd.f32 %v5231, 1e-05
        %v5240 = vadd.f32 %v5232, 1e-05
        %v5241 = vadd.f32 %v5233, 1e-05
        %v5242 = vadd.f32 %v5234, 1e-05
        %v5243 = vadd.f32 %v5235, 1e-05
        %v5244 = vadd.f32 %v5236, 1e-05
        %v5245 = vadd.f32 %v5237, 1e-05
        %v5246 = vadd.f32 %v5238, 1e-05
        %v5247 = vrsqrt.pop %v5239
        %v5248 = vrsqrt.pop %v5240
        %v5249 = vrsqrt.pop %v5241
        %v5250 = vrsqrt.pop %v5242
        %v5251 = vrsqrt.pop %v5243
        %v5252 = vrsqrt.pop %v5244
        %v5253 = vrsqrt.pop %v5245
        %v5254 = vrsqrt.pop %v5246
        %v5255 = vmul.f32 %v5191, %v5247
        %v5256 = vmul.f32 %v5192, %v5248
        %v5257 = vmul.f32 %v5193, %v5249
        %v5258 = vmul.f32 %v5194, %v5250
        %v5259 = vmul.f32 %v5195, %v5251
        %v5260 = vmul.f32 %v5196, %v5252
        %v5261 = vmul.f32 %v5197, %v5253
        %v5262 = vmul.f32 %v5198, %v5254
        %v5263 = vlaneseq
        %v5264 = vshrl.u32 %v5263, 7
        %v5265 = vsub.s32 0, %v5264
        %v5266 = vrot.slane %v5157, %v5265
        %v5267 = vmul.f32 %v5255, %v5266
        %v5268 = vmul.f32 %v5256, %v5266
        %v5269 = vmul.f32 %v5257, %v5266
        %v5270 = vmul.f32 %v5258, %v5266
        %v5271 = vmul.f32 %v5259, %v5266
        %v5272 = vmul.f32 %v5260, %v5266
        %v5273 = vmul.f32 %v5261, %v5266
        %v5274 = vmul.f32 %v5262, %v5266
        %v5275 = vlaneseq
        %v5276 = vshrl.u32 %v5275, 7
        %v5277 = vsub.s32 0, %v5276
        %v5278 = vrot.slane %v5158, %v5277
        %v5279 = vadd.f32 %v5267, %v5278
        %v5280 = vadd.f32 %v5268, %v5278
        %v5281 = vadd.f32 %v5269, %v5278
        %v5282 = vadd.f32 %v5270, %v5278
        %v5283 = vadd.f32 %v5271, %v5278
        %v5284 = vadd.f32 %v5272, %v5278
        %v5285 = vadd.f32 %v5273, %v5278
        %v5286 = vadd.f32 %v5274, %v5278
        %s5287 = scalar_lea.vmem [#allocation6], 32
        %v5288 = vld [vmem:[%s5287] sm:$0xff]
        %v5289 = vld [vmem:[%s5287 + $0x8] sm:$0xff]
        %v5290 = vld [vmem:[%s5287 + $0x10] sm:$0xff]
        %v5291 = vld [vmem:[%s5287 + $0x18] sm:$0xff]
        %v5292 = vld [vmem:[%s6 + $0x1] sm:$0x1]
        %v5293 = vlaneseq
        %v5294 = vshrl.u32 %v5293, 7
        %v5295 = vsub.s32 0, %v5294
        %v5296 = vrot.slane %v5292, %v5295
        %v5298 = vsel %vm530, %v5279, 0
        %v5301 = vsel %vm530, %v5280, 0
        %v5304 = vsel %vm530, %v5281, 0
        %v5307 = vsel %vm530, %v5282, 0
        %v5310 = vsel %vm530, %v5283, 0
        %v5313 = vsel %vm530, %v5284, 0
        %v5316 = vsel %vm530, %v5285, 0
        %v5319 = vsel %vm530, %v5286, 0
        %5321 = vmatprep.subr.mxu0 0.0
        %5322 = vmatpush1.msra.mxu0 %v5288
        %5323 = vmatprep.subr.mxu0 0.0
        %5324 = vmatpush1.msra.mxu0 %v5289
        %5325 = vmatprep.subr.mxu0 0.0
        %5326 = vmatpush1.msra.mxu0 %v5290
        %5327 = vmatprep.subr.mxu0 0.0
        %5328 = vmatpush1.msra.mxu0 %v5291
        %5329 = vmatprep.subr.mxu0 0.0
        %5330 = vmatpush1.msra.mxu0 0.0
        %5331 = vmatprep.subr.mxu0 0.0
        %5332 = vmatpush1.msra.mxu0 0.0
        %5333 = vmatprep.subr.mxu0 0.0
        %5334 = vmatpush1.msra.mxu0 0.0
        %5335 = vmatprep.subr.mxu0 0.0
        %5336 = vmatpush1.msra.mxu0 0.0
        %5337 = vmatprep.subr.mxu0 0.0
        %5338 = vmatpush1.msra.mxu0 0.0
        %5339 = vmatprep.subr.mxu0 0.0
        %5340 = vmatpush1.msra.mxu0 0.0
        %5341 = vmatprep.subr.mxu0 0.0
        %5342 = vmatpush1.msra.mxu0 0.0
        %5343 = vmatprep.subr.mxu0 0.0
        %5344 = vmatpush1.msra.mxu0 0.0
        %5345 = vmatprep.subr.mxu0 0.0
        %5346 = vmatpush1.msra.mxu0 0.0
        %5347 = vmatprep.subr.mxu0 0.0
        %5348 = vmatpush1.msra.mxu0 0.0
        %5349 = vmatprep.subr.mxu0 0.0
        %5350 = vmatpush1.msra.mxu0 0.0
        %5351 = vmatprep.subr.mxu0 0.0
        %5352 = vmatpush1.msra.mxu0 0.0
        %5353 = vmatprep.subr.mxu0 0.0
        %5354 = vmatpush1.msra.mxu0 0.0
        %5355 = vmatprep.subr.mxu0 0.0
        %5356 = vmatpush1.msra.mxu0 0.0
        %5357 = vmatprep.subr.mxu0 0.0
        %5358 = vmatpush1.msra.mxu0 0.0
        %5359 = vmatprep.subr.mxu0 0.0
        %5360 = vmatpush1.msra.mxu0 0.0
        %5361 = vmatprep.subr.mxu0 0.0
        %5362 = vmatpush1.msra.mxu0 0.0
        %5363 = vmatprep.subr.mxu0 0.0
        %5364 = vmatpush1.msra.mxu0 0.0
        %5365 = vmatprep.subr.mxu0 0.0
        %5366 = vmatpush1.msra.mxu0 0.0
        %5367 = vmatprep.subr.mxu0 0.0
        %5368 = vmatpush1.msra.mxu0 0.0
        %5369 = vmatprep.subr.mxu0 0.0
        %5370 = vmatpush1.msra.mxu0 0.0
        %5371 = vmatprep.subr.mxu0 0.0
        %5372 = vmatpush1.msra.mxu0 0.0
        %5373 = vmatprep.subr.mxu0 0.0
        %5374 = vmatpush1.msra.mxu0 0.0
        %5375 = vmatprep.subr.mxu0 0.0
        %5376 = vmatpush1.msra.mxu0 0.0
        %5377 = vmatprep.subr.mxu0 0.0
        %5378 = vmatpush1.msra.mxu0 0.0
        %5379 = vmatprep.subr.mxu0 0.0
        %5380 = vmatpush1.msra.mxu0 0.0
        %5381 = vmatprep.subr.mxu0 0.0
        %5382 = vmatpush1.msra.mxu0 0.0
        %5383 = vmatprep.subr.mxu0 0.0
        %5384 = vmatpush1.msra.mxu0 0.0
        %5385 = vmatprep.mubr.f32.mxu0 0.0
        %5386 = vmatmul.mubr.f32.gmra.mrb[0].mxu0 %v5298
        %v5387 = vpop.f32.mrb[0].mxu0
        %v5388 = vadd.f32 %v5296, %v5387
        %v5389 = vpop.f32.mrb[0].mxu0
        %5390 = vmatprep.mubr.f32.mxu0 0.0
        %5391 = vmatmul.mubr.f32.gmra.mrb[0].mxu0 %v5301
        %v5392 = vpop.f32.mrb[0].mxu0
        %v5393 = vadd.f32 %v5296, %v5392
        %v5394 = vpop.f32.mrb[0].mxu0
        %5395 = vmatprep.mubr.f32.mxu0 0.0
        %5396 = vmatmul.mubr.f32.gmra.mrb[0].mxu0 %v5304
        %v5397 = vpop.f32.mrb[0].mxu0
        %v5398 = vadd.f32 %v5296, %v5397
        %v5399 = vpop.f32.mrb[0].mxu0
        %5400 = vmatprep.mubr.f32.mxu0 0.0
        %5401 = vmatmul.mubr.f32.gmra.mrb[0].mxu0 %v5307
        %v5402 = vpop.f32.mrb[0].mxu0
        %v5403 = vadd.f32 %v5296, %v5402
        %v5404 = vpop.f32.mrb[0].mxu0
        %5405 = vmatprep.mubr.f32.mxu0 0.0
        %5406 = vmatmul.mubr.f32.gmra.mrb[0].mxu0 %v5310
        %v5407 = vpop.f32.mrb[0].mxu0
        %v5408 = vadd.f32 %v5296, %v5407
        %v5409 = vpop.f32.mrb[0].mxu0
        %5410 = vmatprep.mubr.f32.mxu0 0.0
        %5411 = vmatmul.mubr.f32.gmra.mrb[0].mxu0 %v5313
        %v5412 = vpop.f32.mrb[0].mxu0
        %v5413 = vadd.f32 %v5296, %v5412
        %v5414 = vpop.f32.mrb[0].mxu0
        %5415 = vmatprep.mubr.f32.mxu0 0.0
        %5416 = vmatmul.mubr.f32.gmra.mrb[0].mxu0 %v5316
        %v5417 = vpop.f32.mrb[0].mxu0
        %v5418 = vadd.f32 %v5296, %v5417
        %v5419 = vpop.f32.mrb[0].mxu0
        %5420 = vmatprep.mubr.f32.mxu0 0.0
        %5421 = vmatmul.mubr.f32.gmra.mrb[0].mxu0 %v5319
        %v5422 = vpop.f32.mrb[0].mxu0
        %v5423 = vadd.f32 %v5296, %v5422
        %v5424 = vpop.f32.mrb[0].mxu0
        %5425 = vdwg.mxu0
        %v5426 = vmax.f32 %v5388, 0.0
        %v5427 = vmax.f32 %v5393, 0.0
        %v5428 = vmax.f32 %v5398, 0.0
        %v5429 = vmax.f32 %v5403, 0.0
        %v5430 = vmax.f32 %v5408, 0.0
        %v5431 = vmax.f32 %v5413, 0.0
        %v5432 = vmax.f32 %v5418, 0.0
        %v5433 = vmax.f32 %v5423, 0.0
        %s5434 = scalar_lea.vmem %s7, 64
        %v5435 = vld [vmem:[%s5434] sm:$0xff]
        %v5436 = vld [vmem:[%s5434 + $0x8] sm:$0xff]
        %v5437 = vld [vmem:[%s5434 + $0x10] sm:$0xff]
        %v5438 = vld [vmem:[%s5434 + $0x18] sm:$0xff]
        %v5439 = vld [vmem:[%s5434 + $0x20] sm:$0xff]
        %v5440 = vld [vmem:[%s5434 + $0x28] sm:$0xff]
        %v5441 = vld [vmem:[%s5434 + $0x30] sm:$0xff]
        %v5442 = vld [vmem:[%s5434 + $0x38] sm:$0xff]
        %v5443 = vld [vmem:[%s8 + $0x1] sm:$0x1]
        %v5444 = vlaneseq
        %v5445 = vshrl.u32 %v5444, 7
        %v5446 = vsub.s32 0, %v5445
        %v5447 = vrot.slane %v5443, %v5446
        %v5449 = vsel %vm1329, %v5426, 0
        %v5452 = vsel %vm1329, %v5427, 0
        %v5455 = vsel %vm1329, %v5428, 0
        %v5458 = vsel %vm1329, %v5429, 0
        %v5461 = vsel %vm1329, %v5430, 0
        %v5464 = vsel %vm1329, %v5431, 0
        %v5467 = vsel %vm1329, %v5432, 0
        %v5470 = vsel %vm1329, %v5433, 0
        %5472 = vmatprep.subr.mxu0 0.0
        %5473 = vmatpush1.msra.mxu0 %v5435
        %5474 = vmatprep.subr.mxu0 0.0
        %5475 = vmatpush1.msra.mxu0 %v5436
        %5476 = vmatprep.subr.mxu0 0.0
        %5477 = vmatpush1.msra.mxu0 %v5437
        %5478 = vmatprep.subr.mxu0 0.0
        %5479 = vmatpush1.msra.mxu0 %v5438
        %5480 = vmatprep.subr.mxu0 0.0
        %5481 = vmatpush1.msra.mxu0 %v5439
        %5482 = vmatprep.subr.mxu0 0.0
        %5483 = vmatpush1.msra.mxu0 %v5440
        %5484 = vmatprep.subr.mxu0 0.0
        %5485 = vmatpush1.msra.mxu0 %v5441
        %5486 = vmatprep.subr.mxu0 0.0
        %5487 = vmatpush1.msra.mxu0 %v5442
        %5488 = vmatprep.subr.mxu0 0.0
        %5489 = vmatpush1.msra.mxu0 0.0
        %5490 = vmatprep.subr.mxu0 0.0
        %5491 = vmatpush1.msra.mxu0 0.0
        %5492 = vmatprep.subr.mxu0 0.0
        %5493 = vmatpush1.msra.mxu0 0.0
        %5494 = vmatprep.subr.mxu0 0.0
        %5495 = vmatpush1.msra.mxu0 0.0
        %5496 = vmatprep.subr.mxu0 0.0
        %5497 = vmatpush1.msra.mxu0 0.0
        %5498 = vmatprep.subr.mxu0 0.0
        %5499 = vmatpush1.msra.mxu0 0.0
        %5500 = vmatprep.subr.mxu0 0.0
        %5501 = vmatpush1.msra.mxu0 0.0
        %5502 = vmatprep.subr.mxu0 0.0
        %5503 = vmatpush1.msra.mxu0 0.0
        %5504 = vmatprep.subr.mxu0 0.0
        %5505 = vmatpush1.msra.mxu0 0.0
        %5506 = vmatprep.subr.mxu0 0.0
        %5507 = vmatpush1.msra.mxu0 0.0
        %5508 = vmatprep.subr.mxu0 0.0
        %5509 = vmatpush1.msra.mxu0 0.0
        %5510 = vmatprep.subr.mxu0 0.0
        %5511 = vmatpush1.msra.mxu0 0.0
        %5512 = vmatprep.subr.mxu0 0.0
        %5513 = vmatpush1.msra.mxu0 0.0
        %5514 = vmatprep.subr.mxu0 0.0
        %5515 = vmatpush1.msra.mxu0 0.0
        %5516 = vmatprep.subr.mxu0 0.0
        %5517 = vmatpush1.msra.mxu0 0.0
        %5518 = vmatprep.subr.mxu0 0.0
        %5519 = vmatpush1.msra.mxu0 0.0
        %5520 = vmatprep.subr.mxu0 0.0
        %5521 = vmatpush1.msra.mxu0 0.0
        %5522 = vmatprep.subr.mxu0 0.0
        %5523 = vmatpush1.msra.mxu0 0.0
        %5524 = vmatprep.subr.mxu0 0.0
        %5525 = vmatpush1.msra.mxu0 0.0
        %5526 = vmatprep.subr.mxu0 0.0
        %5527 = vmatpush1.msra.mxu0 0.0
        %5528 = vmatprep.subr.mxu0 0.0
        %5529 = vmatpush1.msra.mxu0 0.0
        %5530 = vmatprep.subr.mxu0 0.0
        %5531 = vmatpush1.msra.mxu0 0.0
        %5532 = vmatprep.subr.mxu0 0.0
        %5533 = vmatpush1.msra.mxu0 0.0
        %5534 = vmatprep.subr.mxu0 0.0
        %5535 = vmatpush1.msra.mxu0 0.0
        %5536 = vmatprep.mubr.f32.mxu0 0.0
        %5537 = vmatmul.mubr.f32.gmra.mrb[0].mxu0 %v5449
        %v5538 = vpop.f32.mrb[0].mxu0
        %v5539 = vadd.f32 %v5447, %v5538
        %v5540 = vpop.f32.mrb[0].mxu0
        %5541 = vmatprep.mubr.f32.mxu0 0.0
        %5542 = vmatmul.mubr.f32.gmra.mrb[0].mxu0 %v5452
        %v5543 = vpop.f32.mrb[0].mxu0
        %v5544 = vadd.f32 %v5447, %v5543
        %v5545 = vpop.f32.mrb[0].mxu0
        %5546 = vmatprep.mubr.f32.mxu0 0.0
        %5547 = vmatmul.mubr.f32.gmra.mrb[0].mxu0 %v5455
        %v5548 = vpop.f32.mrb[0].mxu0
        %v5549 = vadd.f32 %v5447, %v5548
        %v5550 = vpop.f32.mrb[0].mxu0
        %5551 = vmatprep.mubr.f32.mxu0 0.0
        %5552 = vmatmul.mubr.f32.gmra.mrb[0].mxu0 %v5458
        %v5553 = vpop.f32.mrb[0].mxu0
        %v5554 = vadd.f32 %v5447, %v5553
        %v5555 = vpop.f32.mrb[0].mxu0
        %5556 = vmatprep.mubr.f32.mxu0 0.0
        %5557 = vmatmul.mubr.f32.gmra.mrb[0].mxu0 %v5461
        %v5558 = vpop.f32.mrb[0].mxu0
        %v5559 = vadd.f32 %v5447, %v5558
        %v5560 = vpop.f32.mrb[0].mxu0
        %5561 = vmatprep.mubr.f32.mxu0 0.0
        %5562 = vmatmul.mubr.f32.gmra.mrb[0].mxu0 %v5464
        %v5563 = vpop.f32.mrb[0].mxu0
        %v5564 = vadd.f32 %v5447, %v5563
        %v5565 = vpop.f32.mrb[0].mxu0
        %5566 = vmatprep.mubr.f32.mxu0 0.0
        %5567 = vmatmul.mubr.f32.gmra.mrb[0].mxu0 %v5467
        %v5568 = vpop.f32.mrb[0].mxu0
        %v5569 = vadd.f32 %v5447, %v5568
        %v5570 = vpop.f32.mrb[0].mxu0
        %5571 = vmatprep.mubr.f32.mxu0 0.0
        %5572 = vmatmul.mubr.f32.gmra.mrb[0].mxu0 %v5470
        %v5573 = vpop.f32.mrb[0].mxu0
        %v5574 = vadd.f32 %v5447, %v5573
        %v5575 = vpop.f32.mrb[0].mxu0
        %5576 = vdwg.mxu0
        %v5577 = vadd.f32 %v5279, %v5539
        %v5578 = vadd.f32 %v5280, %v5544
        %v5579 = vadd.f32 %v5281, %v5549
        %v5580 = vadd.f32 %v5282, %v5554
        %v5581 = vadd.f32 %v5283, %v5559
        %v5582 = vadd.f32 %v5284, %v5564
        %v5583 = vadd.f32 %v5285, %v5569
        %v5584 = vadd.f32 %v5286, %v5574
        %v5585 = vld [vmem:[%s9 + $0x3] sm:$0x1]
        %v5586 = vld [vmem:[%s10 + $0x3] sm:$0x1]
        %v5587 = vsel %vm530, %v5577, 0.0
        %5588 = vadd.xlane.f32.xlu0 %v5587
        %v5589 = vpop.xlane.xlu0 %5588
        %v5590 = vsel %vm530, %v5578, 0.0
        %5591 = vadd.xlane.f32.xlu0 %v5590
        %v5592 = vpop.xlane.xlu0 %5591
        %v5593 = vsel %vm530, %v5579, 0.0
        %5594 = vadd.xlane.f32.xlu0 %v5593
        %v5595 = vpop.xlane.xlu0 %5594
        %v5596 = vsel %vm530, %v5580, 0.0
        %5597 = vadd.xlane.f32.xlu0 %v5596
        %v5598 = vpop.xlane.xlu0 %5597
        %v5599 = vsel %vm530, %v5581, 0.0
        %5600 = vadd.xlane.f32.xlu0 %v5599
        %v5601 = vpop.xlane.xlu0 %5600
        %v5602 = vsel %vm530, %v5582, 0.0
        %5603 = vadd.xlane.f32.xlu0 %v5602
        %v5604 = vpop.xlane.xlu0 %5603
        %v5605 = vsel %vm530, %v5583, 0.0
        %5606 = vadd.xlane.f32.xlu0 %v5605
        %v5607 = vpop.xlane.xlu0 %5606
        %v5608 = vsel %vm530, %v5584, 0.0
        %5609 = vadd.xlane.f32.xlu0 %v5608
        %v5610 = vpop.xlane.xlu0 %5609
        %v5611 = vmul.f32 %v5589, %v2588
        %v5612 = vmul.f32 %v5592, %v2588
        %v5613 = vmul.f32 %v5595, %v2588
        %v5614 = vmul.f32 %v5598, %v2588
        %v5615 = vmul.f32 %v5601, %v2588
        %v5616 = vmul.f32 %v5604, %v2588
        %v5617 = vmul.f32 %v5607, %v2588
        %v5618 = vmul.f32 %v5610, %v2588
        %v5619 = vsub.f32 %v5577, %v5611
        %v5620 = vsub.f32 %v5578, %v5612
        %v5621 = vsub.f32 %v5579, %v5613
        %v5622 = vsub.f32 %v5580, %v5614
        %v5623 = vsub.f32 %v5581, %v5615
        %v5624 = vsub.f32 %v5582, %v5616
        %v5625 = vsub.f32 %v5583, %v5617
        %v5626 = vsub.f32 %v5584, %v5618
        %v5627 = vmul.f32 %v5619, %v5619
        %v5628 = vmul.f32 %v5620, %v5620
        %v5629 = vmul.f32 %v5621, %v5621
        %v5630 = vmul.f32 %v5622, %v5622
        %v5631 = vmul.f32 %v5623, %v5623
        %v5632 = vmul.f32 %v5624, %v5624
        %v5633 = vmul.f32 %v5625, %v5625
        %v5634 = vmul.f32 %v5626, %v5626
        %v5635 = vsel %vm530, %v5627, 0.0
        %5636 = vadd.xlane.f32.xlu0 %v5635
        %v5637 = vpop.xlane.xlu0 %5636
        %v5638 = vsel %vm530, %v5628, 0.0
        %5639 = vadd.xlane.f32.xlu0 %v5638
        %v5640 = vpop.xlane.xlu0 %5639
        %v5641 = vsel %vm530, %v5629, 0.0
        %5642 = vadd.xlane.f32.xlu0 %v5641
        %v5643 = vpop.xlane.xlu0 %5642
        %v5644 = vsel %vm530, %v5630, 0.0
        %5645 = vadd.xlane.f32.xlu0 %v5644
        %v5646 = vpop.xlane.xlu0 %5645
        %v5647 = vsel %vm530, %v5631, 0.0
        %5648 = vadd.xlane.f32.xlu0 %v5647
        %v5649 = vpop.xlane.xlu0 %5648
        %v5650 = vsel %vm530, %v5632, 0.0
        %5651 = vadd.xlane.f32.xlu0 %v5650
        %v5652 = vpop.xlane.xlu0 %5651
        %v5653 = vsel %vm530, %v5633, 0.0
        %5654 = vadd.xlane.f32.xlu0 %v5653
        %v5655 = vpop.xlane.xlu0 %5654
        %v5656 = vsel %vm530, %v5634, 0.0
        %5657 = vadd.xlane.f32.xlu0 %v5656
        %v5658 = vpop.xlane.xlu0 %5657
        %v5659 = vmul.f32 %v5637, %v2588
        %v5660 = vmul.f32 %v5640, %v2588
        %v5661 = vmul.f32 %v5643, %v2588
        %v5662 = vmul.f32 %v5646, %v2588
        %v5663 = vmul.f32 %v5649, %v2588
        %v5664 = vmul.f32 %v5652, %v2588
        %v5665 = vmul.f32 %v5655, %v2588
        %v5666 = vmul.f32 %v5658, %v2588
        %v5667 = vadd.f32 %v5659, 1e-05
        %v5668 = vadd.f32 %v5660, 1e-05
        %v5669 = vadd.f32 %v5661, 1e-05
        %v5670 = vadd.f32 %v5662, 1e-05
        %v5671 = vadd.f32 %v5663, 1e-05
        %v5672 = vadd.f32 %v5664, 1e-05
        %v5673 = vadd.f32 %v5665, 1e-05
        %v5674 = vadd.f32 %v5666, 1e-05
        %v5675 = vrsqrt.pop %v5667
        %v5676 = vrsqrt.pop %v5668
        %v5677 = vrsqrt.pop %v5669
        %v5678 = vrsqrt.pop %v5670
        %v5679 = vrsqrt.pop %v5671
        %v5680 = vrsqrt.pop %v5672
        %v5681 = vrsqrt.pop %v5673
        %v5682 = vrsqrt.pop %v5674
        %v5683 = vmul.f32 %v5619, %v5675
        %v5684 = vmul.f32 %v5620, %v5676
        %v5685 = vmul.f32 %v5621, %v5677
        %v5686 = vmul.f32 %v5622, %v5678
        %v5687 = vmul.f32 %v5623, %v5679
        %v5688 = vmul.f32 %v5624, %v5680
        %v5689 = vmul.f32 %v5625, %v5681
        %v5690 = vmul.f32 %v5626, %v5682
        %v5691 = vlaneseq
        %v5692 = vshrl.u32 %v5691, 7
        %v5693 = vsub.s32 0, %v5692
        %v5694 = vrot.slane %v5585, %v5693
        %v5695 = vmul.f32 %v5683, %v5694
        %v5696 = vmul.f32 %v5684, %v5694
        %v5697 = vmul.f32 %v5685, %v5694
        %v5698 = vmul.f32 %v5686, %v5694
        %v5699 = vmul.f32 %v5687, %v5694
        %v5700 = vmul.f32 %v5688, %v5694
        %v5701 = vmul.f32 %v5689, %v5694
        %v5702 = vmul.f32 %v5690, %v5694
        %v5703 = vlaneseq
        %v5704 = vshrl.u32 %v5703, 7
        %v5705 = vsub.s32 0, %v5704
        %v5706 = vrot.slane %v5586, %v5705
        %v5707 = vadd.f32 %v5695, %v5706
        %v5708 = vadd.f32 %v5696, %v5706
        %v5709 = vadd.f32 %v5697, %v5706
        %v5710 = vadd.f32 %v5698, %v5706
        %v5711 = vadd.f32 %v5699, %v5706
        %v5712 = vadd.f32 %v5700, %v5706
        %v5713 = vadd.f32 %v5701, %v5706
        %v5714 = vadd.f32 %v5702, %v5706
        %5715 = vst.msk [vmem:[%s476] sm:$0xff] %vm530, %v5707
        %5716 = vst.msk [vmem:[%s476 + $0x8] sm:$0xff] %vm530, %v5708
        %5717 = vst.msk [vmem:[%s476 + $0x10] sm:$0xff] %vm530, %v5709
        %5718 = vst.msk [vmem:[%s476 + $0x18] sm:$0xff] %vm530, %v5710
        %5719 = vst.msk [vmem:[%s476 + $0x20] sm:$0xff] %vm530, %v5711
        %5720 = vst.msk [vmem:[%s476 + $0x28] sm:$0xff] %vm530, %v5712
        %5721 = vst.msk [vmem:[%s476 + $0x30] sm:$0xff] %vm530, %v5713
        %5722 = vst.msk [vmem:[%s476 + $0x38] sm:$0xff] %vm530, %v5714
        %s5723 = sand.u32 %s271, 1
        %s5724 = scalar_lea.sflag [#allocation5], %s5723
        %s5725 = sand.u32 %s271, 1
        %s5726 = smul.addr %s5725, 64
        %s5727 = scalar_lea.vmem [#allocation8], %s5726
        // Predicated region
        $region111: #{tpu_custom_call.1} parent=97 // pred_check
          %p5728 = pneg %p281
        $region112: #{tpu_custom_call.1} parent=97 // pred_check_branch
          %5730 = sbr.rel (%p5728) target = $region114
        $region113: #{tpu_custom_call.1} parent=97 // pred_region
          %s5732 = ssub.s32 1024, 1024
          %5733 = vsyncadd %s5724, %s5732
          %s5734 = smul.addr %s27, 128
          %s5735 = scalar_lea.hbm %s11, %s5734
          %s5736 = sshll.u32 %s5727, 4
          %s5737 = int_to_ptr.vmem [resolvable:$true] %s5736
          %5742 = dma.vmem_to_hbm [thread:$0]  %s5737, 1024, %s5735, %s5724, 128, 256, 8
        $region114: #{tpu_custom_call.1} parent=97 // pred_fallthru
          _
      $region98: #{tpu_custom_call.1} parent=5 // pred_fallthru
        _
      %p5743 = scmp.le.s32.totalorder 2, %s22
      // Predicated region
      $region115: #{tpu_custom_call.1} parent=5 // pred_check
        %p5744 = pneg %p5743
      $region116: #{tpu_custom_call.1} parent=5 // pred_check_branch
        %5746 = sbr.rel (%p5744) target = $region118
      $region117: #{tpu_custom_call.1} parent=5 // pred_region
        %s5747 = ssub.s32 %s22, 2
        // Predicated region
        $region119: #{tpu_custom_call.1} parent=117 // pred_check
          %p5748 = pneg %p287
        $region120: #{tpu_custom_call.1} parent=117 // pred_check_branch
          %5750 = sbr.rel (%p5748) target = $region122
        $region121: #{tpu_custom_call.1} parent=117 // pred_region
          %s5751 = sand.u32 %s272, 1
          %s5752 = scalar_lea.sflag [#allocation5], %s5751
          %s5753 = sand.u32 %s272, 1
          %s5754 = smul.addr %s5753, 64
          %s5755 = scalar_lea.vmem [#allocation8], %s5754
          %5756 = dma.done %s5752, 1024
        $region122: #{tpu_custom_call.1} parent=117 // pred_fallthru
          _
      $region118: #{tpu_custom_call.1} parent=5 // pred_fallthru
        _
    $region6: #{tpu_custom_call.1} parent=1 // loop_footer
      %s26 = sadd.s32 1, %s22
    $region7: #{tpu_custom_call.1} parent=1 // loop_footer_branch
      %21 = sbr.rel target = $region3
    $region8: #{tpu_custom_call.1} parent=1 // loop_exit
      _
    %5757 = vsyncpa [#allocation4], 1
    %s5758 = scalar_lea.sflag [#allocation4], 1
    %5759 = vsyncpa %s5758, 1
    %5760 = vsyncpa [#allocation7], 1
    %5761 = vsyncpa [#allocation5], 1
    %s5762 = scalar_lea.sflag [#allocation5], 1
    %5763 = vsyncpa %s5762, 1

</llo_original>
